<compile_context>
chip_gen: v6e
topology: v6e:2x2x1
jax: 0.10.0
libtpu: 0.0.40
codegen_flags: <defaults>
</compile_context>

<pallas_src>
import jax
import jax.numpy as jnp
from jax.experimental import pallas as pl
from jax.experimental.pallas import tpu as pltpu


# ----------------------------- fused kernel ----------------------------------
def make_fused_kernel(S, B, H, num_gru, num_lstm):
    """Builds the fused GRU->LSTM->Linear kernel for static (S, B, H, layer counts)."""
    H2, H3, H4 = 2 * H, 3 * H, 4 * H

    def kernel(*refs):
        refs = list(refs)
        pos = 0
        x_ref = refs[pos]; pos += 1
        gru_refs = []
        for _ in range(num_gru):
            gru_refs.append(refs[pos:pos + 4]); pos += 4   # wih_t, whh_t, b_x, bh_n
        lstm_refs = []
        for _ in range(num_lstm):
            lstm_refs.append(refs[pos:pos + 3]); pos += 3  # wih_t, whh_t, b
        w_out_ref = refs[pos]; pos += 1                     # (H, O_pad)
        b_out_ref = refs[pos]; pos += 1                     # (1, O_pad)
        out_ref = refs[pos]; pos += 1                       # (S*B, O_pad)
        act_ref = refs[pos]; pos += 1                       # VMEM (S*B, H) scratch

        cur = x_ref[...].astype(jnp.float32)                # (S*B, F0)

        # ----- GRU layers (PyTorch gate order [r, z, n]) -----
        for wih_ref, whh_ref, bx_ref, bhn_ref in gru_refs:
            # Hoisted input projection: one big matmul for all timesteps.
            gi = jnp.dot(cur, wih_ref[...],
                         preferred_element_type=jnp.float32) + bx_ref[...]
            whh = whh_ref[...]                               # (H, 3H), loaded once
            bhn = bhn_ref[...]
            h = jnp.zeros((B, H), jnp.float32)
            for t in range(S):                               # unrolled, static slices
                g = gi[t * B:(t + 1) * B, :]
                gh = jnp.dot(h, whh, preferred_element_type=jnp.float32)
                r = jax.nn.sigmoid(g[:, 0:H] + gh[:, 0:H])
                z = jax.nn.sigmoid(g[:, H:H2] + gh[:, H:H2])
                n = jnp.tanh(g[:, H2:H3] + r * (gh[:, H2:H3] + bhn))
                h = (1.0 - z) * n + z * h
                act_ref[t * B:(t + 1) * B, :] = h
            cur = act_ref[...]

        # ----- LSTM layers (PyTorch gate order [i, f, g, o]) -----
        for wih_ref, whh_ref, b_ref in lstm_refs:
            gi = jnp.dot(cur, wih_ref[...],
                         preferred_element_type=jnp.float32) + b_ref[...]
            whh = whh_ref[...]                               # (H, 4H), loaded once
            h = jnp.zeros((B, H), jnp.float32)
            c = jnp.zeros((B, H), jnp.float32)
            for t in range(S):
                g = gi[t * B:(t + 1) * B, :] + jnp.dot(
                    h, whh, preferred_element_type=jnp.float32)
                i_g = jax.nn.sigmoid(g[:, 0:H])
                f_g = jax.nn.sigmoid(g[:, H:H2])
                c_t = jnp.tanh(g[:, H2:H3])
                o_g = jax.nn.sigmoid(g[:, H3:H4])
                c = f_g * c + i_g * c_t
                h = o_g * jnp.tanh(c)
                act_ref[t * B:(t + 1) * B, :] = h
            cur = act_ref[...]

        # ----- final Linear (fused, lane-padded so the store is unmasked) -----
        y = jnp.dot(cur, w_out_ref[...],
                    preferred_element_type=jnp.float32) + b_out_ref[...]
        out_ref[...] = y.astype(out_ref.dtype)

    return kernel


def _full_spec(a):
    nd = a.ndim
    return pl.BlockSpec(a.shape, lambda: (0,) * nd)


def _round_up(n, m):
    return ((n + m - 1) // m) * m


# ------------------------------- forward pass ---------------------------------
@jax.jit
def gru_lstm_forward(params, x):
    # x: (batch, seq, input_size), batch_first=True
    B, S, In = x.shape
    num_gru = len(params["gru"])
    num_lstm = len(params["lstm"])
    if num_gru:
        H = params["gru"][0]["whh_t"].shape[0]
    else:
        H = params["lstm"][0]["whh_t"].shape[0]
    O = params["linear"]["w_t"].shape[1]
    O_pad = _round_up(O, 128)                 # lane-dense output -> unmasked stores

    # time-major and flattened: (S*B, In)
    x_flat = jnp.transpose(x, (1, 0, 2)).reshape(S * B, In).astype(jnp.float32)

    # Zero-pad the Linear weight/bias out to a 128-lane multiple.
    w_out = jnp.pad(params["linear"]["w_t"], ((0, 0), (0, O_pad - O)))
    b_out = jnp.pad(params["linear"]["b"], ((0, 0), (0, O_pad - O)))

    inputs = [x_flat]
    for p in params["gru"]:
        inputs += [p["wih_t"], p["whh_t"], p["b_x"], p["bh_n"]]
    for p in params["lstm"]:
        inputs += [p["wih_t"], p["whh_t"], p["b"]]
    inputs += [w_out, b_out]

    kernel = make_fused_kernel(S, B, H, num_gru, num_lstm)

    y_flat = pl.pallas_call(
        kernel,
        out_shape=jax.ShapeDtypeStruct((S * B, O_pad), jnp.float32),
        in_specs=[_full_spec(a) for a in inputs],
        out_specs=pl.BlockSpec((S * B, O_pad), lambda: (0, 0)),
        scratch_shapes=[pltpu.VMEM((S * B, H), jnp.float32)],
        compiler_params=pltpu.CompilerParams(vmem_limit_bytes=64 << 20),
    )(*inputs)

    # (S*B, O_pad) -> slice -> (S, B, O) -> (B, S, O)
    return y_flat[:, :O].reshape(S, B, O).transpose(1, 0, 2)


# ------------------------------ parameter setup --------------------------------
def init_params(key, input_size, hidden_size, gru_layers, lstm_layers, output_size):
    H = hidden_size
    bound = 1.0 / float(H) ** 0.5

    def uni(k, shape):
        return jax.random.uniform(k, shape, jnp.float32, -bound, bound)

    params = {"gru": [], "lstm": []}
    for l in range(gru_layers):
        in_sz = input_size if l == 0 else H
        key, k1, k2, k3, k4 = jax.random.split(key, 5)
        w_ih = uni(k1, (3 * H, in_sz))
        w_hh = uni(k2, (3 * H, H))
        b_ih = uni(k3, (3 * H,))
        b_hh = uni(k4, (3 * H,))
        # pre-sum the r/z parts of b_hh into the hoisted bias; keep b_hh(n) separate
        b_x = b_ih + jnp.concatenate([b_hh[:2 * H], jnp.zeros((H,), jnp.float32)])
        params["gru"].append(dict(
            wih_t=w_ih.T,                       # (In, 3H)
            whh_t=w_hh.T,                       # (H, 3H)
            b_x=b_x.reshape(1, 3 * H),
            bh_n=b_hh[2 * H:].reshape(1, H),
        ))
    for l in range(lstm_layers):
        key, k1, k2, k3, k4 = jax.random.split(key, 5)
        w_ih = uni(k1, (4 * H, H))
        w_hh = uni(k2, (4 * H, H))
        b_ih = uni(k3, (4 * H,))
        b_hh = uni(k4, (4 * H,))
        params["lstm"].append(dict(
            wih_t=w_ih.T,                       # (H, 4H)
            whh_t=w_hh.T,                       # (H, 4H)
            b=(b_ih + b_hh).reshape(1, 4 * H),
        ))
    key, k1, k2 = jax.random.split(key, 3)
    w = uni(k1, (output_size, H))
    b = uni(k2, (output_size,))
    params["linear"] = dict(w_t=w.T, b=b.reshape(1, output_size))
    return params


# ------------------------------ pure-JAX reference -----------------------------
def reference_forward(params, x):
    xt = jnp.transpose(x, (1, 0, 2)).astype(jnp.float32)   # (S, B, In)
    S, B, _ = xt.shape
    act = xt
    for p in params["gru"]:
        H = p["whh_t"].shape[0]
        gi = jnp.einsum("sbi,ig->sbg", act, p["wih_t"]) + p["b_x"]

        def gstep(h, g, whh=p["whh_t"], bhn=p["bh_n"], H=H):
            gh = h @ whh
            r = jax.nn.sigmoid(g[:, :H] + gh[:, :H])
            z = jax.nn.sigmoid(g[:, H:2 * H] + gh[:, H:2 * H])
            n = jnp.tanh(g[:, 2 * H:] + r * (gh[:, 2 * H:] + bhn))
            h_new = (1.0 - z) * n + z * h
            return h_new, h_new

        _, act = jax.lax.scan(gstep, jnp.zeros((B, H), jnp.float32), gi)
    for p in params["lstm"]:
        H = p["whh_t"].shape[0]
        gi = jnp.einsum("sbi,ig->sbg", act, p["wih_t"]) + p["b"]

        def lstep(carry, g, whh=p["whh_t"], H=H):
            h, c = carry
            gt = g + h @ whh
            i = jax.nn.sigmoid(gt[:, :H])
            f = jax.nn.sigmoid(gt[:, H:2 * H])
            gg = jnp.tanh(gt[:, 2 * H:3 * H])
            o = jax.nn.sigmoid(gt[:, 3 * H:])
            c = f * c + i * gg
            h = o * jnp.tanh(c)
            return (h, c), h

        _, act = jax.lax.scan(
            lstep, (jnp.zeros((B, H), jnp.float32), jnp.zeros((B, H), jnp.float32)), gi)
    y = jnp.einsum("sbh,ho->sbo", act, params["linear"]["w_t"]) + params["linear"]["b"]
    return jnp.transpose(y, (1, 0, 2))


if __name__ == "__main__":
    input_size, hidden_size = 16, 32
    gru_layers, lstm_layers = 2, 2
    output_size = 8
    batch, seq = 2, 8

    key = jax.random.PRNGKey(0)
    key, kx, kp = jax.random.split(key, 3)
    x = jax.random.normal(kx, (batch, seq, input_size), jnp.float32)
    params = init_params(kp, input_size, hidden_size, gru_layers, lstm_layers, output_size)

    y = gru_lstm_forward(params, x)
    jax.block_until_ready(y)
    assert y.shape == (batch, seq, output_size), y.shape

    y_ref = reference_forward(params, x)
    err = float(jnp.max(jnp.abs(y - y_ref)))
    assert err < 2e-2, f"max abs err vs reference: {err}"
    print("KERNEL_OK")
</pallas_src>

<mosaic_0001>
module attributes {stable_mosaic.version = 11 : i64} {
  func.func @kernel(%arg0: memref<16x16xf32, #tpu.memory_space<vmem>>, %arg1: memref<16x96xf32, #tpu.memory_space<vmem>>, %arg2: memref<32x96xf32, #tpu.memory_space<vmem>>, %arg3: memref<1x96xf32, #tpu.memory_space<vmem>>, %arg4: memref<1x32xf32, #tpu.memory_space<vmem>>, %arg5: memref<32x96xf32, #tpu.memory_space<vmem>>, %arg6: memref<32x96xf32, #tpu.memory_space<vmem>>, %arg7: memref<1x96xf32, #tpu.memory_space<vmem>>, %arg8: memref<1x32xf32, #tpu.memory_space<vmem>>, %arg9: memref<32x128xf32, #tpu.memory_space<vmem>>, %arg10: memref<32x128xf32, #tpu.memory_space<vmem>>, %arg11: memref<1x128xf32, #tpu.memory_space<vmem>>, %arg12: memref<32x128xf32, #tpu.memory_space<vmem>>, %arg13: memref<32x128xf32, #tpu.memory_space<vmem>>, %arg14: memref<1x128xf32, #tpu.memory_space<vmem>>, %arg15: memref<32x128xf32, #tpu.memory_space<vmem>>, %arg16: memref<1x128xf32, #tpu.memory_space<vmem>>, %arg17: memref<16x128xf32, #tpu.memory_space<vmem>>, %arg18: memref<16x32xf32, #tpu.memory_space<vmem>>) attributes {dimension_semantics = [], scalar_prefetch = 0 : i64, scratch_operands = 1 : i64, tpu.core_type = #tpu.core_type<tc>} {
    %c0 = arith.constant 0 : index
    %c0_0 = arith.constant 0 : index
    %0 = vector.load %arg0[%c0, %c0_0] : memref<16x16xf32, #tpu.memory_space<vmem>>, vector<16x16xf32>
    %c0_1 = arith.constant 0 : index
    %c0_2 = arith.constant 0 : index
    %1 = vector.load %arg1[%c0_1, %c0_2] : memref<16x96xf32, #tpu.memory_space<vmem>>, vector<16x96xf32>
    %cst = arith.constant dense<0.000000e+00> : vector<16x96xf32>
    %2 = tpu.matmul %0, %1, %cst {dimension_numbers = #tpu.dot_dimension_numbers<[1], [0], [0], [1], [0, 0, 1, 1], [], []>} : vector<16x16xf32>, vector<16x96xf32>, vector<16x96xf32> -> vector<16x96xf32>
    %c0_3 = arith.constant 0 : index
    %c0_4 = arith.constant 0 : index
    %3 = vector.load %arg3[%c0_3, %c0_4] : memref<1x96xf32, #tpu.memory_space<vmem>>, vector<1x96xf32>
    %4 = vector.broadcast %3 : vector<1x96xf32> to vector<16x96xf32>
    %5 = arith.addf %2, %4 : vector<16x96xf32>
    %c0_5 = arith.constant 0 : index
    %c0_6 = arith.constant 0 : index
    %6 = vector.load %arg2[%c0_5, %c0_6] : memref<32x96xf32, #tpu.memory_space<vmem>>, vector<32x96xf32>
    %c0_7 = arith.constant 0 : index
    %c0_8 = arith.constant 0 : index
    %7 = vector.load %arg4[%c0_7, %c0_8] : memref<1x32xf32, #tpu.memory_space<vmem>>, vector<1x32xf32>
    %cst_9 = arith.constant 0.000000e+00 : f32
    %8 = vector.broadcast %cst_9 : f32 to vector<2x32xf32>
    %9 = vector.extract_strided_slice %5 {offsets = [0, 0], sizes = [2, 96], strides = [1, 1]} : vector<16x96xf32> to vector<2x96xf32>
    %cst_10 = arith.constant dense<0.000000e+00> : vector<2x96xf32>
    %10 = tpu.matmul %8, %6, %cst_10 {dimension_numbers = #tpu.dot_dimension_numbers<[1], [0], [0], [1], [0, 0, 1, 1], [], []>} : vector<2x32xf32>, vector<32x96xf32>, vector<2x96xf32> -> vector<2x96xf32>
    %11 = vector.extract_strided_slice %9 {offsets = [0, 0], sizes = [2, 32], strides = [1, 1]} : vector<2x96xf32> to vector<2x32xf32>
    %12 = vector.extract_strided_slice %10 {offsets = [0, 0], sizes = [2, 32], strides = [1, 1]} : vector<2x96xf32> to vector<2x32xf32>
    %13 = arith.addf %11, %12 : vector<2x32xf32>
    %14 = arith.negf %13 : vector<2x32xf32>
    %15 = math.exp %14 : vector<2x32xf32>
    %cst_11 = arith.constant 1.000000e+00 : f32
    %16 = vector.broadcast %cst_11 : f32 to vector<2x32xf32>
    %17 = arith.addf %16, %15 : vector<2x32xf32>
    %18 = arith.divf %16, %17 : vector<2x32xf32>
    %19 = vector.extract_strided_slice %9 {offsets = [0, 32], sizes = [2, 32], strides = [1, 1]} : vector<2x96xf32> to vector<2x32xf32>
    %20 = vector.extract_strided_slice %10 {offsets = [0, 32], sizes = [2, 32], strides = [1, 1]} : vector<2x96xf32> to vector<2x32xf32>
    %21 = arith.addf %19, %20 : vector<2x32xf32>
    %22 = arith.negf %21 : vector<2x32xf32>
    %23 = math.exp %22 : vector<2x32xf32>
    %cst_12 = arith.constant 1.000000e+00 : f32
    %24 = vector.broadcast %cst_12 : f32 to vector<2x32xf32>
    %25 = arith.addf %24, %23 : vector<2x32xf32>
    %26 = arith.divf %24, %25 : vector<2x32xf32>
    %27 = vector.extract_strided_slice %9 {offsets = [0, 64], sizes = [2, 32], strides = [1, 1]} : vector<2x96xf32> to vector<2x32xf32>
    %28 = vector.extract_strided_slice %10 {offsets = [0, 64], sizes = [2, 32], strides = [1, 1]} : vector<2x96xf32> to vector<2x32xf32>
    %29 = vector.broadcast %7 : vector<1x32xf32> to vector<2x32xf32>
    %30 = arith.addf %28, %29 : vector<2x32xf32>
    %31 = arith.mulf %18, %30 : vector<2x32xf32>
    %32 = arith.addf %27, %31 : vector<2x32xf32>
    %33 = math.tanh %32 : vector<2x32xf32>
    %cst_13 = arith.constant 1.000000e+00 : f32
    %34 = vector.broadcast %cst_13 : f32 to vector<2x32xf32>
    %35 = arith.subf %34, %26 : vector<2x32xf32>
    %36 = arith.mulf %35, %33 : vector<2x32xf32>
    %37 = arith.mulf %26, %8 : vector<2x32xf32>
    %38 = arith.addf %36, %37 : vector<2x32xf32>
    %c0_14 = arith.constant 0 : index
    %c0_15 = arith.constant 0 : index
    %39 = vector.load %arg18[%c0_14, %c0_15] : memref<16x32xf32, #tpu.memory_space<vmem>>, vector<2x32xf32>
    tpu.vector_store %arg18[%c0_14, %c0_15], %38 {strides = array<i32>} : memref<16x32xf32, #tpu.memory_space<vmem>>, vector<2x32xf32>,
    %40 = vector.extract_strided_slice %5 {offsets = [2, 0], sizes = [2, 96], strides = [1, 1]} : vector<16x96xf32> to vector<2x96xf32>
    %cst_16 = arith.constant dense<0.000000e+00> : vector<2x96xf32>
    %41 = tpu.matmul %38, %6, %cst_16 {dimension_numbers = #tpu.dot_dimension_numbers<[1], [0], [0], [1], [0, 0, 1, 1], [], []>} : vector<2x32xf32>, vector<32x96xf32>, vector<2x96xf32> -> vector<2x96xf32>
    %42 = vector.extract_strided_slice %40 {offsets = [0, 0], sizes = [2, 32], strides = [1, 1]} : vector<2x96xf32> to vector<2x32xf32>
    %43 = vector.extract_strided_slice %41 {offsets = [0, 0], sizes = [2, 32], strides = [1, 1]} : vector<2x96xf32> to vector<2x32xf32>
    %44 = arith.addf %42, %43 : vector<2x32xf32>
    %45 = arith.negf %44 : vector<2x32xf32>
    %46 = math.exp %45 : vector<2x32xf32>
    %cst_17 = arith.constant 1.000000e+00 : f32
    %47 = vector.broadcast %cst_17 : f32 to vector<2x32xf32>
    %48 = arith.addf %47, %46 : vector<2x32xf32>
    %49 = arith.divf %47, %48 : vector<2x32xf32>
    %50 = vector.extract_strided_slice %40 {offsets = [0, 32], sizes = [2, 32], strides = [1, 1]} : vector<2x96xf32> to vector<2x32xf32>
    %51 = vector.extract_strided_slice %41 {offsets = [0, 32], sizes = [2, 32], strides = [1, 1]} : vector<2x96xf32> to vector<2x32xf32>
    %52 = arith.addf %50, %51 : vector<2x32xf32>
    %53 = arith.negf %52 : vector<2x32xf32>
    %54 = math.exp %53 : vector<2x32xf32>
    %cst_18 = arith.constant 1.000000e+00 : f32
    %55 = vector.broadcast %cst_18 : f32 to vector<2x32xf32>
    %56 = arith.addf %55, %54 : vector<2x32xf32>
    %57 = arith.divf %55, %56 : vector<2x32xf32>
    %58 = vector.extract_strided_slice %40 {offsets = [0, 64], sizes = [2, 32], strides = [1, 1]} : vector<2x96xf32> to vector<2x32xf32>
    %59 = vector.extract_strided_slice %41 {offsets = [0, 64], sizes = [2, 32], strides = [1, 1]} : vector<2x96xf32> to vector<2x32xf32>
    %60 = vector.broadcast %7 : vector<1x32xf32> to vector<2x32xf32>
    %61 = arith.addf %59, %60 : vector<2x32xf32>
    %62 = arith.mulf %49, %61 : vector<2x32xf32>
    %63 = arith.addf %58, %62 : vector<2x32xf32>
    %64 = math.tanh %63 : vector<2x32xf32>
    %cst_19 = arith.constant 1.000000e+00 : f32
    %65 = vector.broadcast %cst_19 : f32 to vector<2x32xf32>
    %66 = arith.subf %65, %57 : vector<2x32xf32>
    %67 = arith.mulf %66, %64 : vector<2x32xf32>
    %68 = arith.mulf %57, %38 : vector<2x32xf32>
    %69 = arith.addf %67, %68 : vector<2x32xf32>
    %c2 = arith.constant 2 : index
    %c0_20 = arith.constant 0 : index
    %70 = vector.load %arg18[%c2, %c0_20] : memref<16x32xf32, #tpu.memory_space<vmem>>, vector<2x32xf32>
    tpu.vector_store %arg18[%c2, %c0_20], %69 {strides = array<i32>} : memref<16x32xf32, #tpu.memory_space<vmem>>, vector<2x32xf32>,
    %71 = vector.extract_strided_slice %5 {offsets = [4, 0], sizes = [2, 96], strides = [1, 1]} : vector<16x96xf32> to vector<2x96xf32>
    %cst_21 = arith.constant dense<0.000000e+00> : vector<2x96xf32>
    %72 = tpu.matmul %69, %6, %cst_21 {dimension_numbers = #tpu.dot_dimension_numbers<[1], [0], [0], [1], [0, 0, 1, 1], [], []>} : vector<2x32xf32>, vector<32x96xf32>, vector<2x96xf32> -> vector<2x96xf32>
    %73 = vector.extract_strided_slice %71 {offsets = [0, 0], sizes = [2, 32], strides = [1, 1]} : vector<2x96xf32> to vector<2x32xf32>
    %74 = vector.extract_strided_slice %72 {offsets = [0, 0], sizes = [2, 32], strides = [1, 1]} : vector<2x96xf32> to vector<2x32xf32>
    %75 = arith.addf %73, %74 : vector<2x32xf32>
    %76 = arith.negf %75 : vector<2x32xf32>
    %77 = math.exp %76 : vector<2x32xf32>
    %cst_22 = arith.constant 1.000000e+00 : f32
    %78 = vector.broadcast %cst_22 : f32 to vector<2x32xf32>
    %79 = arith.addf %78, %77 : vector<2x32xf32>
    %80 = arith.divf %78, %79 : vector<2x32xf32>
    %81 = vector.extract_strided_slice %71 {offsets = [0, 32], sizes = [2, 32], strides = [1, 1]} : vector<2x96xf32> to vector<2x32xf32>
    %82 = vector.extract_strided_slice %72 {offsets = [0, 32], sizes = [2, 32], strides = [1, 1]} : vector<2x96xf32> to vector<2x32xf32>
    %83 = arith.addf %81, %82 : vector<2x32xf32>
    %84 = arith.negf %83 : vector<2x32xf32>
    %85 = math.exp %84 : vector<2x32xf32>
    %cst_23 = arith.constant 1.000000e+00 : f32
    %86 = vector.broadcast %cst_23 : f32 to vector<2x32xf32>
    %87 = arith.addf %86, %85 : vector<2x32xf32>
    %88 = arith.divf %86, %87 : vector<2x32xf32>
    %89 = vector.extract_strided_slice %71 {offsets = [0, 64], sizes = [2, 32], strides = [1, 1]} : vector<2x96xf32> to vector<2x32xf32>
    %90 = vector.extract_strided_slice %72 {offsets = [0, 64], sizes = [2, 32], strides = [1, 1]} : vector<2x96xf32> to vector<2x32xf32>
    %91 = vector.broadcast %7 : vector<1x32xf32> to vector<2x32xf32>
    %92 = arith.addf %90, %91 : vector<2x32xf32>
    %93 = arith.mulf %80, %92 : vector<2x32xf32>
    %94 = arith.addf %89, %93 : vector<2x32xf32>
    %95 = math.tanh %94 : vector<2x32xf32>
    %cst_24 = arith.constant 1.000000e+00 : f32
    %96 = vector.broadcast %cst_24 : f32 to vector<2x32xf32>
    %97 = arith.subf %96, %88 : vector<2x32xf32>
    %98 = arith.mulf %97, %95 : vector<2x32xf32>
    %99 = arith.mulf %88, %69 : vector<2x32xf32>
    %100 = arith.addf %98, %99 : vector<2x32xf32>
    %c4 = arith.constant 4 : index
    %c0_25 = arith.constant 0 : index
    %101 = vector.load %arg18[%c4, %c0_25] : memref<16x32xf32, #tpu.memory_space<vmem>>, vector<2x32xf32>
    tpu.vector_store %arg18[%c4, %c0_25], %100 {strides = array<i32>} : memref<16x32xf32, #tpu.memory_space<vmem>>, vector<2x32xf32>,
    %102 = vector.extract_strided_slice %5 {offsets = [6, 0], sizes = [2, 96], strides = [1, 1]} : vector<16x96xf32> to vector<2x96xf32>
    %cst_26 = arith.constant dense<0.000000e+00> : vector<2x96xf32>
    %103 = tpu.matmul %100, %6, %cst_26 {dimension_numbers = #tpu.dot_dimension_numbers<[1], [0], [0], [1], [0, 0, 1, 1], [], []>} : vector<2x32xf32>, vector<32x96xf32>, vector<2x96xf32> -> vector<2x96xf32>
    %104 = vector.extract_strided_slice %102 {offsets = [0, 0], sizes = [2, 32], strides = [1, 1]} : vector<2x96xf32> to vector<2x32xf32>
    %105 = vector.extract_strided_slice %103 {offsets = [0, 0], sizes = [2, 32], strides = [1, 1]} : vector<2x96xf32> to vector<2x32xf32>
    %106 = arith.addf %104, %105 : vector<2x32xf32>
    %107 = arith.negf %106 : vector<2x32xf32>
    %108 = math.exp %107 : vector<2x32xf32>
    %cst_27 = arith.constant 1.000000e+00 : f32
    %109 = vector.broadcast %cst_27 : f32 to vector<2x32xf32>
    %110 = arith.addf %109, %108 : vector<2x32xf32>
    %111 = arith.divf %109, %110 : vector<2x32xf32>
    %112 = vector.extract_strided_slice %102 {offsets = [0, 32], sizes = [2, 32], strides = [1, 1]} : vector<2x96xf32> to vector<2x32xf32>
    %113 = vector.extract_strided_slice %103 {offsets = [0, 32], sizes = [2, 32], strides = [1, 1]} : vector<2x96xf32> to vector<2x32xf32>
    %114 = arith.addf %112, %113 : vector<2x32xf32>
    %115 = arith.negf %114 : vector<2x32xf32>
    %116 = math.exp %115 : vector<2x32xf32>
    %cst_28 = arith.constant 1.000000e+00 : f32
    %117 = vector.broadcast %cst_28 : f32 to vector<2x32xf32>
    %118 = arith.addf %117, %116 : vector<2x32xf32>
    %119 = arith.divf %117, %118 : vector<2x32xf32>
    %120 = vector.extract_strided_slice %102 {offsets = [0, 64], sizes = [2, 32], strides = [1, 1]} : vector<2x96xf32> to vector<2x32xf32>
    %121 = vector.extract_strided_slice %103 {offsets = [0, 64], sizes = [2, 32], strides = [1, 1]} : vector<2x96xf32> to vector<2x32xf32>
    %122 = vector.broadcast %7 : vector<1x32xf32> to vector<2x32xf32>
    %123 = arith.addf %121, %122 : vector<2x32xf32>
    %124 = arith.mulf %111, %123 : vector<2x32xf32>
    %125 = arith.addf %120, %124 : vector<2x32xf32>
    %126 = math.tanh %125 : vector<2x32xf32>
    %cst_29 = arith.constant 1.000000e+00 : f32
    %127 = vector.broadcast %cst_29 : f32 to vector<2x32xf32>
    %128 = arith.subf %127, %119 : vector<2x32xf32>
    %129 = arith.mulf %128, %126 : vector<2x32xf32>
    %130 = arith.mulf %119, %100 : vector<2x32xf32>
    %131 = arith.addf %129, %130 : vector<2x32xf32>
    %c6 = arith.constant 6 : index
    %c0_30 = arith.constant 0 : index
    %132 = vector.load %arg18[%c6, %c0_30] : memref<16x32xf32, #tpu.memory_space<vmem>>, vector<2x32xf32>
    tpu.vector_store %arg18[%c6, %c0_30], %131 {strides = array<i32>} : memref<16x32xf32, #tpu.memory_space<vmem>>, vector<2x32xf32>,
    %133 = vector.extract_strided_slice %5 {offsets = [8, 0], sizes = [2, 96], strides = [1, 1]} : vector<16x96xf32> to vector<2x96xf32>
    %cst_31 = arith.constant dense<0.000000e+00> : vector<2x96xf32>
    %134 = tpu.matmul %131, %6, %cst_31 {dimension_numbers = #tpu.dot_dimension_numbers<[1], [0], [0], [1], [0, 0, 1, 1], [], []>} : vector<2x32xf32>, vector<32x96xf32>, vector<2x96xf32> -> vector<2x96xf32>
    %135 = vector.extract_strided_slice %133 {offsets = [0, 0], sizes = [2, 32], strides = [1, 1]} : vector<2x96xf32> to vector<2x32xf32>
    %136 = vector.extract_strided_slice %134 {offsets = [0, 0], sizes = [2, 32], strides = [1, 1]} : vector<2x96xf32> to vector<2x32xf32>
    %137 = arith.addf %135, %136 : vector<2x32xf32>
    %138 = arith.negf %137 : vector<2x32xf32>
    %139 = math.exp %138 : vector<2x32xf32>
    %cst_32 = arith.constant 1.000000e+00 : f32
    %140 = vector.broadcast %cst_32 : f32 to vector<2x32xf32>
    %141 = arith.addf %140, %139 : vector<2x32xf32>
    %142 = arith.divf %140, %141 : vector<2x32xf32>
    %143 = vector.extract_strided_slice %133 {offsets = [0, 32], sizes = [2, 32], strides = [1, 1]} : vector<2x96xf32> to vector<2x32xf32>
    %144 = vector.extract_strided_slice %134 {offsets = [0, 32], sizes = [2, 32], strides = [1, 1]} : vector<2x96xf32> to vector<2x32xf32>
    %145 = arith.addf %143, %144 : vector<2x32xf32>
    %146 = arith.negf %145 : vector<2x32xf32>
    %147 = math.exp %146 : vector<2x32xf32>
    %cst_33 = arith.constant 1.000000e+00 : f32
    %148 = vector.broadcast %cst_33 : f32 to vector<2x32xf32>
    %149 = arith.addf %148, %147 : vector<2x32xf32>
    %150 = arith.divf %148, %149 : vector<2x32xf32>
    %151 = vector.extract_strided_slice %133 {offsets = [0, 64], sizes = [2, 32], strides = [1, 1]} : vector<2x96xf32> to vector<2x32xf32>
    %152 = vector.extract_strided_slice %134 {offsets = [0, 64], sizes = [2, 32], strides = [1, 1]} : vector<2x96xf32> to vector<2x32xf32>
    %153 = vector.broadcast %7 : vector<1x32xf32> to vector<2x32xf32>
    %154 = arith.addf %152, %153 : vector<2x32xf32>
    %155 = arith.mulf %142, %154 : vector<2x32xf32>
    %156 = arith.addf %151, %155 : vector<2x32xf32>
    %157 = math.tanh %156 : vector<2x32xf32>
    %cst_34 = arith.constant 1.000000e+00 : f32
    %158 = vector.broadcast %cst_34 : f32 to vector<2x32xf32>
    %159 = arith.subf %158, %150 : vector<2x32xf32>
    %160 = arith.mulf %159, %157 : vector<2x32xf32>
    %161 = arith.mulf %150, %131 : vector<2x32xf32>
    %162 = arith.addf %160, %161 : vector<2x32xf32>
    %c8 = arith.constant 8 : index
    %c0_35 = arith.constant 0 : index
    %163 = vector.load %arg18[%c8, %c0_35] : memref<16x32xf32, #tpu.memory_space<vmem>>, vector<2x32xf32>
    tpu.vector_store %arg18[%c8, %c0_35], %162 {strides = array<i32>} : memref<16x32xf32, #tpu.memory_space<vmem>>, vector<2x32xf32>,
    %164 = vector.extract_strided_slice %5 {offsets = [10, 0], sizes = [2, 96], strides = [1, 1]} : vector<16x96xf32> to vector<2x96xf32>
    %cst_36 = arith.constant dense<0.000000e+00> : vector<2x96xf32>
    %165 = tpu.matmul %162, %6, %cst_36 {dimension_numbers = #tpu.dot_dimension_numbers<[1], [0], [0], [1], [0, 0, 1, 1], [], []>} : vector<2x32xf32>, vector<32x96xf32>, vector<2x96xf32> -> vector<2x96xf32>
    %166 = vector.extract_strided_slice %164 {offsets = [0, 0], sizes = [2, 32], strides = [1, 1]} : vector<2x96xf32> to vector<2x32xf32>
    %167 = vector.extract_strided_slice %165 {offsets = [0, 0], sizes = [2, 32], strides = [1, 1]} : vector<2x96xf32> to vector<2x32xf32>
    %168 = arith.addf %166, %167 : vector<2x32xf32>
    %169 = arith.negf %168 : vector<2x32xf32>
    %170 = math.exp %169 : vector<2x32xf32>
    %cst_37 = arith.constant 1.000000e+00 : f32
    %171 = vector.broadcast %cst_37 : f32 to vector<2x32xf32>
    %172 = arith.addf %171, %170 : vector<2x32xf32>
    %173 = arith.divf %171, %172 : vector<2x32xf32>
    %174 = vector.extract_strided_slice %164 {offsets = [0, 32], sizes = [2, 32], strides = [1, 1]} : vector<2x96xf32> to vector<2x32xf32>
    %175 = vector.extract_strided_slice %165 {offsets = [0, 32], sizes = [2, 32], strides = [1, 1]} : vector<2x96xf32> to vector<2x32xf32>
    %176 = arith.addf %174, %175 : vector<2x32xf32>
    %177 = arith.negf %176 : vector<2x32xf32>
    %178 = math.exp %177 : vector<2x32xf32>
    %cst_38 = arith.constant 1.000000e+00 : f32
    %179 = vector.broadcast %cst_38 : f32 to vector<2x32xf32>
    %180 = arith.addf %179, %178 : vector<2x32xf32>
    %181 = arith.divf %179, %180 : vector<2x32xf32>
    %182 = vector.extract_strided_slice %164 {offsets = [0, 64], sizes = [2, 32], strides = [1, 1]} : vector<2x96xf32> to vector<2x32xf32>
    %183 = vector.extract_strided_slice %165 {offsets = [0, 64], sizes = [2, 32], strides = [1, 1]} : vector<2x96xf32> to vector<2x32xf32>
    %184 = vector.broadcast %7 : vector<1x32xf32> to vector<2x32xf32>
    %185 = arith.addf %183, %184 : vector<2x32xf32>
    %186 = arith.mulf %173, %185 : vector<2x32xf32>
    %187 = arith.addf %182, %186 : vector<2x32xf32>
    %188 = math.tanh %187 : vector<2x32xf32>
    %cst_39 = arith.constant 1.000000e+00 : f32
    %189 = vector.broadcast %cst_39 : f32 to vector<2x32xf32>
    %190 = arith.subf %189, %181 : vector<2x32xf32>
    %191 = arith.mulf %190, %188 : vector<2x32xf32>
    %192 = arith.mulf %181, %162 : vector<2x32xf32>
    %193 = arith.addf %191, %192 : vector<2x32xf32>
    %c10 = arith.constant 10 : index
    %c0_40 = arith.constant 0 : index
    %194 = vector.load %arg18[%c10, %c0_40] : memref<16x32xf32, #tpu.memory_space<vmem>>, vector<2x32xf32>
    tpu.vector_store %arg18[%c10, %c0_40], %193 {strides = array<i32>} : memref<16x32xf32, #tpu.memory_space<vmem>>, vector<2x32xf32>,
    %195 = vector.extract_strided_slice %5 {offsets = [12, 0], sizes = [2, 96], strides = [1, 1]} : vector<16x96xf32> to vector<2x96xf32>
    %cst_41 = arith.constant dense<0.000000e+00> : vector<2x96xf32>
    %196 = tpu.matmul %193, %6, %cst_41 {dimension_numbers = #tpu.dot_dimension_numbers<[1], [0], [0], [1], [0, 0, 1, 1], [], []>} : vector<2x32xf32>, vector<32x96xf32>, vector<2x96xf32> -> vector<2x96xf32>
    %197 = vector.extract_strided_slice %195 {offsets = [0, 0], sizes = [2, 32], strides = [1, 1]} : vector<2x96xf32> to vector<2x32xf32>
    %198 = vector.extract_strided_slice %196 {offsets = [0, 0], sizes = [2, 32], strides = [1, 1]} : vector<2x96xf32> to vector<2x32xf32>
    %199 = arith.addf %197, %198 : vector<2x32xf32>
    %200 = arith.negf %199 : vector<2x32xf32>
    %201 = math.exp %200 : vector<2x32xf32>
    %cst_42 = arith.constant 1.000000e+00 : f32
    %202 = vector.broadcast %cst_42 : f32 to vector<2x32xf32>
    %203 = arith.addf %202, %201 : vector<2x32xf32>
    %204 = arith.divf %202, %203 : vector<2x32xf32>
    %205 = vector.extract_strided_slice %195 {offsets = [0, 32], sizes = [2, 32], strides = [1, 1]} : vector<2x96xf32> to vector<2x32xf32>
    %206 = vector.extract_strided_slice %196 {offsets = [0, 32], sizes = [2, 32], strides = [1, 1]} : vector<2x96xf32> to vector<2x32xf32>
    %207 = arith.addf %205, %206 : vector<2x32xf32>
    %208 = arith.negf %207 : vector<2x32xf32>
    %209 = math.exp %208 : vector<2x32xf32>
    %cst_43 = arith.constant 1.000000e+00 : f32
    %210 = vector.broadcast %cst_43 : f32 to vector<2x32xf32>
    %211 = arith.addf %210, %209 : vector<2x32xf32>
    %212 = arith.divf %210, %211 : vector<2x32xf32>
    %213 = vector.extract_strided_slice %195 {offsets = [0, 64], sizes = [2, 32], strides = [1, 1]} : vector<2x96xf32> to vector<2x32xf32>
    %214 = vector.extract_strided_slice %196 {offsets = [0, 64], sizes = [2, 32], strides = [1, 1]} : vector<2x96xf32> to vector<2x32xf32>
    %215 = vector.broadcast %7 : vector<1x32xf32> to vector<2x32xf32>
    %216 = arith.addf %214, %215 : vector<2x32xf32>
    %217 = arith.mulf %204, %216 : vector<2x32xf32>
    %218 = arith.addf %213, %217 : vector<2x32xf32>
    %219 = math.tanh %218 : vector<2x32xf32>
    %cst_44 = arith.constant 1.000000e+00 : f32
    %220 = vector.broadcast %cst_44 : f32 to vector<2x32xf32>
    %221 = arith.subf %220, %212 : vector<2x32xf32>
    %222 = arith.mulf %221, %219 : vector<2x32xf32>
    %223 = arith.mulf %212, %193 : vector<2x32xf32>
    %224 = arith.addf %222, %223 : vector<2x32xf32>
    %c12 = arith.constant 12 : index
    %c0_45 = arith.constant 0 : index
    %225 = vector.load %arg18[%c12, %c0_45] : memref<16x32xf32, #tpu.memory_space<vmem>>, vector<2x32xf32>
    tpu.vector_store %arg18[%c12, %c0_45], %224 {strides = array<i32>} : memref<16x32xf32, #tpu.memory_space<vmem>>, vector<2x32xf32>,
    %226 = vector.extract_strided_slice %5 {offsets = [14, 0], sizes = [2, 96], strides = [1, 1]} : vector<16x96xf32> to vector<2x96xf32>
    %cst_46 = arith.constant dense<0.000000e+00> : vector<2x96xf32>
    %227 = tpu.matmul %224, %6, %cst_46 {dimension_numbers = #tpu.dot_dimension_numbers<[1], [0], [0], [1], [0, 0, 1, 1], [], []>} : vector<2x32xf32>, vector<32x96xf32>, vector<2x96xf32> -> vector<2x96xf32>
    %228 = vector.extract_strided_slice %226 {offsets = [0, 0], sizes = [2, 32], strides = [1, 1]} : vector<2x96xf32> to vector<2x32xf32>
    %229 = vector.extract_strided_slice %227 {offsets = [0, 0], sizes = [2, 32], strides = [1, 1]} : vector<2x96xf32> to vector<2x32xf32>
    %230 = arith.addf %228, %229 : vector<2x32xf32>
    %231 = arith.negf %230 : vector<2x32xf32>
    %232 = math.exp %231 : vector<2x32xf32>
    %cst_47 = arith.constant 1.000000e+00 : f32
    %233 = vector.broadcast %cst_47 : f32 to vector<2x32xf32>
    %234 = arith.addf %233, %232 : vector<2x32xf32>
    %235 = arith.divf %233, %234 : vector<2x32xf32>
    %236 = vector.extract_strided_slice %226 {offsets = [0, 32], sizes = [2, 32], strides = [1, 1]} : vector<2x96xf32> to vector<2x32xf32>
    %237 = vector.extract_strided_slice %227 {offsets = [0, 32], sizes = [2, 32], strides = [1, 1]} : vector<2x96xf32> to vector<2x32xf32>
    %238 = arith.addf %236, %237 : vector<2x32xf32>
    %239 = arith.negf %238 : vector<2x32xf32>
    %240 = math.exp %239 : vector<2x32xf32>
    %cst_48 = arith.constant 1.000000e+00 : f32
    %241 = vector.broadcast %cst_48 : f32 to vector<2x32xf32>
    %242 = arith.addf %241, %240 : vector<2x32xf32>
    %243 = arith.divf %241, %242 : vector<2x32xf32>
    %244 = vector.extract_strided_slice %226 {offsets = [0, 64], sizes = [2, 32], strides = [1, 1]} : vector<2x96xf32> to vector<2x32xf32>
    %245 = vector.extract_strided_slice %227 {offsets = [0, 64], sizes = [2, 32], strides = [1, 1]} : vector<2x96xf32> to vector<2x32xf32>
    %246 = vector.broadcast %7 : vector<1x32xf32> to vector<2x32xf32>
    %247 = arith.addf %245, %246 : vector<2x32xf32>
    %248 = arith.mulf %235, %247 : vector<2x32xf32>
    %249 = arith.addf %244, %248 : vector<2x32xf32>
    %250 = math.tanh %249 : vector<2x32xf32>
    %cst_49 = arith.constant 1.000000e+00 : f32
    %251 = vector.broadcast %cst_49 : f32 to vector<2x32xf32>
    %252 = arith.subf %251, %243 : vector<2x32xf32>
    %253 = arith.mulf %252, %250 : vector<2x32xf32>
    %254 = arith.mulf %243, %224 : vector<2x32xf32>
    %255 = arith.addf %253, %254 : vector<2x32xf32>
    %c14 = arith.constant 14 : index
    %c0_50 = arith.constant 0 : index
    %256 = vector.load %arg18[%c14, %c0_50] : memref<16x32xf32, #tpu.memory_space<vmem>>, vector<2x32xf32>
    tpu.vector_store %arg18[%c14, %c0_50], %255 {strides = array<i32>} : memref<16x32xf32, #tpu.memory_space<vmem>>, vector<2x32xf32>,
    %c0_51 = arith.constant 0 : index
    %c0_52 = arith.constant 0 : index
    %257 = vector.load %arg18[%c0_51, %c0_52] : memref<16x32xf32, #tpu.memory_space<vmem>>, vector<16x32xf32>
    %c0_53 = arith.constant 0 : index
    %c0_54 = arith.constant 0 : index
    %258 = vector.load %arg5[%c0_53, %c0_54] : memref<32x96xf32, #tpu.memory_space<vmem>>, vector<32x96xf32>
    %cst_55 = arith.constant dense<0.000000e+00> : vector<16x96xf32>
    %259 = tpu.matmul %257, %258, %cst_55 {dimension_numbers = #tpu.dot_dimension_numbers<[1], [0], [0], [1], [0, 0, 1, 1], [], []>} : vector<16x32xf32>, vector<32x96xf32>, vector<16x96xf32> -> vector<16x96xf32>
    %c0_56 = arith.constant 0 : index
    %c0_57 = arith.constant 0 : index
    %260 = vector.load %arg7[%c0_56, %c0_57] : memref<1x96xf32, #tpu.memory_space<vmem>>, vector<1x96xf32>
    %261 = vector.broadcast %260 : vector<1x96xf32> to vector<16x96xf32>
    %262 = arith.addf %259, %261 : vector<16x96xf32>
    %c0_58 = arith.constant 0 : index
    %c0_59 = arith.constant 0 : index
    %263 = vector.load %arg6[%c0_58, %c0_59] : memref<32x96xf32, #tpu.memory_space<vmem>>, vector<32x96xf32>
    %c0_60 = arith.constant 0 : index
    %c0_61 = arith.constant 0 : index
    %264 = vector.load %arg8[%c0_60, %c0_61] : memref<1x32xf32, #tpu.memory_space<vmem>>, vector<1x32xf32>
    %cst_62 = arith.constant 0.000000e+00 : f32
    %265 = vector.broadcast %cst_62 : f32 to vector<2x32xf32>
    %266 = vector.extract_strided_slice %262 {offsets = [0, 0], sizes = [2, 96], strides = [1, 1]} : vector<16x96xf32> to vector<2x96xf32>
    %cst_63 = arith.constant dense<0.000000e+00> : vector<2x96xf32>
    %267 = tpu.matmul %265, %263, %cst_63 {dimension_numbers = #tpu.dot_dimension_numbers<[1], [0], [0], [1], [0, 0, 1, 1], [], []>} : vector<2x32xf32>, vector<32x96xf32>, vector<2x96xf32> -> vector<2x96xf32>
    %268 = vector.extract_strided_slice %266 {offsets = [0, 0], sizes = [2, 32], strides = [1, 1]} : vector<2x96xf32> to vector<2x32xf32>
    %269 = vector.extract_strided_slice %267 {offsets = [0, 0], sizes = [2, 32], strides = [1, 1]} : vector<2x96xf32> to vector<2x32xf32>
    %270 = arith.addf %268, %269 : vector<2x32xf32>
    %271 = arith.negf %270 : vector<2x32xf32>
    %272 = math.exp %271 : vector<2x32xf32>
    %cst_64 = arith.constant 1.000000e+00 : f32
    %273 = vector.broadcast %cst_64 : f32 to vector<2x32xf32>
    %274 = arith.addf %273, %272 : vector<2x32xf32>
    %275 = arith.divf %273, %274 : vector<2x32xf32>
    %276 = vector.extract_strided_slice %266 {offsets = [0, 32], sizes = [2, 32], strides = [1, 1]} : vector<2x96xf32> to vector<2x32xf32>
    %277 = vector.extract_strided_slice %267 {offsets = [0, 32], sizes = [2, 32], strides = [1, 1]} : vector<2x96xf32> to vector<2x32xf32>
    %278 = arith.addf %276, %277 : vector<2x32xf32>
    %279 = arith.negf %278 : vector<2x32xf32>
    %280 = math.exp %279 : vector<2x32xf32>
    %cst_65 = arith.constant 1.000000e+00 : f32
    %281 = vector.broadcast %cst_65 : f32 to vector<2x32xf32>
    %282 = arith.addf %281, %280 : vector<2x32xf32>
    %283 = arith.divf %281, %282 : vector<2x32xf32>
    %284 = vector.extract_strided_slice %266 {offsets = [0, 64], sizes = [2, 32], strides = [1, 1]} : vector<2x96xf32> to vector<2x32xf32>
    %285 = vector.extract_strided_slice %267 {offsets = [0, 64], sizes = [2, 32], strides = [1, 1]} : vector<2x96xf32> to vector<2x32xf32>
    %286 = vector.broadcast %264 : vector<1x32xf32> to vector<2x32xf32>
    %287 = arith.addf %285, %286 : vector<2x32xf32>
    %288 = arith.mulf %275, %287 : vector<2x32xf32>
    %289 = arith.addf %284, %288 : vector<2x32xf32>
    %290 = math.tanh %289 : vector<2x32xf32>
    %cst_66 = arith.constant 1.000000e+00 : f32
    %291 = vector.broadcast %cst_66 : f32 to vector<2x32xf32>
    %292 = arith.subf %291, %283 : vector<2x32xf32>
    %293 = arith.mulf %292, %290 : vector<2x32xf32>
    %294 = arith.mulf %283, %265 : vector<2x32xf32>
    %295 = arith.addf %293, %294 : vector<2x32xf32>
    %c0_67 = arith.constant 0 : index
    %c0_68 = arith.constant 0 : index
    %296 = vector.load %arg18[%c0_67, %c0_68] : memref<16x32xf32, #tpu.memory_space<vmem>>, vector<2x32xf32>
    tpu.vector_store %arg18[%c0_67, %c0_68], %295 {strides = array<i32>} : memref<16x32xf32, #tpu.memory_space<vmem>>, vector<2x32xf32>,
    %297 = vector.extract_strided_slice %262 {offsets = [2, 0], sizes = [2, 96], strides = [1, 1]} : vector<16x96xf32> to vector<2x96xf32>
    %cst_69 = arith.constant dense<0.000000e+00> : vector<2x96xf32>
    %298 = tpu.matmul %295, %263, %cst_69 {dimension_numbers = #tpu.dot_dimension_numbers<[1], [0], [0], [1], [0, 0, 1, 1], [], []>} : vector<2x32xf32>, vector<32x96xf32>, vector<2x96xf32> -> vector<2x96xf32>
    %299 = vector.extract_strided_slice %297 {offsets = [0, 0], sizes = [2, 32], strides = [1, 1]} : vector<2x96xf32> to vector<2x32xf32>
    %300 = vector.extract_strided_slice %298 {offsets = [0, 0], sizes = [2, 32], strides = [1, 1]} : vector<2x96xf32> to vector<2x32xf32>
    %301 = arith.addf %299, %300 : vector<2x32xf32>
    %302 = arith.negf %301 : vector<2x32xf32>
    %303 = math.exp %302 : vector<2x32xf32>
    %cst_70 = arith.constant 1.000000e+00 : f32
    %304 = vector.broadcast %cst_70 : f32 to vector<2x32xf32>
    %305 = arith.addf %304, %303 : vector<2x32xf32>
    %306 = arith.divf %304, %305 : vector<2x32xf32>
    %307 = vector.extract_strided_slice %297 {offsets = [0, 32], sizes = [2, 32], strides = [1, 1]} : vector<2x96xf32> to vector<2x32xf32>
    %308 = vector.extract_strided_slice %298 {offsets = [0, 32], sizes = [2, 32], strides = [1, 1]} : vector<2x96xf32> to vector<2x32xf32>
    %309 = arith.addf %307, %308 : vector<2x32xf32>
    %310 = arith.negf %309 : vector<2x32xf32>
    %311 = math.exp %310 : vector<2x32xf32>
    %cst_71 = arith.constant 1.000000e+00 : f32
    %312 = vector.broadcast %cst_71 : f32 to vector<2x32xf32>
    %313 = arith.addf %312, %311 : vector<2x32xf32>
    %314 = arith.divf %312, %313 : vector<2x32xf32>
    %315 = vector.extract_strided_slice %297 {offsets = [0, 64], sizes = [2, 32], strides = [1, 1]} : vector<2x96xf32> to vector<2x32xf32>
    %316 = vector.extract_strided_slice %298 {offsets = [0, 64], sizes = [2, 32], strides = [1, 1]} : vector<2x96xf32> to vector<2x32xf32>
    %317 = vector.broadcast %264 : vector<1x32xf32> to vector<2x32xf32>
    %318 = arith.addf %316, %317 : vector<2x32xf32>
    %319 = arith.mulf %306, %318 : vector<2x32xf32>
    %320 = arith.addf %315, %319 : vector<2x32xf32>
    %321 = math.tanh %320 : vector<2x32xf32>
    %cst_72 = arith.constant 1.000000e+00 : f32
    %322 = vector.broadcast %cst_72 : f32 to vector<2x32xf32>
    %323 = arith.subf %322, %314 : vector<2x32xf32>
    %324 = arith.mulf %323, %321 : vector<2x32xf32>
    %325 = arith.mulf %314, %295 : vector<2x32xf32>
    %326 = arith.addf %324, %325 : vector<2x32xf32>
    %c2_73 = arith.constant 2 : index
    %c0_74 = arith.constant 0 : index
    %327 = vector.load %arg18[%c2_73, %c0_74] : memref<16x32xf32, #tpu.memory_space<vmem>>, vector<2x32xf32>
    tpu.vector_store %arg18[%c2_73, %c0_74], %326 {strides = array<i32>} : memref<16x32xf32, #tpu.memory_space<vmem>>, vector<2x32xf32>,
    %328 = vector.extract_strided_slice %262 {offsets = [4, 0], sizes = [2, 96], strides = [1, 1]} : vector<16x96xf32> to vector<2x96xf32>
    %cst_75 = arith.constant dense<0.000000e+00> : vector<2x96xf32>
    %329 = tpu.matmul %326, %263, %cst_75 {dimension_numbers = #tpu.dot_dimension_numbers<[1], [0], [0], [1], [0, 0, 1, 1], [], []>} : vector<2x32xf32>, vector<32x96xf32>, vector<2x96xf32> -> vector<2x96xf32>
    %330 = vector.extract_strided_slice %328 {offsets = [0, 0], sizes = [2, 32], strides = [1, 1]} : vector<2x96xf32> to vector<2x32xf32>
    %331 = vector.extract_strided_slice %329 {offsets = [0, 0], sizes = [2, 32], strides = [1, 1]} : vector<2x96xf32> to vector<2x32xf32>
    %332 = arith.addf %330, %331 : vector<2x32xf32>
    %333 = arith.negf %332 : vector<2x32xf32>
    %334 = math.exp %333 : vector<2x32xf32>
    %cst_76 = arith.constant 1.000000e+00 : f32
    %335 = vector.broadcast %cst_76 : f32 to vector<2x32xf32>
    %336 = arith.addf %335, %334 : vector<2x32xf32>
    %337 = arith.divf %335, %336 : vector<2x32xf32>
    %338 = vector.extract_strided_slice %328 {offsets = [0, 32], sizes = [2, 32], strides = [1, 1]} : vector<2x96xf32> to vector<2x32xf32>
    %339 = vector.extract_strided_slice %329 {offsets = [0, 32], sizes = [2, 32], strides = [1, 1]} : vector<2x96xf32> to vector<2x32xf32>
    %340 = arith.addf %338, %339 : vector<2x32xf32>
    %341 = arith.negf %340 : vector<2x32xf32>
    %342 = math.exp %341 : vector<2x32xf32>
    %cst_77 = arith.constant 1.000000e+00 : f32
    %343 = vector.broadcast %cst_77 : f32 to vector<2x32xf32>
    %344 = arith.addf %343, %342 : vector<2x32xf32>
    %345 = arith.divf %343, %344 : vector<2x32xf32>
    %346 = vector.extract_strided_slice %328 {offsets = [0, 64], sizes = [2, 32], strides = [1, 1]} : vector<2x96xf32> to vector<2x32xf32>
    %347 = vector.extract_strided_slice %329 {offsets = [0, 64], sizes = [2, 32], strides = [1, 1]} : vector<2x96xf32> to vector<2x32xf32>
    %348 = vector.broadcast %264 : vector<1x32xf32> to vector<2x32xf32>
    %349 = arith.addf %347, %348 : vector<2x32xf32>
    %350 = arith.mulf %337, %349 : vector<2x32xf32>
    %351 = arith.addf %346, %350 : vector<2x32xf32>
    %352 = math.tanh %351 : vector<2x32xf32>
    %cst_78 = arith.constant 1.000000e+00 : f32
    %353 = vector.broadcast %cst_78 : f32 to vector<2x32xf32>
    %354 = arith.subf %353, %345 : vector<2x32xf32>
    %355 = arith.mulf %354, %352 : vector<2x32xf32>
    %356 = arith.mulf %345, %326 : vector<2x32xf32>
    %357 = arith.addf %355, %356 : vector<2x32xf32>
    %c4_79 = arith.constant 4 : index
    %c0_80 = arith.constant 0 : index
    %358 = vector.load %arg18[%c4_79, %c0_80] : memref<16x32xf32, #tpu.memory_space<vmem>>, vector<2x32xf32>
    tpu.vector_store %arg18[%c4_79, %c0_80], %357 {strides = array<i32>} : memref<16x32xf32, #tpu.memory_space<vmem>>, vector<2x32xf32>,
    %359 = vector.extract_strided_slice %262 {offsets = [6, 0], sizes = [2, 96], strides = [1, 1]} : vector<16x96xf32> to vector<2x96xf32>
    %cst_81 = arith.constant dense<0.000000e+00> : vector<2x96xf32>
    %360 = tpu.matmul %357, %263, %cst_81 {dimension_numbers = #tpu.dot_dimension_numbers<[1], [0], [0], [1], [0, 0, 1, 1], [], []>} : vector<2x32xf32>, vector<32x96xf32>, vector<2x96xf32> -> vector<2x96xf32>
    %361 = vector.extract_strided_slice %359 {offsets = [0, 0], sizes = [2, 32], strides = [1, 1]} : vector<2x96xf32> to vector<2x32xf32>
    %362 = vector.extract_strided_slice %360 {offsets = [0, 0], sizes = [2, 32], strides = [1, 1]} : vector<2x96xf32> to vector<2x32xf32>
    %363 = arith.addf %361, %362 : vector<2x32xf32>
    %364 = arith.negf %363 : vector<2x32xf32>
    %365 = math.exp %364 : vector<2x32xf32>
    %cst_82 = arith.constant 1.000000e+00 : f32
    %366 = vector.broadcast %cst_82 : f32 to vector<2x32xf32>
    %367 = arith.addf %366, %365 : vector<2x32xf32>
    %368 = arith.divf %366, %367 : vector<2x32xf32>
    %369 = vector.extract_strided_slice %359 {offsets = [0, 32], sizes = [2, 32], strides = [1, 1]} : vector<2x96xf32> to vector<2x32xf32>
    %370 = vector.extract_strided_slice %360 {offsets = [0, 32], sizes = [2, 32], strides = [1, 1]} : vector<2x96xf32> to vector<2x32xf32>
    %371 = arith.addf %369, %370 : vector<2x32xf32>
    %372 = arith.negf %371 : vector<2x32xf32>
    %373 = math.exp %372 : vector<2x32xf32>
    %cst_83 = arith.constant 1.000000e+00 : f32
    %374 = vector.broadcast %cst_83 : f32 to vector<2x32xf32>
    %375 = arith.addf %374, %373 : vector<2x32xf32>
    %376 = arith.divf %374, %375 : vector<2x32xf32>
    %377 = vector.extract_strided_slice %359 {offsets = [0, 64], sizes = [2, 32], strides = [1, 1]} : vector<2x96xf32> to vector<2x32xf32>
    %378 = vector.extract_strided_slice %360 {offsets = [0, 64], sizes = [2, 32], strides = [1, 1]} : vector<2x96xf32> to vector<2x32xf32>
    %379 = vector.broadcast %264 : vector<1x32xf32> to vector<2x32xf32>
    %380 = arith.addf %378, %379 : vector<2x32xf32>
    %381 = arith.mulf %368, %380 : vector<2x32xf32>
    %382 = arith.addf %377, %381 : vector<2x32xf32>
    %383 = math.tanh %382 : vector<2x32xf32>
    %cst_84 = arith.constant 1.000000e+00 : f32
    %384 = vector.broadcast %cst_84 : f32 to vector<2x32xf32>
    %385 = arith.subf %384, %376 : vector<2x32xf32>
    %386 = arith.mulf %385, %383 : vector<2x32xf32>
    %387 = arith.mulf %376, %357 : vector<2x32xf32>
    %388 = arith.addf %386, %387 : vector<2x32xf32>
    %c6_85 = arith.constant 6 : index
    %c0_86 = arith.constant 0 : index
    %389 = vector.load %arg18[%c6_85, %c0_86] : memref<16x32xf32, #tpu.memory_space<vmem>>, vector<2x32xf32>
    tpu.vector_store %arg18[%c6_85, %c0_86], %388 {strides = array<i32>} : memref<16x32xf32, #tpu.memory_space<vmem>>, vector<2x32xf32>,
    %390 = vector.extract_strided_slice %262 {offsets = [8, 0], sizes = [2, 96], strides = [1, 1]} : vector<16x96xf32> to vector<2x96xf32>
    %cst_87 = arith.constant dense<0.000000e+00> : vector<2x96xf32>
    %391 = tpu.matmul %388, %263, %cst_87 {dimension_numbers = #tpu.dot_dimension_numbers<[1], [0], [0], [1], [0, 0, 1, 1], [], []>} : vector<2x32xf32>, vector<32x96xf32>, vector<2x96xf32> -> vector<2x96xf32>
    %392 = vector.extract_strided_slice %390 {offsets = [0, 0], sizes = [2, 32], strides = [1, 1]} : vector<2x96xf32> to vector<2x32xf32>
    %393 = vector.extract_strided_slice %391 {offsets = [0, 0], sizes = [2, 32], strides = [1, 1]} : vector<2x96xf32> to vector<2x32xf32>
    %394 = arith.addf %392, %393 : vector<2x32xf32>
    %395 = arith.negf %394 : vector<2x32xf32>
    %396 = math.exp %395 : vector<2x32xf32>
    %cst_88 = arith.constant 1.000000e+00 : f32
    %397 = vector.broadcast %cst_88 : f32 to vector<2x32xf32>
    %398 = arith.addf %397, %396 : vector<2x32xf32>
    %399 = arith.divf %397, %398 : vector<2x32xf32>
    %400 = vector.extract_strided_slice %390 {offsets = [0, 32], sizes = [2, 32], strides = [1, 1]} : vector<2x96xf32> to vector<2x32xf32>
    %401 = vector.extract_strided_slice %391 {offsets = [0, 32], sizes = [2, 32], strides = [1, 1]} : vector<2x96xf32> to vector<2x32xf32>
    %402 = arith.addf %400, %401 : vector<2x32xf32>
    %403 = arith.negf %402 : vector<2x32xf32>
    %404 = math.exp %403 : vector<2x32xf32>
    %cst_89 = arith.constant 1.000000e+00 : f32
    %405 = vector.broadcast %cst_89 : f32 to vector<2x32xf32>
    %406 = arith.addf %405, %404 : vector<2x32xf32>
    %407 = arith.divf %405, %406 : vector<2x32xf32>
    %408 = vector.extract_strided_slice %390 {offsets = [0, 64], sizes = [2, 32], strides = [1, 1]} : vector<2x96xf32> to vector<2x32xf32>
    %409 = vector.extract_strided_slice %391 {offsets = [0, 64], sizes = [2, 32], strides = [1, 1]} : vector<2x96xf32> to vector<2x32xf32>
    %410 = vector.broadcast %264 : vector<1x32xf32> to vector<2x32xf32>
    %411 = arith.addf %409, %410 : vector<2x32xf32>
    %412 = arith.mulf %399, %411 : vector<2x32xf32>
    %413 = arith.addf %408, %412 : vector<2x32xf32>
    %414 = math.tanh %413 : vector<2x32xf32>
    %cst_90 = arith.constant 1.000000e+00 : f32
    %415 = vector.broadcast %cst_90 : f32 to vector<2x32xf32>
    %416 = arith.subf %415, %407 : vector<2x32xf32>
    %417 = arith.mulf %416, %414 : vector<2x32xf32>
    %418 = arith.mulf %407, %388 : vector<2x32xf32>
    %419 = arith.addf %417, %418 : vector<2x32xf32>
    %c8_91 = arith.constant 8 : index
    %c0_92 = arith.constant 0 : index
    %420 = vector.load %arg18[%c8_91, %c0_92] : memref<16x32xf32, #tpu.memory_space<vmem>>, vector<2x32xf32>
    tpu.vector_store %arg18[%c8_91, %c0_92], %419 {strides = array<i32>} : memref<16x32xf32, #tpu.memory_space<vmem>>, vector<2x32xf32>,
    %421 = vector.extract_strided_slice %262 {offsets = [10, 0], sizes = [2, 96], strides = [1, 1]} : vector<16x96xf32> to vector<2x96xf32>
    %cst_93 = arith.constant dense<0.000000e+00> : vector<2x96xf32>
    %422 = tpu.matmul %419, %263, %cst_93 {dimension_numbers = #tpu.dot_dimension_numbers<[1], [0], [0], [1], [0, 0, 1, 1], [], []>} : vector<2x32xf32>, vector<32x96xf32>, vector<2x96xf32> -> vector<2x96xf32>
    %423 = vector.extract_strided_slice %421 {offsets = [0, 0], sizes = [2, 32], strides = [1, 1]} : vector<2x96xf32> to vector<2x32xf32>
    %424 = vector.extract_strided_slice %422 {offsets = [0, 0], sizes = [2, 32], strides = [1, 1]} : vector<2x96xf32> to vector<2x32xf32>
    %425 = arith.addf %423, %424 : vector<2x32xf32>
    %426 = arith.negf %425 : vector<2x32xf32>
    %427 = math.exp %426 : vector<2x32xf32>
    %cst_94 = arith.constant 1.000000e+00 : f32
    %428 = vector.broadcast %cst_94 : f32 to vector<2x32xf32>
    %429 = arith.addf %428, %427 : vector<2x32xf32>
    %430 = arith.divf %428, %429 : vector<2x32xf32>
    %431 = vector.extract_strided_slice %421 {offsets = [0, 32], sizes = [2, 32], strides = [1, 1]} : vector<2x96xf32> to vector<2x32xf32>
    %432 = vector.extract_strided_slice %422 {offsets = [0, 32], sizes = [2, 32], strides = [1, 1]} : vector<2x96xf32> to vector<2x32xf32>
    %433 = arith.addf %431, %432 : vector<2x32xf32>
    %434 = arith.negf %433 : vector<2x32xf32>
    %435 = math.exp %434 : vector<2x32xf32>
    %cst_95 = arith.constant 1.000000e+00 : f32
    %436 = vector.broadcast %cst_95 : f32 to vector<2x32xf32>
    %437 = arith.addf %436, %435 : vector<2x32xf32>
    %438 = arith.divf %436, %437 : vector<2x32xf32>
    %439 = vector.extract_strided_slice %421 {offsets = [0, 64], sizes = [2, 32], strides = [1, 1]} : vector<2x96xf32> to vector<2x32xf32>
    %440 = vector.extract_strided_slice %422 {offsets = [0, 64], sizes = [2, 32], strides = [1, 1]} : vector<2x96xf32> to vector<2x32xf32>
    %441 = vector.broadcast %264 : vector<1x32xf32> to vector<2x32xf32>
    %442 = arith.addf %440, %441 : vector<2x32xf32>
    %443 = arith.mulf %430, %442 : vector<2x32xf32>
    %444 = arith.addf %439, %443 : vector<2x32xf32>
    %445 = math.tanh %444 : vector<2x32xf32>
    %cst_96 = arith.constant 1.000000e+00 : f32
    %446 = vector.broadcast %cst_96 : f32 to vector<2x32xf32>
    %447 = arith.subf %446, %438 : vector<2x32xf32>
    %448 = arith.mulf %447, %445 : vector<2x32xf32>
    %449 = arith.mulf %438, %419 : vector<2x32xf32>
    %450 = arith.addf %448, %449 : vector<2x32xf32>
    %c10_97 = arith.constant 10 : index
    %c0_98 = arith.constant 0 : index
    %451 = vector.load %arg18[%c10_97, %c0_98] : memref<16x32xf32, #tpu.memory_space<vmem>>, vector<2x32xf32>
    tpu.vector_store %arg18[%c10_97, %c0_98], %450 {strides = array<i32>} : memref<16x32xf32, #tpu.memory_space<vmem>>, vector<2x32xf32>,
    %452 = vector.extract_strided_slice %262 {offsets = [12, 0], sizes = [2, 96], strides = [1, 1]} : vector<16x96xf32> to vector<2x96xf32>
    %cst_99 = arith.constant dense<0.000000e+00> : vector<2x96xf32>
    %453 = tpu.matmul %450, %263, %cst_99 {dimension_numbers = #tpu.dot_dimension_numbers<[1], [0], [0], [1], [0, 0, 1, 1], [], []>} : vector<2x32xf32>, vector<32x96xf32>, vector<2x96xf32> -> vector<2x96xf32>
    %454 = vector.extract_strided_slice %452 {offsets = [0, 0], sizes = [2, 32], strides = [1, 1]} : vector<2x96xf32> to vector<2x32xf32>
    %455 = vector.extract_strided_slice %453 {offsets = [0, 0], sizes = [2, 32], strides = [1, 1]} : vector<2x96xf32> to vector<2x32xf32>
    %456 = arith.addf %454, %455 : vector<2x32xf32>
    %457 = arith.negf %456 : vector<2x32xf32>
    %458 = math.exp %457 : vector<2x32xf32>
    %cst_100 = arith.constant 1.000000e+00 : f32
    %459 = vector.broadcast %cst_100 : f32 to vector<2x32xf32>
    %460 = arith.addf %459, %458 : vector<2x32xf32>
    %461 = arith.divf %459, %460 : vector<2x32xf32>
    %462 = vector.extract_strided_slice %452 {offsets = [0, 32], sizes = [2, 32], strides = [1, 1]} : vector<2x96xf32> to vector<2x32xf32>
    %463 = vector.extract_strided_slice %453 {offsets = [0, 32], sizes = [2, 32], strides = [1, 1]} : vector<2x96xf32> to vector<2x32xf32>
    %464 = arith.addf %462, %463 : vector<2x32xf32>
    %465 = arith.negf %464 : vector<2x32xf32>
    %466 = math.exp %465 : vector<2x32xf32>
    %cst_101 = arith.constant 1.000000e+00 : f32
    %467 = vector.broadcast %cst_101 : f32 to vector<2x32xf32>
    %468 = arith.addf %467, %466 : vector<2x32xf32>
    %469 = arith.divf %467, %468 : vector<2x32xf32>
    %470 = vector.extract_strided_slice %452 {offsets = [0, 64], sizes = [2, 32], strides = [1, 1]} : vector<2x96xf32> to vector<2x32xf32>
    %471 = vector.extract_strided_slice %453 {offsets = [0, 64], sizes = [2, 32], strides = [1, 1]} : vector<2x96xf32> to vector<2x32xf32>
    %472 = vector.broadcast %264 : vector<1x32xf32> to vector<2x32xf32>
    %473 = arith.addf %471, %472 : vector<2x32xf32>
    %474 = arith.mulf %461, %473 : vector<2x32xf32>
    %475 = arith.addf %470, %474 : vector<2x32xf32>
    %476 = math.tanh %475 : vector<2x32xf32>
    %cst_102 = arith.constant 1.000000e+00 : f32
    %477 = vector.broadcast %cst_102 : f32 to vector<2x32xf32>
    %478 = arith.subf %477, %469 : vector<2x32xf32>
    %479 = arith.mulf %478, %476 : vector<2x32xf32>
    %480 = arith.mulf %469, %450 : vector<2x32xf32>
    %481 = arith.addf %479, %480 : vector<2x32xf32>
    %c12_103 = arith.constant 12 : index
    %c0_104 = arith.constant 0 : index
    %482 = vector.load %arg18[%c12_103, %c0_104] : memref<16x32xf32, #tpu.memory_space<vmem>>, vector<2x32xf32>
    tpu.vector_store %arg18[%c12_103, %c0_104], %481 {strides = array<i32>} : memref<16x32xf32, #tpu.memory_space<vmem>>, vector<2x32xf32>,
    %483 = vector.extract_strided_slice %262 {offsets = [14, 0], sizes = [2, 96], strides = [1, 1]} : vector<16x96xf32> to vector<2x96xf32>
    %cst_105 = arith.constant dense<0.000000e+00> : vector<2x96xf32>
    %484 = tpu.matmul %481, %263, %cst_105 {dimension_numbers = #tpu.dot_dimension_numbers<[1], [0], [0], [1], [0, 0, 1, 1], [], []>} : vector<2x32xf32>, vector<32x96xf32>, vector<2x96xf32> -> vector<2x96xf32>
    %485 = vector.extract_strided_slice %483 {offsets = [0, 0], sizes = [2, 32], strides = [1, 1]} : vector<2x96xf32> to vector<2x32xf32>
    %486 = vector.extract_strided_slice %484 {offsets = [0, 0], sizes = [2, 32], strides = [1, 1]} : vector<2x96xf32> to vector<2x32xf32>
    %487 = arith.addf %485, %486 : vector<2x32xf32>
    %488 = arith.negf %487 : vector<2x32xf32>
    %489 = math.exp %488 : vector<2x32xf32>
    %cst_106 = arith.constant 1.000000e+00 : f32
    %490 = vector.broadcast %cst_106 : f32 to vector<2x32xf32>
    %491 = arith.addf %490, %489 : vector<2x32xf32>
    %492 = arith.divf %490, %491 : vector<2x32xf32>
    %493 = vector.extract_strided_slice %483 {offsets = [0, 32], sizes = [2, 32], strides = [1, 1]} : vector<2x96xf32> to vector<2x32xf32>
    %494 = vector.extract_strided_slice %484 {offsets = [0, 32], sizes = [2, 32], strides = [1, 1]} : vector<2x96xf32> to vector<2x32xf32>
    %495 = arith.addf %493, %494 : vector<2x32xf32>
    %496 = arith.negf %495 : vector<2x32xf32>
    %497 = math.exp %496 : vector<2x32xf32>
    %cst_107 = arith.constant 1.000000e+00 : f32
    %498 = vector.broadcast %cst_107 : f32 to vector<2x32xf32>
    %499 = arith.addf %498, %497 : vector<2x32xf32>
    %500 = arith.divf %498, %499 : vector<2x32xf32>
    %501 = vector.extract_strided_slice %483 {offsets = [0, 64], sizes = [2, 32], strides = [1, 1]} : vector<2x96xf32> to vector<2x32xf32>
    %502 = vector.extract_strided_slice %484 {offsets = [0, 64], sizes = [2, 32], strides = [1, 1]} : vector<2x96xf32> to vector<2x32xf32>
    %503 = vector.broadcast %264 : vector<1x32xf32> to vector<2x32xf32>
    %504 = arith.addf %502, %503 : vector<2x32xf32>
    %505 = arith.mulf %492, %504 : vector<2x32xf32>
    %506 = arith.addf %501, %505 : vector<2x32xf32>
    %507 = math.tanh %506 : vector<2x32xf32>
    %cst_108 = arith.constant 1.000000e+00 : f32
    %508 = vector.broadcast %cst_108 : f32 to vector<2x32xf32>
    %509 = arith.subf %508, %500 : vector<2x32xf32>
    %510 = arith.mulf %509, %507 : vector<2x32xf32>
    %511 = arith.mulf %500, %481 : vector<2x32xf32>
    %512 = arith.addf %510, %511 : vector<2x32xf32>
    %c14_109 = arith.constant 14 : index
    %c0_110 = arith.constant 0 : index
    %513 = vector.load %arg18[%c14_109, %c0_110] : memref<16x32xf32, #tpu.memory_space<vmem>>, vector<2x32xf32>
    tpu.vector_store %arg18[%c14_109, %c0_110], %512 {strides = array<i32>} : memref<16x32xf32, #tpu.memory_space<vmem>>, vector<2x32xf32>,
    %c0_111 = arith.constant 0 : index
    %c0_112 = arith.constant 0 : index
    %514 = vector.load %arg18[%c0_111, %c0_112] : memref<16x32xf32, #tpu.memory_space<vmem>>, vector<16x32xf32>
    %c0_113 = arith.constant 0 : index
    %c0_114 = arith.constant 0 : index
    %515 = vector.load %arg9[%c0_113, %c0_114] : memref<32x128xf32, #tpu.memory_space<vmem>>, vector<32x128xf32>
    %cst_115 = arith.constant dense<0.000000e+00> : vector<16x128xf32>
    %516 = tpu.matmul %514, %515, %cst_115 {dimension_numbers = #tpu.dot_dimension_numbers<[1], [0], [0], [1], [0, 0, 1, 1], [], []>} : vector<16x32xf32>, vector<32x128xf32>, vector<16x128xf32> -> vector<16x128xf32>
    %c0_116 = arith.constant 0 : index
    %c0_117 = arith.constant 0 : index
    %517 = vector.load %arg11[%c0_116, %c0_117] : memref<1x128xf32, #tpu.memory_space<vmem>>, vector<1x128xf32>
    %518 = vector.broadcast %517 : vector<1x128xf32> to vector<16x128xf32>
    %519 = arith.addf %516, %518 : vector<16x128xf32>
    %c0_118 = arith.constant 0 : index
    %c0_119 = arith.constant 0 : index
    %520 = vector.load %arg10[%c0_118, %c0_119] : memref<32x128xf32, #tpu.memory_space<vmem>>, vector<32x128xf32>
    %cst_120 = arith.constant 0.000000e+00 : f32
    %521 = vector.broadcast %cst_120 : f32 to vector<2x32xf32>
    %cst_121 = arith.constant 0.000000e+00 : f32
    %522 = vector.broadcast %cst_121 : f32 to vector<2x32xf32>
    %523 = vector.extract_strided_slice %519 {offsets = [0, 0], sizes = [2, 128], strides = [1, 1]} : vector<16x128xf32> to vector<2x128xf32>
    %cst_122 = arith.constant dense<0.000000e+00> : vector<2x128xf32>
    %524 = tpu.matmul %521, %520, %cst_122 {dimension_numbers = #tpu.dot_dimension_numbers<[1], [0], [0], [1], [0, 0, 1, 1], [], []>} : vector<2x32xf32>, vector<32x128xf32>, vector<2x128xf32> -> vector<2x128xf32>
    %525 = arith.addf %523, %524 : vector<2x128xf32>
    %526 = vector.extract_strided_slice %525 {offsets = [0, 0], sizes = [2, 32], strides = [1, 1]} : vector<2x128xf32> to vector<2x32xf32>
    %527 = arith.negf %526 : vector<2x32xf32>
    %528 = math.exp %527 : vector<2x32xf32>
    %cst_123 = arith.constant 1.000000e+00 : f32
    %529 = vector.broadcast %cst_123 : f32 to vector<2x32xf32>
    %530 = arith.addf %529, %528 : vector<2x32xf32>
    %531 = arith.divf %529, %530 : vector<2x32xf32>
    %532 = vector.extract_strided_slice %525 {offsets = [0, 32], sizes = [2, 32], strides = [1, 1]} : vector<2x128xf32> to vector<2x32xf32>
    %533 = arith.negf %532 : vector<2x32xf32>
    %534 = math.exp %533 : vector<2x32xf32>
    %cst_124 = arith.constant 1.000000e+00 : f32
    %535 = vector.broadcast %cst_124 : f32 to vector<2x32xf32>
    %536 = arith.addf %535, %534 : vector<2x32xf32>
    %537 = arith.divf %535, %536 : vector<2x32xf32>
    %538 = vector.extract_strided_slice %525 {offsets = [0, 64], sizes = [2, 32], strides = [1, 1]} : vector<2x128xf32> to vector<2x32xf32>
    %539 = math.tanh %538 : vector<2x32xf32>
    %540 = vector.extract_strided_slice %525 {offsets = [0, 96], sizes = [2, 32], strides = [1, 1]} : vector<2x128xf32> to vector<2x32xf32>
    %541 = arith.negf %540 : vector<2x32xf32>
    %542 = math.exp %541 : vector<2x32xf32>
    %cst_125 = arith.constant 1.000000e+00 : f32
    %543 = vector.broadcast %cst_125 : f32 to vector<2x32xf32>
    %544 = arith.addf %543, %542 : vector<2x32xf32>
    %545 = arith.divf %543, %544 : vector<2x32xf32>
    %546 = arith.mulf %537, %522 : vector<2x32xf32>
    %547 = arith.mulf %531, %539 : vector<2x32xf32>
    %548 = arith.addf %546, %547 : vector<2x32xf32>
    %549 = math.tanh %548 : vector<2x32xf32>
    %550 = arith.mulf %545, %549 : vector<2x32xf32>
    %c0_126 = arith.constant 0 : index
    %c0_127 = arith.constant 0 : index
    %551 = vector.load %arg18[%c0_126, %c0_127] : memref<16x32xf32, #tpu.memory_space<vmem>>, vector<2x32xf32>
    tpu.vector_store %arg18[%c0_126, %c0_127], %550 {strides = array<i32>} : memref<16x32xf32, #tpu.memory_space<vmem>>, vector<2x32xf32>,
    %552 = vector.extract_strided_slice %519 {offsets = [2, 0], sizes = [2, 128], strides = [1, 1]} : vector<16x128xf32> to vector<2x128xf32>
    %cst_128 = arith.constant dense<0.000000e+00> : vector<2x128xf32>
    %553 = tpu.matmul %550, %520, %cst_128 {dimension_numbers = #tpu.dot_dimension_numbers<[1], [0], [0], [1], [0, 0, 1, 1], [], []>} : vector<2x32xf32>, vector<32x128xf32>, vector<2x128xf32> -> vector<2x128xf32>
    %554 = arith.addf %552, %553 : vector<2x128xf32>
    %555 = vector.extract_strided_slice %554 {offsets = [0, 0], sizes = [2, 32], strides = [1, 1]} : vector<2x128xf32> to vector<2x32xf32>
    %556 = arith.negf %555 : vector<2x32xf32>
    %557 = math.exp %556 : vector<2x32xf32>
    %cst_129 = arith.constant 1.000000e+00 : f32
    %558 = vector.broadcast %cst_129 : f32 to vector<2x32xf32>
    %559 = arith.addf %558, %557 : vector<2x32xf32>
    %560 = arith.divf %558, %559 : vector<2x32xf32>
    %561 = vector.extract_strided_slice %554 {offsets = [0, 32], sizes = [2, 32], strides = [1, 1]} : vector<2x128xf32> to vector<2x32xf32>
    %562 = arith.negf %561 : vector<2x32xf32>
    %563 = math.exp %562 : vector<2x32xf32>
    %cst_130 = arith.constant 1.000000e+00 : f32
    %564 = vector.broadcast %cst_130 : f32 to vector<2x32xf32>
    %565 = arith.addf %564, %563 : vector<2x32xf32>
    %566 = arith.divf %564, %565 : vector<2x32xf32>
    %567 = vector.extract_strided_slice %554 {offsets = [0, 64], sizes = [2, 32], strides = [1, 1]} : vector<2x128xf32> to vector<2x32xf32>
    %568 = math.tanh %567 : vector<2x32xf32>
    %569 = vector.extract_strided_slice %554 {offsets = [0, 96], sizes = [2, 32], strides = [1, 1]} : vector<2x128xf32> to vector<2x32xf32>
    %570 = arith.negf %569 : vector<2x32xf32>
    %571 = math.exp %570 : vector<2x32xf32>
    %cst_131 = arith.constant 1.000000e+00 : f32
    %572 = vector.broadcast %cst_131 : f32 to vector<2x32xf32>
    %573 = arith.addf %572, %571 : vector<2x32xf32>
    %574 = arith.divf %572, %573 : vector<2x32xf32>
    %575 = arith.mulf %566, %548 : vector<2x32xf32>
    %576 = arith.mulf %560, %568 : vector<2x32xf32>
    %577 = arith.addf %575, %576 : vector<2x32xf32>
    %578 = math.tanh %577 : vector<2x32xf32>
    %579 = arith.mulf %574, %578 : vector<2x32xf32>
    %c2_132 = arith.constant 2 : index
    %c0_133 = arith.constant 0 : index
    %580 = vector.load %arg18[%c2_132, %c0_133] : memref<16x32xf32, #tpu.memory_space<vmem>>, vector<2x32xf32>
    tpu.vector_store %arg18[%c2_132, %c0_133], %579 {strides = array<i32>} : memref<16x32xf32, #tpu.memory_space<vmem>>, vector<2x32xf32>,
    %581 = vector.extract_strided_slice %519 {offsets = [4, 0], sizes = [2, 128], strides = [1, 1]} : vector<16x128xf32> to vector<2x128xf32>
    %cst_134 = arith.constant dense<0.000000e+00> : vector<2x128xf32>
    %582 = tpu.matmul %579, %520, %cst_134 {dimension_numbers = #tpu.dot_dimension_numbers<[1], [0], [0], [1], [0, 0, 1, 1], [], []>} : vector<2x32xf32>, vector<32x128xf32>, vector<2x128xf32> -> vector<2x128xf32>
    %583 = arith.addf %581, %582 : vector<2x128xf32>
    %584 = vector.extract_strided_slice %583 {offsets = [0, 0], sizes = [2, 32], strides = [1, 1]} : vector<2x128xf32> to vector<2x32xf32>
    %585 = arith.negf %584 : vector<2x32xf32>
    %586 = math.exp %585 : vector<2x32xf32>
    %cst_135 = arith.constant 1.000000e+00 : f32
    %587 = vector.broadcast %cst_135 : f32 to vector<2x32xf32>
    %588 = arith.addf %587, %586 : vector<2x32xf32>
    %589 = arith.divf %587, %588 : vector<2x32xf32>
    %590 = vector.extract_strided_slice %583 {offsets = [0, 32], sizes = [2, 32], strides = [1, 1]} : vector<2x128xf32> to vector<2x32xf32>
    %591 = arith.negf %590 : vector<2x32xf32>
    %592 = math.exp %591 : vector<2x32xf32>
    %cst_136 = arith.constant 1.000000e+00 : f32
    %593 = vector.broadcast %cst_136 : f32 to vector<2x32xf32>
    %594 = arith.addf %593, %592 : vector<2x32xf32>
    %595 = arith.divf %593, %594 : vector<2x32xf32>
    %596 = vector.extract_strided_slice %583 {offsets = [0, 64], sizes = [2, 32], strides = [1, 1]} : vector<2x128xf32> to vector<2x32xf32>
    %597 = math.tanh %596 : vector<2x32xf32>
    %598 = vector.extract_strided_slice %583 {offsets = [0, 96], sizes = [2, 32], strides = [1, 1]} : vector<2x128xf32> to vector<2x32xf32>
    %599 = arith.negf %598 : vector<2x32xf32>
    %600 = math.exp %599 : vector<2x32xf32>
    %cst_137 = arith.constant 1.000000e+00 : f32
    %601 = vector.broadcast %cst_137 : f32 to vector<2x32xf32>
    %602 = arith.addf %601, %600 : vector<2x32xf32>
    %603 = arith.divf %601, %602 : vector<2x32xf32>
    %604 = arith.mulf %595, %577 : vector<2x32xf32>
    %605 = arith.mulf %589, %597 : vector<2x32xf32>
    %606 = arith.addf %604, %605 : vector<2x32xf32>
    %607 = math.tanh %606 : vector<2x32xf32>
    %608 = arith.mulf %603, %607 : vector<2x32xf32>
    %c4_138 = arith.constant 4 : index
    %c0_139 = arith.constant 0 : index
    %609 = vector.load %arg18[%c4_138, %c0_139] : memref<16x32xf32, #tpu.memory_space<vmem>>, vector<2x32xf32>
    tpu.vector_store %arg18[%c4_138, %c0_139], %608 {strides = array<i32>} : memref<16x32xf32, #tpu.memory_space<vmem>>, vector<2x32xf32>,
    %610 = vector.extract_strided_slice %519 {offsets = [6, 0], sizes = [2, 128], strides = [1, 1]} : vector<16x128xf32> to vector<2x128xf32>
    %cst_140 = arith.constant dense<0.000000e+00> : vector<2x128xf32>
    %611 = tpu.matmul %608, %520, %cst_140 {dimension_numbers = #tpu.dot_dimension_numbers<[1], [0], [0], [1], [0, 0, 1, 1], [], []>} : vector<2x32xf32>, vector<32x128xf32>, vector<2x128xf32> -> vector<2x128xf32>
    %612 = arith.addf %610, %611 : vector<2x128xf32>
    %613 = vector.extract_strided_slice %612 {offsets = [0, 0], sizes = [2, 32], strides = [1, 1]} : vector<2x128xf32> to vector<2x32xf32>
    %614 = arith.negf %613 : vector<2x32xf32>
    %615 = math.exp %614 : vector<2x32xf32>
    %cst_141 = arith.constant 1.000000e+00 : f32
    %616 = vector.broadcast %cst_141 : f32 to vector<2x32xf32>
    %617 = arith.addf %616, %615 : vector<2x32xf32>
    %618 = arith.divf %616, %617 : vector<2x32xf32>
    %619 = vector.extract_strided_slice %612 {offsets = [0, 32], sizes = [2, 32], strides = [1, 1]} : vector<2x128xf32> to vector<2x32xf32>
    %620 = arith.negf %619 : vector<2x32xf32>
    %621 = math.exp %620 : vector<2x32xf32>
    %cst_142 = arith.constant 1.000000e+00 : f32
    %622 = vector.broadcast %cst_142 : f32 to vector<2x32xf32>
    %623 = arith.addf %622, %621 : vector<2x32xf32>
    %624 = arith.divf %622, %623 : vector<2x32xf32>
    %625 = vector.extract_strided_slice %612 {offsets = [0, 64], sizes = [2, 32], strides = [1, 1]} : vector<2x128xf32> to vector<2x32xf32>
    %626 = math.tanh %625 : vector<2x32xf32>
    %627 = vector.extract_strided_slice %612 {offsets = [0, 96], sizes = [2, 32], strides = [1, 1]} : vector<2x128xf32> to vector<2x32xf32>
    %628 = arith.negf %627 : vector<2x32xf32>
    %629 = math.exp %628 : vector<2x32xf32>
    %cst_143 = arith.constant 1.000000e+00 : f32
    %630 = vector.broadcast %cst_143 : f32 to vector<2x32xf32>
    %631 = arith.addf %630, %629 : vector<2x32xf32>
    %632 = arith.divf %630, %631 : vector<2x32xf32>
    %633 = arith.mulf %624, %606 : vector<2x32xf32>
    %634 = arith.mulf %618, %626 : vector<2x32xf32>
    %635 = arith.addf %633, %634 : vector<2x32xf32>
    %636 = math.tanh %635 : vector<2x32xf32>
    %637 = arith.mulf %632, %636 : vector<2x32xf32>
    %c6_144 = arith.constant 6 : index
    %c0_145 = arith.constant 0 : index
    %638 = vector.load %arg18[%c6_144, %c0_145] : memref<16x32xf32, #tpu.memory_space<vmem>>, vector<2x32xf32>
    tpu.vector_store %arg18[%c6_144, %c0_145], %637 {strides = array<i32>} : memref<16x32xf32, #tpu.memory_space<vmem>>, vector<2x32xf32>,
    %639 = vector.extract_strided_slice %519 {offsets = [8, 0], sizes = [2, 128], strides = [1, 1]} : vector<16x128xf32> to vector<2x128xf32>
    %cst_146 = arith.constant dense<0.000000e+00> : vector<2x128xf32>
    %640 = tpu.matmul %637, %520, %cst_146 {dimension_numbers = #tpu.dot_dimension_numbers<[1], [0], [0], [1], [0, 0, 1, 1], [], []>} : vector<2x32xf32>, vector<32x128xf32>, vector<2x128xf32> -> vector<2x128xf32>
    %641 = arith.addf %639, %640 : vector<2x128xf32>
    %642 = vector.extract_strided_slice %641 {offsets = [0, 0], sizes = [2, 32], strides = [1, 1]} : vector<2x128xf32> to vector<2x32xf32>
    %643 = arith.negf %642 : vector<2x32xf32>
    %644 = math.exp %643 : vector<2x32xf32>
    %cst_147 = arith.constant 1.000000e+00 : f32
    %645 = vector.broadcast %cst_147 : f32 to vector<2x32xf32>
    %646 = arith.addf %645, %644 : vector<2x32xf32>
    %647 = arith.divf %645, %646 : vector<2x32xf32>
    %648 = vector.extract_strided_slice %641 {offsets = [0, 32], sizes = [2, 32], strides = [1, 1]} : vector<2x128xf32> to vector<2x32xf32>
    %649 = arith.negf %648 : vector<2x32xf32>
    %650 = math.exp %649 : vector<2x32xf32>
    %cst_148 = arith.constant 1.000000e+00 : f32
    %651 = vector.broadcast %cst_148 : f32 to vector<2x32xf32>
    %652 = arith.addf %651, %650 : vector<2x32xf32>
    %653 = arith.divf %651, %652 : vector<2x32xf32>
    %654 = vector.extract_strided_slice %641 {offsets = [0, 64], sizes = [2, 32], strides = [1, 1]} : vector<2x128xf32> to vector<2x32xf32>
    %655 = math.tanh %654 : vector<2x32xf32>
    %656 = vector.extract_strided_slice %641 {offsets = [0, 96], sizes = [2, 32], strides = [1, 1]} : vector<2x128xf32> to vector<2x32xf32>
    %657 = arith.negf %656 : vector<2x32xf32>
    %658 = math.exp %657 : vector<2x32xf32>
    %cst_149 = arith.constant 1.000000e+00 : f32
    %659 = vector.broadcast %cst_149 : f32 to vector<2x32xf32>
    %660 = arith.addf %659, %658 : vector<2x32xf32>
    %661 = arith.divf %659, %660 : vector<2x32xf32>
    %662 = arith.mulf %653, %635 : vector<2x32xf32>
    %663 = arith.mulf %647, %655 : vector<2x32xf32>
    %664 = arith.addf %662, %663 : vector<2x32xf32>
    %665 = math.tanh %664 : vector<2x32xf32>
    %666 = arith.mulf %661, %665 : vector<2x32xf32>
    %c8_150 = arith.constant 8 : index
    %c0_151 = arith.constant 0 : index
    %667 = vector.load %arg18[%c8_150, %c0_151] : memref<16x32xf32, #tpu.memory_space<vmem>>, vector<2x32xf32>
    tpu.vector_store %arg18[%c8_150, %c0_151], %666 {strides = array<i32>} : memref<16x32xf32, #tpu.memory_space<vmem>>, vector<2x32xf32>,
    %668 = vector.extract_strided_slice %519 {offsets = [10, 0], sizes = [2, 128], strides = [1, 1]} : vector<16x128xf32> to vector<2x128xf32>
    %cst_152 = arith.constant dense<0.000000e+00> : vector<2x128xf32>
    %669 = tpu.matmul %666, %520, %cst_152 {dimension_numbers = #tpu.dot_dimension_numbers<[1], [0], [0], [1], [0, 0, 1, 1], [], []>} : vector<2x32xf32>, vector<32x128xf32>, vector<2x128xf32> -> vector<2x128xf32>
    %670 = arith.addf %668, %669 : vector<2x128xf32>
    %671 = vector.extract_strided_slice %670 {offsets = [0, 0], sizes = [2, 32], strides = [1, 1]} : vector<2x128xf32> to vector<2x32xf32>
    %672 = arith.negf %671 : vector<2x32xf32>
    %673 = math.exp %672 : vector<2x32xf32>
    %cst_153 = arith.constant 1.000000e+00 : f32
    %674 = vector.broadcast %cst_153 : f32 to vector<2x32xf32>
    %675 = arith.addf %674, %673 : vector<2x32xf32>
    %676 = arith.divf %674, %675 : vector<2x32xf32>
    %677 = vector.extract_strided_slice %670 {offsets = [0, 32], sizes = [2, 32], strides = [1, 1]} : vector<2x128xf32> to vector<2x32xf32>
    %678 = arith.negf %677 : vector<2x32xf32>
    %679 = math.exp %678 : vector<2x32xf32>
    %cst_154 = arith.constant 1.000000e+00 : f32
    %680 = vector.broadcast %cst_154 : f32 to vector<2x32xf32>
    %681 = arith.addf %680, %679 : vector<2x32xf32>
    %682 = arith.divf %680, %681 : vector<2x32xf32>
    %683 = vector.extract_strided_slice %670 {offsets = [0, 64], sizes = [2, 32], strides = [1, 1]} : vector<2x128xf32> to vector<2x32xf32>
    %684 = math.tanh %683 : vector<2x32xf32>
    %685 = vector.extract_strided_slice %670 {offsets = [0, 96], sizes = [2, 32], strides = [1, 1]} : vector<2x128xf32> to vector<2x32xf32>
    %686 = arith.negf %685 : vector<2x32xf32>
    %687 = math.exp %686 : vector<2x32xf32>
    %cst_155 = arith.constant 1.000000e+00 : f32
    %688 = vector.broadcast %cst_155 : f32 to vector<2x32xf32>
    %689 = arith.addf %688, %687 : vector<2x32xf32>
    %690 = arith.divf %688, %689 : vector<2x32xf32>
    %691 = arith.mulf %682, %664 : vector<2x32xf32>
    %692 = arith.mulf %676, %684 : vector<2x32xf32>
    %693 = arith.addf %691, %692 : vector<2x32xf32>
    %694 = math.tanh %693 : vector<2x32xf32>
    %695 = arith.mulf %690, %694 : vector<2x32xf32>
    %c10_156 = arith.constant 10 : index
    %c0_157 = arith.constant 0 : index
    %696 = vector.load %arg18[%c10_156, %c0_157] : memref<16x32xf32, #tpu.memory_space<vmem>>, vector<2x32xf32>
    tpu.vector_store %arg18[%c10_156, %c0_157], %695 {strides = array<i32>} : memref<16x32xf32, #tpu.memory_space<vmem>>, vector<2x32xf32>,
    %697 = vector.extract_strided_slice %519 {offsets = [12, 0], sizes = [2, 128], strides = [1, 1]} : vector<16x128xf32> to vector<2x128xf32>
    %cst_158 = arith.constant dense<0.000000e+00> : vector<2x128xf32>
    %698 = tpu.matmul %695, %520, %cst_158 {dimension_numbers = #tpu.dot_dimension_numbers<[1], [0], [0], [1], [0, 0, 1, 1], [], []>} : vector<2x32xf32>, vector<32x128xf32>, vector<2x128xf32> -> vector<2x128xf32>
    %699 = arith.addf %697, %698 : vector<2x128xf32>
    %700 = vector.extract_strided_slice %699 {offsets = [0, 0], sizes = [2, 32], strides = [1, 1]} : vector<2x128xf32> to vector<2x32xf32>
    %701 = arith.negf %700 : vector<2x32xf32>
    %702 = math.exp %701 : vector<2x32xf32>
    %cst_159 = arith.constant 1.000000e+00 : f32
    %703 = vector.broadcast %cst_159 : f32 to vector<2x32xf32>
    %704 = arith.addf %703, %702 : vector<2x32xf32>
    %705 = arith.divf %703, %704 : vector<2x32xf32>
    %706 = vector.extract_strided_slice %699 {offsets = [0, 32], sizes = [2, 32], strides = [1, 1]} : vector<2x128xf32> to vector<2x32xf32>
    %707 = arith.negf %706 : vector<2x32xf32>
    %708 = math.exp %707 : vector<2x32xf32>
    %cst_160 = arith.constant 1.000000e+00 : f32
    %709 = vector.broadcast %cst_160 : f32 to vector<2x32xf32>
    %710 = arith.addf %709, %708 : vector<2x32xf32>
    %711 = arith.divf %709, %710 : vector<2x32xf32>
    %712 = vector.extract_strided_slice %699 {offsets = [0, 64], sizes = [2, 32], strides = [1, 1]} : vector<2x128xf32> to vector<2x32xf32>
    %713 = math.tanh %712 : vector<2x32xf32>
    %714 = vector.extract_strided_slice %699 {offsets = [0, 96], sizes = [2, 32], strides = [1, 1]} : vector<2x128xf32> to vector<2x32xf32>
    %715 = arith.negf %714 : vector<2x32xf32>
    %716 = math.exp %715 : vector<2x32xf32>
    %cst_161 = arith.constant 1.000000e+00 : f32
    %717 = vector.broadcast %cst_161 : f32 to vector<2x32xf32>
    %718 = arith.addf %717, %716 : vector<2x32xf32>
    %719 = arith.divf %717, %718 : vector<2x32xf32>
    %720 = arith.mulf %711, %693 : vector<2x32xf32>
    %721 = arith.mulf %705, %713 : vector<2x32xf32>
    %722 = arith.addf %720, %721 : vector<2x32xf32>
    %723 = math.tanh %722 : vector<2x32xf32>
    %724 = arith.mulf %719, %723 : vector<2x32xf32>
    %c12_162 = arith.constant 12 : index
    %c0_163 = arith.constant 0 : index
    %725 = vector.load %arg18[%c12_162, %c0_163] : memref<16x32xf32, #tpu.memory_space<vmem>>, vector<2x32xf32>
    tpu.vector_store %arg18[%c12_162, %c0_163], %724 {strides = array<i32>} : memref<16x32xf32, #tpu.memory_space<vmem>>, vector<2x32xf32>,
    %726 = vector.extract_strided_slice %519 {offsets = [14, 0], sizes = [2, 128], strides = [1, 1]} : vector<16x128xf32> to vector<2x128xf32>
    %cst_164 = arith.constant dense<0.000000e+00> : vector<2x128xf32>
    %727 = tpu.matmul %724, %520, %cst_164 {dimension_numbers = #tpu.dot_dimension_numbers<[1], [0], [0], [1], [0, 0, 1, 1], [], []>} : vector<2x32xf32>, vector<32x128xf32>, vector<2x128xf32> -> vector<2x128xf32>
    %728 = arith.addf %726, %727 : vector<2x128xf32>
    %729 = vector.extract_strided_slice %728 {offsets = [0, 0], sizes = [2, 32], strides = [1, 1]} : vector<2x128xf32> to vector<2x32xf32>
    %730 = arith.negf %729 : vector<2x32xf32>
    %731 = math.exp %730 : vector<2x32xf32>
    %cst_165 = arith.constant 1.000000e+00 : f32
    %732 = vector.broadcast %cst_165 : f32 to vector<2x32xf32>
    %733 = arith.addf %732, %731 : vector<2x32xf32>
    %734 = arith.divf %732, %733 : vector<2x32xf32>
    %735 = vector.extract_strided_slice %728 {offsets = [0, 32], sizes = [2, 32], strides = [1, 1]} : vector<2x128xf32> to vector<2x32xf32>
    %736 = arith.negf %735 : vector<2x32xf32>
    %737 = math.exp %736 : vector<2x32xf32>
    %cst_166 = arith.constant 1.000000e+00 : f32
    %738 = vector.broadcast %cst_166 : f32 to vector<2x32xf32>
    %739 = arith.addf %738, %737 : vector<2x32xf32>
    %740 = arith.divf %738, %739 : vector<2x32xf32>
    %741 = vector.extract_strided_slice %728 {offsets = [0, 64], sizes = [2, 32], strides = [1, 1]} : vector<2x128xf32> to vector<2x32xf32>
    %742 = math.tanh %741 : vector<2x32xf32>
    %743 = vector.extract_strided_slice %728 {offsets = [0, 96], sizes = [2, 32], strides = [1, 1]} : vector<2x128xf32> to vector<2x32xf32>
    %744 = arith.negf %743 : vector<2x32xf32>
    %745 = math.exp %744 : vector<2x32xf32>
    %cst_167 = arith.constant 1.000000e+00 : f32
    %746 = vector.broadcast %cst_167 : f32 to vector<2x32xf32>
    %747 = arith.addf %746, %745 : vector<2x32xf32>
    %748 = arith.divf %746, %747 : vector<2x32xf32>
    %749 = arith.mulf %740, %722 : vector<2x32xf32>
    %750 = arith.mulf %734, %742 : vector<2x32xf32>
    %751 = arith.addf %749, %750 : vector<2x32xf32>
    %752 = math.tanh %751 : vector<2x32xf32>
    %753 = arith.mulf %748, %752 : vector<2x32xf32>
    %c14_168 = arith.constant 14 : index
    %c0_169 = arith.constant 0 : index
    %754 = vector.load %arg18[%c14_168, %c0_169] : memref<16x32xf32, #tpu.memory_space<vmem>>, vector<2x32xf32>
    tpu.vector_store %arg18[%c14_168, %c0_169], %753 {strides = array<i32>} : memref<16x32xf32, #tpu.memory_space<vmem>>, vector<2x32xf32>,
    %c0_170 = arith.constant 0 : index
    %c0_171 = arith.constant 0 : index
    %755 = vector.load %arg18[%c0_170, %c0_171] : memref<16x32xf32, #tpu.memory_space<vmem>>, vector<16x32xf32>
    %c0_172 = arith.constant 0 : index
    %c0_173 = arith.constant 0 : index
    %756 = vector.load %arg12[%c0_172, %c0_173] : memref<32x128xf32, #tpu.memory_space<vmem>>, vector<32x128xf32>
    %cst_174 = arith.constant dense<0.000000e+00> : vector<16x128xf32>
    %757 = tpu.matmul %755, %756, %cst_174 {dimension_numbers = #tpu.dot_dimension_numbers<[1], [0], [0], [1], [0, 0, 1, 1], [], []>} : vector<16x32xf32>, vector<32x128xf32>, vector<16x128xf32> -> vector<16x128xf32>
    %c0_175 = arith.constant 0 : index
    %c0_176 = arith.constant 0 : index
    %758 = vector.load %arg14[%c0_175, %c0_176] : memref<1x128xf32, #tpu.memory_space<vmem>>, vector<1x128xf32>
    %759 = vector.broadcast %758 : vector<1x128xf32> to vector<16x128xf32>
    %760 = arith.addf %757, %759 : vector<16x128xf32>
    %c0_177 = arith.constant 0 : index
    %c0_178 = arith.constant 0 : index
    %761 = vector.load %arg13[%c0_177, %c0_178] : memref<32x128xf32, #tpu.memory_space<vmem>>, vector<32x128xf32>
    %cst_179 = arith.constant 0.000000e+00 : f32
    %762 = vector.broadcast %cst_179 : f32 to vector<2x32xf32>
    %cst_180 = arith.constant 0.000000e+00 : f32
    %763 = vector.broadcast %cst_180 : f32 to vector<2x32xf32>
    %764 = vector.extract_strided_slice %760 {offsets = [0, 0], sizes = [2, 128], strides = [1, 1]} : vector<16x128xf32> to vector<2x128xf32>
    %cst_181 = arith.constant dense<0.000000e+00> : vector<2x128xf32>
    %765 = tpu.matmul %762, %761, %cst_181 {dimension_numbers = #tpu.dot_dimension_numbers<[1], [0], [0], [1], [0, 0, 1, 1], [], []>} : vector<2x32xf32>, vector<32x128xf32>, vector<2x128xf32> -> vector<2x128xf32>
    %766 = arith.addf %764, %765 : vector<2x128xf32>
    %767 = vector.extract_strided_slice %766 {offsets = [0, 0], sizes = [2, 32], strides = [1, 1]} : vector<2x128xf32> to vector<2x32xf32>
    %768 = arith.negf %767 : vector<2x32xf32>
    %769 = math.exp %768 : vector<2x32xf32>
    %cst_182 = arith.constant 1.000000e+00 : f32
    %770 = vector.broadcast %cst_182 : f32 to vector<2x32xf32>
    %771 = arith.addf %770, %769 : vector<2x32xf32>
    %772 = arith.divf %770, %771 : vector<2x32xf32>
    %773 = vector.extract_strided_slice %766 {offsets = [0, 32], sizes = [2, 32], strides = [1, 1]} : vector<2x128xf32> to vector<2x32xf32>
    %774 = arith.negf %773 : vector<2x32xf32>
    %775 = math.exp %774 : vector<2x32xf32>
    %cst_183 = arith.constant 1.000000e+00 : f32
    %776 = vector.broadcast %cst_183 : f32 to vector<2x32xf32>
    %777 = arith.addf %776, %775 : vector<2x32xf32>
    %778 = arith.divf %776, %777 : vector<2x32xf32>
    %779 = vector.extract_strided_slice %766 {offsets = [0, 64], sizes = [2, 32], strides = [1, 1]} : vector<2x128xf32> to vector<2x32xf32>
    %780 = math.tanh %779 : vector<2x32xf32>
    %781 = vector.extract_strided_slice %766 {offsets = [0, 96], sizes = [2, 32], strides = [1, 1]} : vector<2x128xf32> to vector<2x32xf32>
    %782 = arith.negf %781 : vector<2x32xf32>
    %783 = math.exp %782 : vector<2x32xf32>
    %cst_184 = arith.constant 1.000000e+00 : f32
    %784 = vector.broadcast %cst_184 : f32 to vector<2x32xf32>
    %785 = arith.addf %784, %783 : vector<2x32xf32>
    %786 = arith.divf %784, %785 : vector<2x32xf32>
    %787 = arith.mulf %778, %763 : vector<2x32xf32>
    %788 = arith.mulf %772, %780 : vector<2x32xf32>
    %789 = arith.addf %787, %788 : vector<2x32xf32>
    %790 = math.tanh %789 : vector<2x32xf32>
    %791 = arith.mulf %786, %790 : vector<2x32xf32>
    %c0_185 = arith.constant 0 : index
    %c0_186 = arith.constant 0 : index
    %792 = vector.load %arg18[%c0_185, %c0_186] : memref<16x32xf32, #tpu.memory_space<vmem>>, vector<2x32xf32>
    tpu.vector_store %arg18[%c0_185, %c0_186], %791 {strides = array<i32>} : memref<16x32xf32, #tpu.memory_space<vmem>>, vector<2x32xf32>,
    %793 = vector.extract_strided_slice %760 {offsets = [2, 0], sizes = [2, 128], strides = [1, 1]} : vector<16x128xf32> to vector<2x128xf32>
    %cst_187 = arith.constant dense<0.000000e+00> : vector<2x128xf32>
    %794 = tpu.matmul %791, %761, %cst_187 {dimension_numbers = #tpu.dot_dimension_numbers<[1], [0], [0], [1], [0, 0, 1, 1], [], []>} : vector<2x32xf32>, vector<32x128xf32>, vector<2x128xf32> -> vector<2x128xf32>
    %795 = arith.addf %793, %794 : vector<2x128xf32>
    %796 = vector.extract_strided_slice %795 {offsets = [0, 0], sizes = [2, 32], strides = [1, 1]} : vector<2x128xf32> to vector<2x32xf32>
    %797 = arith.negf %796 : vector<2x32xf32>
    %798 = math.exp %797 : vector<2x32xf32>
    %cst_188 = arith.constant 1.000000e+00 : f32
    %799 = vector.broadcast %cst_188 : f32 to vector<2x32xf32>
    %800 = arith.addf %799, %798 : vector<2x32xf32>
    %801 = arith.divf %799, %800 : vector<2x32xf32>
    %802 = vector.extract_strided_slice %795 {offsets = [0, 32], sizes = [2, 32], strides = [1, 1]} : vector<2x128xf32> to vector<2x32xf32>
    %803 = arith.negf %802 : vector<2x32xf32>
    %804 = math.exp %803 : vector<2x32xf32>
    %cst_189 = arith.constant 1.000000e+00 : f32
    %805 = vector.broadcast %cst_189 : f32 to vector<2x32xf32>
    %806 = arith.addf %805, %804 : vector<2x32xf32>
    %807 = arith.divf %805, %806 : vector<2x32xf32>
    %808 = vector.extract_strided_slice %795 {offsets = [0, 64], sizes = [2, 32], strides = [1, 1]} : vector<2x128xf32> to vector<2x32xf32>
    %809 = math.tanh %808 : vector<2x32xf32>
    %810 = vector.extract_strided_slice %795 {offsets = [0, 96], sizes = [2, 32], strides = [1, 1]} : vector<2x128xf32> to vector<2x32xf32>
    %811 = arith.negf %810 : vector<2x32xf32>
    %812 = math.exp %811 : vector<2x32xf32>
    %cst_190 = arith.constant 1.000000e+00 : f32
    %813 = vector.broadcast %cst_190 : f32 to vector<2x32xf32>
    %814 = arith.addf %813, %812 : vector<2x32xf32>
    %815 = arith.divf %813, %814 : vector<2x32xf32>
    %816 = arith.mulf %807, %789 : vector<2x32xf32>
    %817 = arith.mulf %801, %809 : vector<2x32xf32>
    %818 = arith.addf %816, %817 : vector<2x32xf32>
    %819 = math.tanh %818 : vector<2x32xf32>
    %820 = arith.mulf %815, %819 : vector<2x32xf32>
    %c2_191 = arith.constant 2 : index
    %c0_192 = arith.constant 0 : index
    %821 = vector.load %arg18[%c2_191, %c0_192] : memref<16x32xf32, #tpu.memory_space<vmem>>, vector<2x32xf32>
    tpu.vector_store %arg18[%c2_191, %c0_192], %820 {strides = array<i32>} : memref<16x32xf32, #tpu.memory_space<vmem>>, vector<2x32xf32>,
    %822 = vector.extract_strided_slice %760 {offsets = [4, 0], sizes = [2, 128], strides = [1, 1]} : vector<16x128xf32> to vector<2x128xf32>
    %cst_193 = arith.constant dense<0.000000e+00> : vector<2x128xf32>
    %823 = tpu.matmul %820, %761, %cst_193 {dimension_numbers = #tpu.dot_dimension_numbers<[1], [0], [0], [1], [0, 0, 1, 1], [], []>} : vector<2x32xf32>, vector<32x128xf32>, vector<2x128xf32> -> vector<2x128xf32>
    %824 = arith.addf %822, %823 : vector<2x128xf32>
    %825 = vector.extract_strided_slice %824 {offsets = [0, 0], sizes = [2, 32], strides = [1, 1]} : vector<2x128xf32> to vector<2x32xf32>
    %826 = arith.negf %825 : vector<2x32xf32>
    %827 = math.exp %826 : vector<2x32xf32>
    %cst_194 = arith.constant 1.000000e+00 : f32
    %828 = vector.broadcast %cst_194 : f32 to vector<2x32xf32>
    %829 = arith.addf %828, %827 : vector<2x32xf32>
    %830 = arith.divf %828, %829 : vector<2x32xf32>
    %831 = vector.extract_strided_slice %824 {offsets = [0, 32], sizes = [2, 32], strides = [1, 1]} : vector<2x128xf32> to vector<2x32xf32>
    %832 = arith.negf %831 : vector<2x32xf32>
    %833 = math.exp %832 : vector<2x32xf32>
    %cst_195 = arith.constant 1.000000e+00 : f32
    %834 = vector.broadcast %cst_195 : f32 to vector<2x32xf32>
    %835 = arith.addf %834, %833 : vector<2x32xf32>
    %836 = arith.divf %834, %835 : vector<2x32xf32>
    %837 = vector.extract_strided_slice %824 {offsets = [0, 64], sizes = [2, 32], strides = [1, 1]} : vector<2x128xf32> to vector<2x32xf32>
    %838 = math.tanh %837 : vector<2x32xf32>
    %839 = vector.extract_strided_slice %824 {offsets = [0, 96], sizes = [2, 32], strides = [1, 1]} : vector<2x128xf32> to vector<2x32xf32>
    %840 = arith.negf %839 : vector<2x32xf32>
    %841 = math.exp %840 : vector<2x32xf32>
    %cst_196 = arith.constant 1.000000e+00 : f32
    %842 = vector.broadcast %cst_196 : f32 to vector<2x32xf32>
    %843 = arith.addf %842, %841 : vector<2x32xf32>
    %844 = arith.divf %842, %843 : vector<2x32xf32>
    %845 = arith.mulf %836, %818 : vector<2x32xf32>
    %846 = arith.mulf %830, %838 : vector<2x32xf32>
    %847 = arith.addf %845, %846 : vector<2x32xf32>
    %848 = math.tanh %847 : vector<2x32xf32>
    %849 = arith.mulf %844, %848 : vector<2x32xf32>
    %c4_197 = arith.constant 4 : index
    %c0_198 = arith.constant 0 : index
    %850 = vector.load %arg18[%c4_197, %c0_198] : memref<16x32xf32, #tpu.memory_space<vmem>>, vector<2x32xf32>
    tpu.vector_store %arg18[%c4_197, %c0_198], %849 {strides = array<i32>} : memref<16x32xf32, #tpu.memory_space<vmem>>, vector<2x32xf32>,
    %851 = vector.extract_strided_slice %760 {offsets = [6, 0], sizes = [2, 128], strides = [1, 1]} : vector<16x128xf32> to vector<2x128xf32>
    %cst_199 = arith.constant dense<0.000000e+00> : vector<2x128xf32>
    %852 = tpu.matmul %849, %761, %cst_199 {dimension_numbers = #tpu.dot_dimension_numbers<[1], [0], [0], [1], [0, 0, 1, 1], [], []>} : vector<2x32xf32>, vector<32x128xf32>, vector<2x128xf32> -> vector<2x128xf32>
    %853 = arith.addf %851, %852 : vector<2x128xf32>
    %854 = vector.extract_strided_slice %853 {offsets = [0, 0], sizes = [2, 32], strides = [1, 1]} : vector<2x128xf32> to vector<2x32xf32>
    %855 = arith.negf %854 : vector<2x32xf32>
    %856 = math.exp %855 : vector<2x32xf32>
    %cst_200 = arith.constant 1.000000e+00 : f32
    %857 = vector.broadcast %cst_200 : f32 to vector<2x32xf32>
    %858 = arith.addf %857, %856 : vector<2x32xf32>
    %859 = arith.divf %857, %858 : vector<2x32xf32>
    %860 = vector.extract_strided_slice %853 {offsets = [0, 32], sizes = [2, 32], strides = [1, 1]} : vector<2x128xf32> to vector<2x32xf32>
    %861 = arith.negf %860 : vector<2x32xf32>
    %862 = math.exp %861 : vector<2x32xf32>
    %cst_201 = arith.constant 1.000000e+00 : f32
    %863 = vector.broadcast %cst_201 : f32 to vector<2x32xf32>
    %864 = arith.addf %863, %862 : vector<2x32xf32>
    %865 = arith.divf %863, %864 : vector<2x32xf32>
    %866 = vector.extract_strided_slice %853 {offsets = [0, 64], sizes = [2, 32], strides = [1, 1]} : vector<2x128xf32> to vector<2x32xf32>
    %867 = math.tanh %866 : vector<2x32xf32>
    %868 = vector.extract_strided_slice %853 {offsets = [0, 96], sizes = [2, 32], strides = [1, 1]} : vector<2x128xf32> to vector<2x32xf32>
    %869 = arith.negf %868 : vector<2x32xf32>
    %870 = math.exp %869 : vector<2x32xf32>
    %cst_202 = arith.constant 1.000000e+00 : f32
    %871 = vector.broadcast %cst_202 : f32 to vector<2x32xf32>
    %872 = arith.addf %871, %870 : vector<2x32xf32>
    %873 = arith.divf %871, %872 : vector<2x32xf32>
    %874 = arith.mulf %865, %847 : vector<2x32xf32>
    %875 = arith.mulf %859, %867 : vector<2x32xf32>
    %876 = arith.addf %874, %875 : vector<2x32xf32>
    %877 = math.tanh %876 : vector<2x32xf32>
    %878 = arith.mulf %873, %877 : vector<2x32xf32>
    %c6_203 = arith.constant 6 : index
    %c0_204 = arith.constant 0 : index
    %879 = vector.load %arg18[%c6_203, %c0_204] : memref<16x32xf32, #tpu.memory_space<vmem>>, vector<2x32xf32>
    tpu.vector_store %arg18[%c6_203, %c0_204], %878 {strides = array<i32>} : memref<16x32xf32, #tpu.memory_space<vmem>>, vector<2x32xf32>,
    %880 = vector.extract_strided_slice %760 {offsets = [8, 0], sizes = [2, 128], strides = [1, 1]} : vector<16x128xf32> to vector<2x128xf32>
    %cst_205 = arith.constant dense<0.000000e+00> : vector<2x128xf32>
    %881 = tpu.matmul %878, %761, %cst_205 {dimension_numbers = #tpu.dot_dimension_numbers<[1], [0], [0], [1], [0, 0, 1, 1], [], []>} : vector<2x32xf32>, vector<32x128xf32>, vector<2x128xf32> -> vector<2x128xf32>
    %882 = arith.addf %880, %881 : vector<2x128xf32>
    %883 = vector.extract_strided_slice %882 {offsets = [0, 0], sizes = [2, 32], strides = [1, 1]} : vector<2x128xf32> to vector<2x32xf32>
    %884 = arith.negf %883 : vector<2x32xf32>
    %885 = math.exp %884 : vector<2x32xf32>
    %cst_206 = arith.constant 1.000000e+00 : f32
    %886 = vector.broadcast %cst_206 : f32 to vector<2x32xf32>
    %887 = arith.addf %886, %885 : vector<2x32xf32>
    %888 = arith.divf %886, %887 : vector<2x32xf32>
    %889 = vector.extract_strided_slice %882 {offsets = [0, 32], sizes = [2, 32], strides = [1, 1]} : vector<2x128xf32> to vector<2x32xf32>
    %890 = arith.negf %889 : vector<2x32xf32>
    %891 = math.exp %890 : vector<2x32xf32>
    %cst_207 = arith.constant 1.000000e+00 : f32
    %892 = vector.broadcast %cst_207 : f32 to vector<2x32xf32>
    %893 = arith.addf %892, %891 : vector<2x32xf32>
    %894 = arith.divf %892, %893 : vector<2x32xf32>
    %895 = vector.extract_strided_slice %882 {offsets = [0, 64], sizes = [2, 32], strides = [1, 1]} : vector<2x128xf32> to vector<2x32xf32>
    %896 = math.tanh %895 : vector<2x32xf32>
    %897 = vector.extract_strided_slice %882 {offsets = [0, 96], sizes = [2, 32], strides = [1, 1]} : vector<2x128xf32> to vector<2x32xf32>
    %898 = arith.negf %897 : vector<2x32xf32>
    %899 = math.exp %898 : vector<2x32xf32>
    %cst_208 = arith.constant 1.000000e+00 : f32
    %900 = vector.broadcast %cst_208 : f32 to vector<2x32xf32>
    %901 = arith.addf %900, %899 : vector<2x32xf32>
    %902 = arith.divf %900, %901 : vector<2x32xf32>
    %903 = arith.mulf %894, %876 : vector<2x32xf32>
    %904 = arith.mulf %888, %896 : vector<2x32xf32>
    %905 = arith.addf %903, %904 : vector<2x32xf32>
    %906 = math.tanh %905 : vector<2x32xf32>
    %907 = arith.mulf %902, %906 : vector<2x32xf32>
    %c8_209 = arith.constant 8 : index
    %c0_210 = arith.constant 0 : index
    %908 = vector.load %arg18[%c8_209, %c0_210] : memref<16x32xf32, #tpu.memory_space<vmem>>, vector<2x32xf32>
    tpu.vector_store %arg18[%c8_209, %c0_210], %907 {strides = array<i32>} : memref<16x32xf32, #tpu.memory_space<vmem>>, vector<2x32xf32>,
    %909 = vector.extract_strided_slice %760 {offsets = [10, 0], sizes = [2, 128], strides = [1, 1]} : vector<16x128xf32> to vector<2x128xf32>
    %cst_211 = arith.constant dense<0.000000e+00> : vector<2x128xf32>
    %910 = tpu.matmul %907, %761, %cst_211 {dimension_numbers = #tpu.dot_dimension_numbers<[1], [0], [0], [1], [0, 0, 1, 1], [], []>} : vector<2x32xf32>, vector<32x128xf32>, vector<2x128xf32> -> vector<2x128xf32>
    %911 = arith.addf %909, %910 : vector<2x128xf32>
    %912 = vector.extract_strided_slice %911 {offsets = [0, 0], sizes = [2, 32], strides = [1, 1]} : vector<2x128xf32> to vector<2x32xf32>
    %913 = arith.negf %912 : vector<2x32xf32>
    %914 = math.exp %913 : vector<2x32xf32>
    %cst_212 = arith.constant 1.000000e+00 : f32
    %915 = vector.broadcast %cst_212 : f32 to vector<2x32xf32>
    %916 = arith.addf %915, %914 : vector<2x32xf32>
    %917 = arith.divf %915, %916 : vector<2x32xf32>
    %918 = vector.extract_strided_slice %911 {offsets = [0, 32], sizes = [2, 32], strides = [1, 1]} : vector<2x128xf32> to vector<2x32xf32>
    %919 = arith.negf %918 : vector<2x32xf32>
    %920 = math.exp %919 : vector<2x32xf32>
    %cst_213 = arith.constant 1.000000e+00 : f32
    %921 = vector.broadcast %cst_213 : f32 to vector<2x32xf32>
    %922 = arith.addf %921, %920 : vector<2x32xf32>
    %923 = arith.divf %921, %922 : vector<2x32xf32>
    %924 = vector.extract_strided_slice %911 {offsets = [0, 64], sizes = [2, 32], strides = [1, 1]} : vector<2x128xf32> to vector<2x32xf32>
    %925 = math.tanh %924 : vector<2x32xf32>
    %926 = vector.extract_strided_slice %911 {offsets = [0, 96], sizes = [2, 32], strides = [1, 1]} : vector<2x128xf32> to vector<2x32xf32>
    %927 = arith.negf %926 : vector<2x32xf32>
    %928 = math.exp %927 : vector<2x32xf32>
    %cst_214 = arith.constant 1.000000e+00 : f32
    %929 = vector.broadcast %cst_214 : f32 to vector<2x32xf32>
    %930 = arith.addf %929, %928 : vector<2x32xf32>
    %931 = arith.divf %929, %930 : vector<2x32xf32>
    %932 = arith.mulf %923, %905 : vector<2x32xf32>
    %933 = arith.mulf %917, %925 : vector<2x32xf32>
    %934 = arith.addf %932, %933 : vector<2x32xf32>
    %935 = math.tanh %934 : vector<2x32xf32>
    %936 = arith.mulf %931, %935 : vector<2x32xf32>
    %c10_215 = arith.constant 10 : index
    %c0_216 = arith.constant 0 : index
    %937 = vector.load %arg18[%c10_215, %c0_216] : memref<16x32xf32, #tpu.memory_space<vmem>>, vector<2x32xf32>
    tpu.vector_store %arg18[%c10_215, %c0_216], %936 {strides = array<i32>} : memref<16x32xf32, #tpu.memory_space<vmem>>, vector<2x32xf32>,
    %938 = vector.extract_strided_slice %760 {offsets = [12, 0], sizes = [2, 128], strides = [1, 1]} : vector<16x128xf32> to vector<2x128xf32>
    %cst_217 = arith.constant dense<0.000000e+00> : vector<2x128xf32>
    %939 = tpu.matmul %936, %761, %cst_217 {dimension_numbers = #tpu.dot_dimension_numbers<[1], [0], [0], [1], [0, 0, 1, 1], [], []>} : vector<2x32xf32>, vector<32x128xf32>, vector<2x128xf32> -> vector<2x128xf32>
    %940 = arith.addf %938, %939 : vector<2x128xf32>
    %941 = vector.extract_strided_slice %940 {offsets = [0, 0], sizes = [2, 32], strides = [1, 1]} : vector<2x128xf32> to vector<2x32xf32>
    %942 = arith.negf %941 : vector<2x32xf32>
    %943 = math.exp %942 : vector<2x32xf32>
    %cst_218 = arith.constant 1.000000e+00 : f32
    %944 = vector.broadcast %cst_218 : f32 to vector<2x32xf32>
    %945 = arith.addf %944, %943 : vector<2x32xf32>
    %946 = arith.divf %944, %945 : vector<2x32xf32>
    %947 = vector.extract_strided_slice %940 {offsets = [0, 32], sizes = [2, 32], strides = [1, 1]} : vector<2x128xf32> to vector<2x32xf32>
    %948 = arith.negf %947 : vector<2x32xf32>
    %949 = math.exp %948 : vector<2x32xf32>
    %cst_219 = arith.constant 1.000000e+00 : f32
    %950 = vector.broadcast %cst_219 : f32 to vector<2x32xf32>
    %951 = arith.addf %950, %949 : vector<2x32xf32>
    %952 = arith.divf %950, %951 : vector<2x32xf32>
    %953 = vector.extract_strided_slice %940 {offsets = [0, 64], sizes = [2, 32], strides = [1, 1]} : vector<2x128xf32> to vector<2x32xf32>
    %954 = math.tanh %953 : vector<2x32xf32>
    %955 = vector.extract_strided_slice %940 {offsets = [0, 96], sizes = [2, 32], strides = [1, 1]} : vector<2x128xf32> to vector<2x32xf32>
    %956 = arith.negf %955 : vector<2x32xf32>
    %957 = math.exp %956 : vector<2x32xf32>
    %cst_220 = arith.constant 1.000000e+00 : f32
    %958 = vector.broadcast %cst_220 : f32 to vector<2x32xf32>
    %959 = arith.addf %958, %957 : vector<2x32xf32>
    %960 = arith.divf %958, %959 : vector<2x32xf32>
    %961 = arith.mulf %952, %934 : vector<2x32xf32>
    %962 = arith.mulf %946, %954 : vector<2x32xf32>
    %963 = arith.addf %961, %962 : vector<2x32xf32>
    %964 = math.tanh %963 : vector<2x32xf32>
    %965 = arith.mulf %960, %964 : vector<2x32xf32>
    %c12_221 = arith.constant 12 : index
    %c0_222 = arith.constant 0 : index
    %966 = vector.load %arg18[%c12_221, %c0_222] : memref<16x32xf32, #tpu.memory_space<vmem>>, vector<2x32xf32>
    tpu.vector_store %arg18[%c12_221, %c0_222], %965 {strides = array<i32>} : memref<16x32xf32, #tpu.memory_space<vmem>>, vector<2x32xf32>,
    %967 = vector.extract_strided_slice %760 {offsets = [14, 0], sizes = [2, 128], strides = [1, 1]} : vector<16x128xf32> to vector<2x128xf32>
    %cst_223 = arith.constant dense<0.000000e+00> : vector<2x128xf32>
    %968 = tpu.matmul %965, %761, %cst_223 {dimension_numbers = #tpu.dot_dimension_numbers<[1], [0], [0], [1], [0, 0, 1, 1], [], []>} : vector<2x32xf32>, vector<32x128xf32>, vector<2x128xf32> -> vector<2x128xf32>
    %969 = arith.addf %967, %968 : vector<2x128xf32>
    %970 = vector.extract_strided_slice %969 {offsets = [0, 0], sizes = [2, 32], strides = [1, 1]} : vector<2x128xf32> to vector<2x32xf32>
    %971 = arith.negf %970 : vector<2x32xf32>
    %972 = math.exp %971 : vector<2x32xf32>
    %cst_224 = arith.constant 1.000000e+00 : f32
    %973 = vector.broadcast %cst_224 : f32 to vector<2x32xf32>
    %974 = arith.addf %973, %972 : vector<2x32xf32>
    %975 = arith.divf %973, %974 : vector<2x32xf32>
    %976 = vector.extract_strided_slice %969 {offsets = [0, 32], sizes = [2, 32], strides = [1, 1]} : vector<2x128xf32> to vector<2x32xf32>
    %977 = arith.negf %976 : vector<2x32xf32>
    %978 = math.exp %977 : vector<2x32xf32>
    %cst_225 = arith.constant 1.000000e+00 : f32
    %979 = vector.broadcast %cst_225 : f32 to vector<2x32xf32>
    %980 = arith.addf %979, %978 : vector<2x32xf32>
    %981 = arith.divf %979, %980 : vector<2x32xf32>
    %982 = vector.extract_strided_slice %969 {offsets = [0, 64], sizes = [2, 32], strides = [1, 1]} : vector<2x128xf32> to vector<2x32xf32>
    %983 = math.tanh %982 : vector<2x32xf32>
    %984 = vector.extract_strided_slice %969 {offsets = [0, 96], sizes = [2, 32], strides = [1, 1]} : vector<2x128xf32> to vector<2x32xf32>
    %985 = arith.negf %984 : vector<2x32xf32>
    %986 = math.exp %985 : vector<2x32xf32>
    %cst_226 = arith.constant 1.000000e+00 : f32
    %987 = vector.broadcast %cst_226 : f32 to vector<2x32xf32>
    %988 = arith.addf %987, %986 : vector<2x32xf32>
    %989 = arith.divf %987, %988 : vector<2x32xf32>
    %990 = arith.mulf %981, %963 : vector<2x32xf32>
    %991 = arith.mulf %975, %983 : vector<2x32xf32>
    %992 = arith.addf %990, %991 : vector<2x32xf32>
    %993 = math.tanh %992 : vector<2x32xf32>
    %994 = arith.mulf %989, %993 : vector<2x32xf32>
    %c14_227 = arith.constant 14 : index
    %c0_228 = arith.constant 0 : index
    %995 = vector.load %arg18[%c14_227, %c0_228] : memref<16x32xf32, #tpu.memory_space<vmem>>, vector<2x32xf32>
    tpu.vector_store %arg18[%c14_227, %c0_228], %994 {strides = array<i32>} : memref<16x32xf32, #tpu.memory_space<vmem>>, vector<2x32xf32>,
    %c0_229 = arith.constant 0 : index
    %c0_230 = arith.constant 0 : index
    %996 = vector.load %arg18[%c0_229, %c0_230] : memref<16x32xf32, #tpu.memory_space<vmem>>, vector<16x32xf32>
    %c0_231 = arith.constant 0 : index
    %c0_232 = arith.constant 0 : index
    %997 = vector.load %arg15[%c0_231, %c0_232] : memref<32x128xf32, #tpu.memory_space<vmem>>, vector<32x128xf32>
    %cst_233 = arith.constant dense<0.000000e+00> : vector<16x128xf32>
    %998 = tpu.matmul %996, %997, %cst_233 {dimension_numbers = #tpu.dot_dimension_numbers<[1], [0], [0], [1], [0, 0, 1, 1], [], []>} : vector<16x32xf32>, vector<32x128xf32>, vector<16x128xf32> -> vector<16x128xf32>
    %c0_234 = arith.constant 0 : index
    %c0_235 = arith.constant 0 : index
    %999 = vector.load %arg16[%c0_234, %c0_235] : memref<1x128xf32, #tpu.memory_space<vmem>>, vector<1x128xf32>
    %1000 = vector.broadcast %999 : vector<1x128xf32> to vector<16x128xf32>
    %1001 = arith.addf %998, %1000 : vector<16x128xf32>
    %c0_236 = arith.constant 0 : index
    %c0_237 = arith.constant 0 : index
    %1002 = vector.load %arg17[%c0_236, %c0_237] : memref<16x128xf32, #tpu.memory_space<vmem>>, vector<16x128xf32>
    tpu.vector_store %arg17[%c0_236, %c0_237], %1001 {strides = array<i32>} : memref<16x128xf32, #tpu.memory_space<vmem>>, vector<16x128xf32>,
    return
  }
}

</mosaic_0001>

<llo_original>
// kernel: gru_lstm_forward.1
$region0: #{gru_lstm_forward.1}
  #allocation0 [shape = 'u32[]', space=smem, size = 0x4, offset = 0x4, fixed_abs, tag = 'smem constant byte address 0x4 - core index']
  #allocation1 [shape = 'u32[144,128]{1,0:T(1,128)}', space=vmem, size = 0x12000, scoped, tag = 'internal scratch']
  #allocation2 [shape = 'f32[16,32]{1,0:T(8,128)}', space=vmem, size = 0x2000, scoped, tag = 'scratch operand']
  %s0 = inlined_call_operand.vmem [shape: f32[16,16], index: 0, kind: input, shape index: {}]
  %s1 = inlined_call_operand.vmem [shape: f32[16,96], index: 1, kind: input, shape index: {}]
  %s2 = inlined_call_operand.vmem [shape: f32[32,96], index: 2, kind: input, shape index: {}]
  %s3 = inlined_call_operand.hbm [shape: f32[1,96], index: 3, kind: input, shape index: {}]
  %s4 = inlined_call_operand.hbm [shape: f32[1,32], index: 4, kind: input, shape index: {}]
  %s5 = inlined_call_operand.vmem [shape: f32[32,96], index: 5, kind: input, shape index: {}]
  %s6 = inlined_call_operand.vmem [shape: f32[32,96], index: 6, kind: input, shape index: {}]
  %s7 = inlined_call_operand.hbm [shape: f32[1,96], index: 7, kind: input, shape index: {}]
  %s8 = inlined_call_operand.hbm [shape: f32[1,32], index: 8, kind: input, shape index: {}]
  %s9 = inlined_call_operand.vmem [shape: f32[32,128], index: 9, kind: input, shape index: {}]
  %s10 = inlined_call_operand.hbm [shape: f32[32,128], index: 10, kind: input, shape index: {}]
  %s11 = inlined_call_operand.hbm [shape: f32[1,128], index: 11, kind: input, shape index: {}]
  %s12 = inlined_call_operand.hbm [shape: f32[32,128], index: 12, kind: input, shape index: {}]
  %s13 = inlined_call_operand.hbm [shape: f32[32,128], index: 13, kind: input, shape index: {}]
  %s14 = inlined_call_operand.hbm [shape: f32[1,128], index: 14, kind: input, shape index: {}]
  %s15 = inlined_call_operand.vmem [shape: f32[32,128], index: 15, kind: input, shape index: {}]
  %s16 = inlined_call_operand.vmem [shape: f32[1,128], index: 16, kind: input, shape index: {}]
  %s17 = inlined_call_operand.vmem [shape: f32[16,128], index: 17, kind: output, shape index: {}]
  %s18 = sld [smem:[#allocation0]]
  $region114: #{gru_lstm_forward.1} parent=0
    _
  %s20 = ssub.s32 1, %s18
  %s21 = scalar_select 0, %s20, %s18
  $region1: #{gru_lstm_forward.1} parent=0
    #allocation3 [shape = 'u8[512]{0}', space=vmem, size = 0x400, scoped, tag = 'input window, operand 3, single buffered']
    #allocation4 [shape = 's32[1]{0}', space=sflag, size = 0x4, scoped, tag = 'scoped memory for gru_lstm_forward.1']
    #allocation5 [shape = 'u8[512]{0}', space=vmem, size = 0x400, scoped, tag = 'input window, operand 4, single buffered']
    #allocation6 [shape = 's32[1]{0}', space=sflag, size = 0x4, scoped, tag = 'scoped memory for gru_lstm_forward.1']
    #allocation7 [shape = 'u8[512]{0}', space=vmem, size = 0x400, scoped, tag = 'input window, operand 7, single buffered']
    #allocation8 [shape = 'u8[512]{0}', space=vmem, size = 0x400, scoped, tag = 'input window, operand 8, single buffered']
    #allocation9 [shape = 's32[1]{0}', space=sflag, size = 0x4, scoped, tag = 'scoped memory for gru_lstm_forward.1']
    #allocation10 [shape = 'u8[16384]{0}', space=vmem, size = 0x4000, scoped, tag = 'input window, operand 10, single buffered']
    #allocation11 [shape = 'u8[512]{0}', space=vmem, size = 0x400, scoped, tag = 'input window, operand 11, single buffered']
    #allocation12 [shape = 's32[1]{0}', space=sflag, size = 0x4, scoped, tag = 'scoped memory for gru_lstm_forward.1']
    #allocation13 [shape = 'u8[16384]{0}', space=vmem, size = 0x4000, scoped, tag = 'input window, operand 12, single buffered']
    #allocation14 [shape = 'u8[16384]{0}', space=vmem, size = 0x4000, scoped, tag = 'input window, operand 13, single buffered']
    #allocation15 [shape = 's32[1]{0}', space=sflag, size = 0x4, scoped, tag = 'scoped memory for gru_lstm_forward.1']
    #allocation16 [shape = 'u8[512]{0}', space=vmem, size = 0x400, scoped, tag = 'input window, operand 14, single buffered']
    %22 = vsyncpa [#allocation4], 0
    %23 = vsyncpa [#allocation6], 0
    %24 = vsyncpa [#allocation9], 0
    %25 = vsyncpa [#allocation12], 0
    %26 = vsyncpa [#allocation15], 0
    // Predicated region
    $region2: #{gru_lstm_forward.1} parent=1 // pred_check
      _
    $region3: #{gru_lstm_forward.1} parent=1 // pred_check_branch
      %28 = sbr.rel (0) target = $region5
    $region4: #{gru_lstm_forward.1} parent=1 // pred_region
      _
    $region5: #{gru_lstm_forward.1} parent=1 // pred_fallthru
      _
    // Predicated region
    $region6: #{gru_lstm_forward.1} parent=1 // pred_check
      _
    $region7: #{gru_lstm_forward.1} parent=1 // pred_check_branch
      %30 = sbr.rel (0) target = $region9
    $region8: #{gru_lstm_forward.1} parent=1 // pred_region
      _
    $region9: #{gru_lstm_forward.1} parent=1 // pred_fallthru
      _
    // Predicated region
    $region10: #{gru_lstm_forward.1} parent=1 // pred_check
      _
    $region11: #{gru_lstm_forward.1} parent=1 // pred_check_branch
      %32 = sbr.rel (0) target = $region13
    $region12: #{gru_lstm_forward.1} parent=1 // pred_region
      _
    $region13: #{gru_lstm_forward.1} parent=1 // pred_fallthru
      _
    // Predicated region
    $region14: #{gru_lstm_forward.1} parent=1 // pred_check
      _
    $region15: #{gru_lstm_forward.1} parent=1 // pred_check_branch
      %34 = sbr.rel (0) target = $region17
    $region16: #{gru_lstm_forward.1} parent=1 // pred_region
      %s36 = ssub.s32 16, 16
      %37 = vsyncadd [#allocation4], %s36
      %s39 = sshll.u32 [#allocation3], 4
      %s40 = int_to_ptr.vmem [resolvable:$true] %s39
      %42 = dma.hbm_to_vmem [thread:$0]  %s3, 16, %s40, [#allocation4]
    $region17: #{gru_lstm_forward.1} parent=1 // pred_fallthru
      _
    // Predicated region
    $region18: #{gru_lstm_forward.1} parent=1 // pred_check
      _
    $region19: #{gru_lstm_forward.1} parent=1 // pred_check_branch
      %44 = sbr.rel (0) target = $region21
    $region20: #{gru_lstm_forward.1} parent=1 // pred_region
      %s46 = ssub.s32 16, 16
      %47 = vsyncadd [#allocation6], %s46
      %s49 = sshll.u32 [#allocation5], 4
      %s50 = int_to_ptr.vmem [resolvable:$true] %s49
      %52 = dma.hbm_to_vmem [thread:$0]  %s4, 16, %s50, [#allocation6]
    $region21: #{gru_lstm_forward.1} parent=1 // pred_fallthru
      _
    // Predicated region
    $region22: #{gru_lstm_forward.1} parent=1 // pred_check
      _
    $region23: #{gru_lstm_forward.1} parent=1 // pred_check_branch
      %54 = sbr.rel (0) target = $region25
    $region24: #{gru_lstm_forward.1} parent=1 // pred_region
      _
    $region25: #{gru_lstm_forward.1} parent=1 // pred_fallthru
      _
    // Predicated region
    $region26: #{gru_lstm_forward.1} parent=1 // pred_check
      _
    $region27: #{gru_lstm_forward.1} parent=1 // pred_check_branch
      %56 = sbr.rel (0) target = $region29
    $region28: #{gru_lstm_forward.1} parent=1 // pred_region
      _
    $region29: #{gru_lstm_forward.1} parent=1 // pred_fallthru
      _
    // Predicated region
    $region30: #{gru_lstm_forward.1} parent=1 // pred_check
      _
    $region31: #{gru_lstm_forward.1} parent=1 // pred_check_branch
      %58 = sbr.rel (0) target = $region33
    $region32: #{gru_lstm_forward.1} parent=1 // pred_region
      %s60 = ssub.s32 16, 16
      %61 = vsyncadd [#allocation6], %s60
      %s63 = sshll.u32 [#allocation7], 4
      %s64 = int_to_ptr.vmem [resolvable:$true] %s63
      %66 = dma.hbm_to_vmem [thread:$0]  %s7, 16, %s64, [#allocation6]
    $region33: #{gru_lstm_forward.1} parent=1 // pred_fallthru
      _
    // Predicated region
    $region34: #{gru_lstm_forward.1} parent=1 // pred_check
      _
    $region35: #{gru_lstm_forward.1} parent=1 // pred_check_branch
      %68 = sbr.rel (0) target = $region37
    $region36: #{gru_lstm_forward.1} parent=1 // pred_region
      %s70 = ssub.s32 16, 16
      %71 = vsyncadd [#allocation9], %s70
      %s73 = sshll.u32 [#allocation8], 4
      %s74 = int_to_ptr.vmem [resolvable:$true] %s73
      %76 = dma.hbm_to_vmem [thread:$0]  %s8, 16, %s74, [#allocation9]
    $region37: #{gru_lstm_forward.1} parent=1 // pred_fallthru
      _
    // Predicated region
    $region38: #{gru_lstm_forward.1} parent=1 // pred_check
      _
    $region39: #{gru_lstm_forward.1} parent=1 // pred_check_branch
      %78 = sbr.rel (0) target = $region41
    $region40: #{gru_lstm_forward.1} parent=1 // pred_region
      _
    $region41: #{gru_lstm_forward.1} parent=1 // pred_fallthru
      _
    // Predicated region
    $region42: #{gru_lstm_forward.1} parent=1 // pred_check
      _
    $region43: #{gru_lstm_forward.1} parent=1 // pred_check_branch
      %80 = sbr.rel (0) target = $region45
    $region44: #{gru_lstm_forward.1} parent=1 // pred_region
      %s82 = ssub.s32 512, 512
      %83 = vsyncadd [#allocation9], %s82
      %s84 = sshll.u32 [#allocation10], 4
      %s85 = int_to_ptr.vmem [resolvable:$true] %s84
      %90 = dma.hbm_to_vmem [thread:$0]  %s10, 512, %s85, [#allocation9], 128, 128, 8
    $region45: #{gru_lstm_forward.1} parent=1 // pred_fallthru
      _
    // Predicated region
    $region46: #{gru_lstm_forward.1} parent=1 // pred_check
      _
    $region47: #{gru_lstm_forward.1} parent=1 // pred_check_branch
      %92 = sbr.rel (0) target = $region49
    $region48: #{gru_lstm_forward.1} parent=1 // pred_region
      %s94 = ssub.s32 16, 16
      %95 = vsyncadd [#allocation12], %s94
      %s97 = sshll.u32 [#allocation11], 4
      %s98 = int_to_ptr.vmem [resolvable:$true] %s97
      %100 = dma.hbm_to_vmem [thread:$0]  %s11, 16, %s98, [#allocation12]
    $region49: #{gru_lstm_forward.1} parent=1 // pred_fallthru
      _
    // Predicated region
    $region50: #{gru_lstm_forward.1} parent=1 // pred_check
      _
    $region51: #{gru_lstm_forward.1} parent=1 // pred_check_branch
      %102 = sbr.rel (0) target = $region53
    $region52: #{gru_lstm_forward.1} parent=1 // pred_region
      %s104 = ssub.s32 512, 512
      %105 = vsyncadd [#allocation12], %s104
      %s106 = sshll.u32 [#allocation13], 4
      %s107 = int_to_ptr.vmem [resolvable:$true] %s106
      %112 = dma.hbm_to_vmem [thread:$0]  %s12, 512, %s107, [#allocation12], 128, 128, 8
    $region53: #{gru_lstm_forward.1} parent=1 // pred_fallthru
      _
    // Predicated region
    $region54: #{gru_lstm_forward.1} parent=1 // pred_check
      _
    $region55: #{gru_lstm_forward.1} parent=1 // pred_check_branch
      %114 = sbr.rel (0) target = $region57
    $region56: #{gru_lstm_forward.1} parent=1 // pred_region
      %s116 = ssub.s32 512, 512
      %117 = vsyncadd [#allocation15], %s116
      %s118 = sshll.u32 [#allocation14], 4
      %s119 = int_to_ptr.vmem [resolvable:$true] %s118
      %124 = dma.hbm_to_vmem [thread:$0]  %s13, 512, %s119, [#allocation15], 128, 128, 8
    $region57: #{gru_lstm_forward.1} parent=1 // pred_fallthru
      _
    // Predicated region
    $region58: #{gru_lstm_forward.1} parent=1 // pred_check
      _
    $region59: #{gru_lstm_forward.1} parent=1 // pred_check_branch
      %126 = sbr.rel (0) target = $region61
    $region60: #{gru_lstm_forward.1} parent=1 // pred_region
      %s128 = ssub.s32 16, 16
      %129 = vsyncadd [#allocation15], %s128
      %s131 = sshll.u32 [#allocation16], 4
      %s132 = int_to_ptr.vmem [resolvable:$true] %s131
      %134 = dma.hbm_to_vmem [thread:$0]  %s14, 16, %s132, [#allocation15]
    $region61: #{gru_lstm_forward.1} parent=1 // pred_fallthru
      _
    // Predicated region
    $region62: #{gru_lstm_forward.1} parent=1 // pred_check
      _
    $region63: #{gru_lstm_forward.1} parent=1 // pred_check_branch
      %136 = sbr.rel (0) target = $region65
    $region64: #{gru_lstm_forward.1} parent=1 // pred_region
      _
    $region65: #{gru_lstm_forward.1} parent=1 // pred_fallthru
      _
    // Predicated region
    $region66: #{gru_lstm_forward.1} parent=1 // pred_check
      _
    $region67: #{gru_lstm_forward.1} parent=1 // pred_check_branch
      %138 = sbr.rel (0) target = $region69
    $region68: #{gru_lstm_forward.1} parent=1 // pred_region
      _
    $region69: #{gru_lstm_forward.1} parent=1 // pred_fallthru
      _
    // Predicated region
    $region70: #{gru_lstm_forward.1} parent=1 // pred_check
      _
    $region71: #{gru_lstm_forward.1} parent=1 // pred_check_branch
      %140 = sbr.rel (0) target = $region73
    $region72: #{gru_lstm_forward.1} parent=1 // pred_region
      %141 = dma.done [#allocation4], 16
    $region73: #{gru_lstm_forward.1} parent=1 // pred_fallthru
      _
    // Predicated region
    $region74: #{gru_lstm_forward.1} parent=1 // pred_check
      _
    $region75: #{gru_lstm_forward.1} parent=1 // pred_check_branch
      %143 = sbr.rel (0) target = $region77
    $region76: #{gru_lstm_forward.1} parent=1 // pred_region
      %144 = dma.done [#allocation6], 16
    $region77: #{gru_lstm_forward.1} parent=1 // pred_fallthru
      _
    // Predicated region
    $region78: #{gru_lstm_forward.1} parent=1 // pred_check
      _
    $region79: #{gru_lstm_forward.1} parent=1 // pred_check_branch
      %146 = sbr.rel (0) target = $region81
    $region80: #{gru_lstm_forward.1} parent=1 // pred_region
      %147 = dma.done [#allocation6], 16
    $region81: #{gru_lstm_forward.1} parent=1 // pred_fallthru
      _
    // Predicated region
    $region82: #{gru_lstm_forward.1} parent=1 // pred_check
      _
    $region83: #{gru_lstm_forward.1} parent=1 // pred_check_branch
      %149 = sbr.rel (0) target = $region85
    $region84: #{gru_lstm_forward.1} parent=1 // pred_region
      %150 = dma.done [#allocation9], 16
    $region85: #{gru_lstm_forward.1} parent=1 // pred_fallthru
      _
    // Predicated region
    $region86: #{gru_lstm_forward.1} parent=1 // pred_check
      _
    $region87: #{gru_lstm_forward.1} parent=1 // pred_check_branch
      %152 = sbr.rel (0) target = $region89
    $region88: #{gru_lstm_forward.1} parent=1 // pred_region
      %153 = dma.done [#allocation9], 512
    $region89: #{gru_lstm_forward.1} parent=1 // pred_fallthru
      _
    // Predicated region
    $region90: #{gru_lstm_forward.1} parent=1 // pred_check
      _
    $region91: #{gru_lstm_forward.1} parent=1 // pred_check_branch
      %155 = sbr.rel (0) target = $region93
    $region92: #{gru_lstm_forward.1} parent=1 // pred_region
      %156 = dma.done [#allocation12], 16
    $region93: #{gru_lstm_forward.1} parent=1 // pred_fallthru
      _
    // Predicated region
    $region94: #{gru_lstm_forward.1} parent=1 // pred_check
      _
    $region95: #{gru_lstm_forward.1} parent=1 // pred_check_branch
      %158 = sbr.rel (0) target = $region97
    $region96: #{gru_lstm_forward.1} parent=1 // pred_region
      %159 = dma.done [#allocation12], 512
    $region97: #{gru_lstm_forward.1} parent=1 // pred_fallthru
      _
    // Predicated region
    $region98: #{gru_lstm_forward.1} parent=1 // pred_check
      _
    $region99: #{gru_lstm_forward.1} parent=1 // pred_check_branch
      %161 = sbr.rel (0) target = $region101
    $region100: #{gru_lstm_forward.1} parent=1 // pred_region
      %162 = dma.done [#allocation15], 512
    $region101: #{gru_lstm_forward.1} parent=1 // pred_fallthru
      _
    // Predicated region
    $region102: #{gru_lstm_forward.1} parent=1 // pred_check
      _
    $region103: #{gru_lstm_forward.1} parent=1 // pred_check_branch
      %164 = sbr.rel (0) target = $region105
    $region104: #{gru_lstm_forward.1} parent=1 // pred_region
      %165 = dma.done [#allocation15], 16
    $region105: #{gru_lstm_forward.1} parent=1 // pred_fallthru
      _
    %v166 = vld [vmem:[%s0] sm:$0xff]
    %v167 = vld [vmem:[%s0 + $0x8] sm:$0xff]
    %v168 = vld [vmem:[%s1] sm:$0xff]
    %v169 = vld [vmem:[%s1 + $0x8] sm:$0xff]
    %v170 = vld [vmem:[#allocation3] sm:$0x1]
    %v172 = vlaneseq
    %v173 = vshrl.u32 %v172, 7
    %v174 = vsub.s32 0, %v173
    %v175 = vrot.slane %v170, %v174
    %vm177 = vcmask 130048
    %v179 = vsel %vm177, %v166, 0
    %v182 = vsel %vm177, %v167, 0
    %184 = vmatprep.subr.mxu0 0.0
    %185 = vmatpush1.msra.mxu0 0.0
    %186 = vmatprep.subr.mxu0 0.0
    %187 = vmatpush1.msra.mxu0 0.0
    %188 = vmatprep.subr.mxu0 0.0
    %189 = vmatpush1.msra.mxu0 0.0
    %190 = vmatprep.subr.mxu0 0.0
    %191 = vmatpush1.msra.mxu0 0.0
    %192 = vmatprep.subr.mxu0 0.0
    %193 = vmatpush1.msra.mxu0 0.0
    %194 = vmatprep.subr.mxu0 0.0
    %195 = vmatpush1.msra.mxu0 0.0
    %196 = vmatprep.subr.mxu0 0.0
    %197 = vmatpush1.msra.mxu0 0.0
    %198 = vmatprep.subr.mxu0 0.0
    %199 = vmatpush1.msra.mxu0 0.0
    %200 = vmatprep.subr.mxu0 0.0
    %201 = vmatpush1.msra.mxu0 0.0
    %202 = vmatprep.subr.mxu0 0.0
    %203 = vmatpush1.msra.mxu0 0.0
    %204 = vmatprep.subr.mxu0 0.0
    %205 = vmatpush1.msra.mxu0 0.0
    %206 = vmatprep.subr.mxu0 0.0
    %207 = vmatpush1.msra.mxu0 0.0
    %208 = vmatprep.subr.mxu0 0.0
    %209 = vmatpush1.msra.mxu0 0.0
    %210 = vmatprep.subr.mxu0 0.0
    %211 = vmatpush1.msra.mxu0 0.0
    %212 = vmatprep.subr.mxu0 0.0
    %213 = vmatpush1.msra.mxu0 %v169
    %214 = vmatprep.subr.mxu0 0.0
    %215 = vmatpush1.msra.mxu0 %v168
    %216 = vmatprep.subr.mxu0 0.0
    %217 = vmatpush2.msra.mxu0 0.0
    %218 = vmatprep.subr.mxu0 0.0
    %219 = vmatpush2.msra.mxu0 0.0
    %220 = vmatprep.subr.mxu0 0.0
    %221 = vmatpush2.msra.mxu0 0.0
    %222 = vmatprep.subr.mxu0 0.0
    %223 = vmatpush2.msra.mxu0 0.0
    %224 = vmatprep.subr.mxu0 0.0
    %225 = vmatpush2.msra.mxu0 0.0
    %226 = vmatprep.subr.mxu0 0.0
    %227 = vmatpush2.msra.mxu0 0.0
    %228 = vmatprep.subr.mxu0 0.0
    %229 = vmatpush2.msra.mxu0 0.0
    %230 = vmatprep.subr.mxu0 0.0
    %231 = vmatpush2.msra.mxu0 0.0
    %232 = vmatprep.subr.mxu0 0.0
    %233 = vmatpush2.msra.mxu0 0.0
    %234 = vmatprep.subr.mxu0 0.0
    %235 = vmatpush2.msra.mxu0 0.0
    %236 = vmatprep.subr.mxu0 0.0
    %237 = vmatpush2.msra.mxu0 0.0
    %238 = vmatprep.subr.mxu0 0.0
    %239 = vmatpush2.msra.mxu0 0.0
    %240 = vmatprep.subr.mxu0 0.0
    %241 = vmatpush2.msra.mxu0 0.0
    %242 = vmatprep.subr.mxu0 0.0
    %243 = vmatpush2.msra.mxu0 0.0
    %244 = vmatprep.subr.mxu0 0.0
    %245 = vmatpush2.msra.mxu0 0.0
    %246 = vmatprep.subr.mxu0 0.0
    %247 = vmatpush2.msra.mxu0 0.0
    %248 = vmatprep.mubr.f32.mxu0 0.0
    %249 = vmatmul.mubr.f32.gmra.mxu0 %v179
    %v250 = vpop.f32.mrf.mxu0
    %v251 = vadd.f32 %v175, %v250
    %v252 = vpop.f32.mrf.mxu0
    %253 = vmatprep.mubr.f32.mxu0 0.0
    %254 = vmatmul.mubr.f32.gmra.mxu0 %v182
    %v255 = vpop.f32.mrf.mxu0
    %v256 = vadd.f32 %v175, %v255
    %v257 = vpop.f32.mrf.mxu0
    %258 = vdwg.mxu0
    %v259 = vld [vmem:[%s2] sm:$0xff]
    %v260 = vld [vmem:[%s2 + $0x8] sm:$0xff]
    %v261 = vld [vmem:[%s2 + $0x10] sm:$0xff]
    %v262 = vld [vmem:[%s2 + $0x18] sm:$0xff]
    %v263 = vld [vmem:[#allocation5] sm:$0x1]
    %vm264 = vcmask 261120
    %v266 = vsel %vm264, 0.0, 0
    %268 = vmatprep.subr.mxu0 0.0
    %269 = vmatpush1.msra.mxu0 0.0
    %270 = vmatprep.subr.mxu0 0.0
    %271 = vmatpush1.msra.mxu0 0.0
    %272 = vmatprep.subr.mxu0 0.0
    %273 = vmatpush1.msra.mxu0 0.0
    %274 = vmatprep.subr.mxu0 0.0
    %275 = vmatpush1.msra.mxu0 0.0
    %276 = vmatprep.subr.mxu0 0.0
    %277 = vmatpush1.msra.mxu0 0.0
    %278 = vmatprep.subr.mxu0 0.0
    %279 = vmatpush1.msra.mxu0 0.0
    %280 = vmatprep.subr.mxu0 0.0
    %281 = vmatpush1.msra.mxu0 0.0
    %282 = vmatprep.subr.mxu0 0.0
    %283 = vmatpush1.msra.mxu0 0.0
    %284 = vmatprep.subr.mxu0 0.0
    %285 = vmatpush1.msra.mxu0 0.0
    %286 = vmatprep.subr.mxu0 0.0
    %287 = vmatpush1.msra.mxu0 0.0
    %288 = vmatprep.subr.mxu0 0.0
    %289 = vmatpush1.msra.mxu0 0.0
    %290 = vmatprep.subr.mxu0 0.0
    %291 = vmatpush1.msra.mxu0 0.0
    %292 = vmatprep.subr.mxu0 0.0
    %293 = vmatpush1.msra.mxu0 %v262
    %294 = vmatprep.subr.mxu0 0.0
    %295 = vmatpush1.msra.mxu0 %v261
    %296 = vmatprep.subr.mxu0 0.0
    %297 = vmatpush1.msra.mxu0 %v260
    %298 = vmatprep.subr.mxu0 0.0
    %299 = vmatpush1.msra.mxu0 %v259
    %300 = vmatprep.subr.mxu0 0.0
    %301 = vmatpush2.msra.mxu0 0.0
    %302 = vmatprep.subr.mxu0 0.0
    %303 = vmatpush2.msra.mxu0 0.0
    %304 = vmatprep.subr.mxu0 0.0
    %305 = vmatpush2.msra.mxu0 0.0
    %306 = vmatprep.subr.mxu0 0.0
    %307 = vmatpush2.msra.mxu0 0.0
    %308 = vmatprep.subr.mxu0 0.0
    %309 = vmatpush2.msra.mxu0 0.0
    %310 = vmatprep.subr.mxu0 0.0
    %311 = vmatpush2.msra.mxu0 0.0
    %312 = vmatprep.subr.mxu0 0.0
    %313 = vmatpush2.msra.mxu0 0.0
    %314 = vmatprep.subr.mxu0 0.0
    %315 = vmatpush2.msra.mxu0 0.0
    %316 = vmatprep.subr.mxu0 0.0
    %317 = vmatpush2.msra.mxu0 0.0
    %318 = vmatprep.subr.mxu0 0.0
    %319 = vmatpush2.msra.mxu0 0.0
    %320 = vmatprep.subr.mxu0 0.0
    %321 = vmatpush2.msra.mxu0 0.0
    %322 = vmatprep.subr.mxu0 0.0
    %323 = vmatpush2.msra.mxu0 0.0
    %324 = vmatprep.subr.mxu0 0.0
    %325 = vmatpush2.msra.mxu0 0.0
    %326 = vmatprep.subr.mxu0 0.0
    %327 = vmatpush2.msra.mxu0 0.0
    %328 = vmatprep.subr.mxu0 0.0
    %329 = vmatpush2.msra.mxu0 0.0
    %330 = vmatprep.subr.mxu0 0.0
    %331 = vmatpush2.msra.mxu0 0.0
    %332 = vmatprep.mubr.f32.mxu0 0.0
    %333 = vmatmul.mubr.f32.gmra.mxu0 %v266
    %v334 = vpop.f32.mrf.mxu0
    %v335 = vadd.f32 0.0, %v334
    %v336 = vpop.f32.mrf.mxu0
    %337 = vdwg.mxu0
    %v338 = vadd.f32 %v251, %v335
    %v339 = vxor.u32 %v338, 2147483648
    %v340 = vmul.f32 %v339, 1.442695
    %v341 = vpow.pop %v340
    %v342 = vadd.f32 %v341, 1.0
    %v343 = vrcp.pop %v342
    %v344 = vmul.f32 1.0, %v343
    %v346 = vlaneseq
    %v347 = vshrl.u32 %v346, 7
    %v348 = vsub.s32 0, %v347
    %v349 = vrot.slane %v263, %v348
    %350 = vrot.lane.b32.xlu0 %v349, 64
    %v351 = vpop.permute.xlu0 %350
    %v353 = vadd.f32 %v335, %v351
    %355 = vrot.lane.b32.xlu0 %v353, 64
    %v356 = vpop.permute.xlu0 %355
    %v358 = vmul.f32 %v344, %v356
    %360 = vrot.lane.b32.xlu0 %v358, 64
    %v361 = vpop.permute.xlu0 %360
    %v363 = vadd.f32 %v251, %v361
    %v364 = vtanh.pop %v363
    %v365 = vsub.f32 1.0, %v344
    %367 = vrot.lane.b32.xlu0 %v364, 96
    %v368 = vpop.permute.xlu0 %367
    %v370 = vmul.f32 %v365, %v368
    %v371 = vmul.f32 %v344, 0.0
    %v372 = vadd.f32 %v370, %v371
    %374 = vrot.lane.b32.xlu0 %v372, 96
    %v375 = vpop.permute.xlu0 %374
    %vm377 = vcmask 254976
    %378 = vst.msk [vmem:[#allocation2] sm:$0x3] %vm377, %v375
    %v379 = vsel %vm264, %v375, 0
    %381 = vmatprep.subr.mxu0 0.0
    %382 = vmatpush1.msra.mxu0 0.0
    %383 = vmatprep.subr.mxu0 0.0
    %384 = vmatpush1.msra.mxu0 0.0
    %385 = vmatprep.subr.mxu0 0.0
    %386 = vmatpush1.msra.mxu0 0.0
    %387 = vmatprep.subr.mxu0 0.0
    %388 = vmatpush1.msra.mxu0 0.0
    %389 = vmatprep.subr.mxu0 0.0
    %390 = vmatpush1.msra.mxu0 0.0
    %391 = vmatprep.subr.mxu0 0.0
    %392 = vmatpush1.msra.mxu0 0.0
    %393 = vmatprep.subr.mxu0 0.0
    %394 = vmatpush1.msra.mxu0 0.0
    %395 = vmatprep.subr.mxu0 0.0
    %396 = vmatpush1.msra.mxu0 0.0
    %397 = vmatprep.subr.mxu0 0.0
    %398 = vmatpush1.msra.mxu0 0.0
    %399 = vmatprep.subr.mxu0 0.0
    %400 = vmatpush1.msra.mxu0 0.0
    %401 = vmatprep.subr.mxu0 0.0
    %402 = vmatpush1.msra.mxu0 0.0
    %403 = vmatprep.subr.mxu0 0.0
    %404 = vmatpush1.msra.mxu0 0.0
    %405 = vmatprep.subr.mxu0 0.0
    %406 = vmatpush1.msra.mxu0 %v262
    %407 = vmatprep.subr.mxu0 0.0
    %408 = vmatpush1.msra.mxu0 %v261
    %409 = vmatprep.subr.mxu0 0.0
    %410 = vmatpush1.msra.mxu0 %v260
    %411 = vmatprep.subr.mxu0 0.0
    %412 = vmatpush1.msra.mxu0 %v259
    %413 = vmatprep.subr.mxu0 0.0
    %414 = vmatpush2.msra.mxu0 0.0
    %415 = vmatprep.subr.mxu0 0.0
    %416 = vmatpush2.msra.mxu0 0.0
    %417 = vmatprep.subr.mxu0 0.0
    %418 = vmatpush2.msra.mxu0 0.0
    %419 = vmatprep.subr.mxu0 0.0
    %420 = vmatpush2.msra.mxu0 0.0
    %421 = vmatprep.subr.mxu0 0.0
    %422 = vmatpush2.msra.mxu0 0.0
    %423 = vmatprep.subr.mxu0 0.0
    %424 = vmatpush2.msra.mxu0 0.0
    %425 = vmatprep.subr.mxu0 0.0
    %426 = vmatpush2.msra.mxu0 0.0
    %427 = vmatprep.subr.mxu0 0.0
    %428 = vmatpush2.msra.mxu0 0.0
    %429 = vmatprep.subr.mxu0 0.0
    %430 = vmatpush2.msra.mxu0 0.0
    %431 = vmatprep.subr.mxu0 0.0
    %432 = vmatpush2.msra.mxu0 0.0
    %433 = vmatprep.subr.mxu0 0.0
    %434 = vmatpush2.msra.mxu0 0.0
    %435 = vmatprep.subr.mxu0 0.0
    %436 = vmatpush2.msra.mxu0 0.0
    %437 = vmatprep.subr.mxu0 0.0
    %438 = vmatpush2.msra.mxu0 0.0
    %439 = vmatprep.subr.mxu0 0.0
    %440 = vmatpush2.msra.mxu0 0.0
    %441 = vmatprep.subr.mxu0 0.0
    %442 = vmatpush2.msra.mxu0 0.0
    %443 = vmatprep.subr.mxu0 0.0
    %444 = vmatpush2.msra.mxu0 0.0
    %445 = vmatprep.mubr.f32.mxu0 0.0
    %446 = vmatmul.mubr.f32.gmra.mxu0 %v379
    %v447 = vpop.f32.mrf.mxu0
    %v448 = vadd.f32 0.0, %v447
    %v449 = vpop.f32.mrf.mxu0
    %450 = vdwg.mxu0
    %v452 = vrot.slane %v448, 6
    %v454 = vadd.f32 %v251, %v452
    %v455 = vxor.u32 %v454, 2147483648
    %v456 = vmul.f32 %v455, 1.442695
    %v457 = vpow.pop %v456
    %v458 = vadd.f32 %v457, 1.0
    %v459 = vrcp.pop %v458
    %v460 = vmul.f32 1.0, %v459
    %v461 = vadd.f32 %v448, %v351
    %v463 = vrot.slane %v461, 6
    %464 = vrot.lane.b32.xlu0 %v463, 64
    %v465 = vpop.permute.xlu0 %464
    %v467 = vmul.f32 %v460, %v465
    %469 = vrot.lane.b32.xlu0 %v467, 64
    %v470 = vpop.permute.xlu0 %469
    %v472 = vadd.f32 %v251, %v470
    %v473 = vtanh.pop %v472
    %v474 = vsub.f32 1.0, %v460
    %476 = vrot.lane.b32.xlu0 %v473, 96
    %v477 = vpop.permute.xlu0 %476
    %v479 = vmul.f32 %v474, %v477
    %v480 = vrot.slane %v372, 6
    %v482 = vmul.f32 %v460, %v480
    %v483 = vadd.f32 %v479, %v482
    %485 = vrot.lane.b32.xlu0 %v483, 96
    %v486 = vpop.permute.xlu0 %485
    %vm488 = vcmask 257026
    %489 = vst.msk [vmem:[#allocation2] sm:$0xc] %vm488, %v486
    %v490 = vrot.slane %v483, 2
    %491 = vrot.lane.b32.xlu0 %v490, 96
    %v492 = vpop.permute.xlu0 %491
    %v493 = vsel %vm264, %v492, 0
    %495 = vmatprep.subr.mxu0 0.0
    %496 = vmatpush1.msra.mxu0 0.0
    %497 = vmatprep.subr.mxu0 0.0
    %498 = vmatpush1.msra.mxu0 0.0
    %499 = vmatprep.subr.mxu0 0.0
    %500 = vmatpush1.msra.mxu0 0.0
    %501 = vmatprep.subr.mxu0 0.0
    %502 = vmatpush1.msra.mxu0 0.0
    %503 = vmatprep.subr.mxu0 0.0
    %504 = vmatpush1.msra.mxu0 0.0
    %505 = vmatprep.subr.mxu0 0.0
    %506 = vmatpush1.msra.mxu0 0.0
    %507 = vmatprep.subr.mxu0 0.0
    %508 = vmatpush1.msra.mxu0 0.0
    %509 = vmatprep.subr.mxu0 0.0
    %510 = vmatpush1.msra.mxu0 0.0
    %511 = vmatprep.subr.mxu0 0.0
    %512 = vmatpush1.msra.mxu0 0.0
    %513 = vmatprep.subr.mxu0 0.0
    %514 = vmatpush1.msra.mxu0 0.0
    %515 = vmatprep.subr.mxu0 0.0
    %516 = vmatpush1.msra.mxu0 0.0
    %517 = vmatprep.subr.mxu0 0.0
    %518 = vmatpush1.msra.mxu0 0.0
    %519 = vmatprep.subr.mxu0 0.0
    %520 = vmatpush1.msra.mxu0 %v262
    %521 = vmatprep.subr.mxu0 0.0
    %522 = vmatpush1.msra.mxu0 %v261
    %523 = vmatprep.subr.mxu0 0.0
    %524 = vmatpush1.msra.mxu0 %v260
    %525 = vmatprep.subr.mxu0 0.0
    %526 = vmatpush1.msra.mxu0 %v259
    %527 = vmatprep.subr.mxu0 0.0
    %528 = vmatpush2.msra.mxu0 0.0
    %529 = vmatprep.subr.mxu0 0.0
    %530 = vmatpush2.msra.mxu0 0.0
    %531 = vmatprep.subr.mxu0 0.0
    %532 = vmatpush2.msra.mxu0 0.0
    %533 = vmatprep.subr.mxu0 0.0
    %534 = vmatpush2.msra.mxu0 0.0
    %535 = vmatprep.subr.mxu0 0.0
    %536 = vmatpush2.msra.mxu0 0.0
    %537 = vmatprep.subr.mxu0 0.0
    %538 = vmatpush2.msra.mxu0 0.0
    %539 = vmatprep.subr.mxu0 0.0
    %540 = vmatpush2.msra.mxu0 0.0
    %541 = vmatprep.subr.mxu0 0.0
    %542 = vmatpush2.msra.mxu0 0.0
    %543 = vmatprep.subr.mxu0 0.0
    %544 = vmatpush2.msra.mxu0 0.0
    %545 = vmatprep.subr.mxu0 0.0
    %546 = vmatpush2.msra.mxu0 0.0
    %547 = vmatprep.subr.mxu0 0.0
    %548 = vmatpush2.msra.mxu0 0.0
    %549 = vmatprep.subr.mxu0 0.0
    %550 = vmatpush2.msra.mxu0 0.0
    %551 = vmatprep.subr.mxu0 0.0
    %552 = vmatpush2.msra.mxu0 0.0
    %553 = vmatprep.subr.mxu0 0.0
    %554 = vmatpush2.msra.mxu0 0.0
    %555 = vmatprep.subr.mxu0 0.0
    %556 = vmatpush2.msra.mxu0 0.0
    %557 = vmatprep.subr.mxu0 0.0
    %558 = vmatpush2.msra.mxu0 0.0
    %559 = vmatprep.mubr.f32.mxu0 0.0
    %560 = vmatmul.mubr.f32.gmra.mxu0 %v493
    %v561 = vpop.f32.mrf.mxu0
    %v562 = vadd.f32 0.0, %v561
    %v563 = vpop.f32.mrf.mxu0
    %564 = vdwg.mxu0
    %v566 = vrot.slane %v562, 4
    %v568 = vadd.f32 %v251, %v566
    %v569 = vxor.u32 %v568, 2147483648
    %v570 = vmul.f32 %v569, 1.442695
    %v571 = vpow.pop %v570
    %v572 = vadd.f32 %v571, 1.0
    %v573 = vrcp.pop %v572
    %v574 = vmul.f32 1.0, %v573
    %v575 = vadd.f32 %v562, %v351
    %v577 = vrot.slane %v575, 4
    %578 = vrot.lane.b32.xlu0 %v577, 64
    %v579 = vpop.permute.xlu0 %578
    %v581 = vmul.f32 %v574, %v579
    %583 = vrot.lane.b32.xlu0 %v581, 64
    %v584 = vpop.permute.xlu0 %583
    %v586 = vadd.f32 %v251, %v584
    %v587 = vtanh.pop %v586
    %v588 = vsub.f32 1.0, %v574
    %590 = vrot.lane.b32.xlu0 %v587, 96
    %v591 = vpop.permute.xlu0 %590
    %v593 = vmul.f32 %v588, %v591
    %v594 = vrot.slane %v483, 6
    %v596 = vmul.f32 %v574, %v594
    %v597 = vadd.f32 %v593, %v596
    %599 = vrot.lane.b32.xlu0 %v597, 96
    %v600 = vpop.permute.xlu0 %599
    %vm602 = vcmask 259076
    %603 = vst.msk [vmem:[#allocation2] sm:$0x30] %vm602, %v600
    %v604 = vrot.slane %v597, 4
    %605 = vrot.lane.b32.xlu0 %v604, 96
    %v606 = vpop.permute.xlu0 %605
    %v607 = vsel %vm264, %v606, 0
    %609 = vmatprep.subr.mxu0 0.0
    %610 = vmatpush1.msra.mxu0 0.0
    %611 = vmatprep.subr.mxu0 0.0
    %612 = vmatpush1.msra.mxu0 0.0
    %613 = vmatprep.subr.mxu0 0.0
    %614 = vmatpush1.msra.mxu0 0.0
    %615 = vmatprep.subr.mxu0 0.0
    %616 = vmatpush1.msra.mxu0 0.0
    %617 = vmatprep.subr.mxu0 0.0
    %618 = vmatpush1.msra.mxu0 0.0
    %619 = vmatprep.subr.mxu0 0.0
    %620 = vmatpush1.msra.mxu0 0.0
    %621 = vmatprep.subr.mxu0 0.0
    %622 = vmatpush1.msra.mxu0 0.0
    %623 = vmatprep.subr.mxu0 0.0
    %624 = vmatpush1.msra.mxu0 0.0
    %625 = vmatprep.subr.mxu0 0.0
    %626 = vmatpush1.msra.mxu0 0.0
    %627 = vmatprep.subr.mxu0 0.0
    %628 = vmatpush1.msra.mxu0 0.0
    %629 = vmatprep.subr.mxu0 0.0
    %630 = vmatpush1.msra.mxu0 0.0
    %631 = vmatprep.subr.mxu0 0.0
    %632 = vmatpush1.msra.mxu0 0.0
    %633 = vmatprep.subr.mxu0 0.0
    %634 = vmatpush1.msra.mxu0 %v262
    %635 = vmatprep.subr.mxu0 0.0
    %636 = vmatpush1.msra.mxu0 %v261
    %637 = vmatprep.subr.mxu0 0.0
    %638 = vmatpush1.msra.mxu0 %v260
    %639 = vmatprep.subr.mxu0 0.0
    %640 = vmatpush1.msra.mxu0 %v259
    %641 = vmatprep.subr.mxu0 0.0
    %642 = vmatpush2.msra.mxu0 0.0
    %643 = vmatprep.subr.mxu0 0.0
    %644 = vmatpush2.msra.mxu0 0.0
    %645 = vmatprep.subr.mxu0 0.0
    %646 = vmatpush2.msra.mxu0 0.0
    %647 = vmatprep.subr.mxu0 0.0
    %648 = vmatpush2.msra.mxu0 0.0
    %649 = vmatprep.subr.mxu0 0.0
    %650 = vmatpush2.msra.mxu0 0.0
    %651 = vmatprep.subr.mxu0 0.0
    %652 = vmatpush2.msra.mxu0 0.0
    %653 = vmatprep.subr.mxu0 0.0
    %654 = vmatpush2.msra.mxu0 0.0
    %655 = vmatprep.subr.mxu0 0.0
    %656 = vmatpush2.msra.mxu0 0.0
    %657 = vmatprep.subr.mxu0 0.0
    %658 = vmatpush2.msra.mxu0 0.0
    %659 = vmatprep.subr.mxu0 0.0
    %660 = vmatpush2.msra.mxu0 0.0
    %661 = vmatprep.subr.mxu0 0.0
    %662 = vmatpush2.msra.mxu0 0.0
    %663 = vmatprep.subr.mxu0 0.0
    %664 = vmatpush2.msra.mxu0 0.0
    %665 = vmatprep.subr.mxu0 0.0
    %666 = vmatpush2.msra.mxu0 0.0
    %667 = vmatprep.subr.mxu0 0.0
    %668 = vmatpush2.msra.mxu0 0.0
    %669 = vmatprep.subr.mxu0 0.0
    %670 = vmatpush2.msra.mxu0 0.0
    %671 = vmatprep.subr.mxu0 0.0
    %672 = vmatpush2.msra.mxu0 0.0
    %673 = vmatprep.mubr.f32.mxu0 0.0
    %674 = vmatmul.mubr.f32.gmra.mxu0 %v607
    %v675 = vpop.f32.mrf.mxu0
    %v676 = vadd.f32 0.0, %v675
    %v677 = vpop.f32.mrf.mxu0
    %678 = vdwg.mxu0
    %v680 = vrot.slane %v676, 2
    %v682 = vadd.f32 %v251, %v680
    %v683 = vxor.u32 %v682, 2147483648
    %v684 = vmul.f32 %v683, 1.442695
    %v685 = vpow.pop %v684
    %v686 = vadd.f32 %v685, 1.0
    %v687 = vrcp.pop %v686
    %v688 = vmul.f32 1.0, %v687
    %v689 = vadd.f32 %v676, %v351
    %v691 = vrot.slane %v689, 2
    %692 = vrot.lane.b32.xlu0 %v691, 64
    %v693 = vpop.permute.xlu0 %692
    %v695 = vmul.f32 %v688, %v693
    %697 = vrot.lane.b32.xlu0 %v695, 64
    %v698 = vpop.permute.xlu0 %697
    %v700 = vadd.f32 %v251, %v698
    %v701 = vtanh.pop %v700
    %v702 = vsub.f32 1.0, %v688
    %704 = vrot.lane.b32.xlu0 %v701, 96
    %v705 = vpop.permute.xlu0 %704
    %v707 = vmul.f32 %v702, %v705
    %v708 = vrot.slane %v597, 6
    %v710 = vmul.f32 %v688, %v708
    %v711 = vadd.f32 %v707, %v710
    %713 = vrot.lane.b32.xlu0 %v711, 96
    %v714 = vpop.permute.xlu0 %713
    %vm716 = vcmask 261126
    %717 = vst.msk [vmem:[#allocation2] sm:$0xc0] %vm716, %v714
    %v718 = vrot.slane %v711, 6
    %719 = vrot.lane.b32.xlu0 %v718, 96
    %v720 = vpop.permute.xlu0 %719
    %v721 = vsel %vm264, %v720, 0
    %723 = vmatprep.subr.mxu0 0.0
    %724 = vmatpush1.msra.mxu0 0.0
    %725 = vmatprep.subr.mxu0 0.0
    %726 = vmatpush1.msra.mxu0 0.0
    %727 = vmatprep.subr.mxu0 0.0
    %728 = vmatpush1.msra.mxu0 0.0
    %729 = vmatprep.subr.mxu0 0.0
    %730 = vmatpush1.msra.mxu0 0.0
    %731 = vmatprep.subr.mxu0 0.0
    %732 = vmatpush1.msra.mxu0 0.0
    %733 = vmatprep.subr.mxu0 0.0
    %734 = vmatpush1.msra.mxu0 0.0
    %735 = vmatprep.subr.mxu0 0.0
    %736 = vmatpush1.msra.mxu0 0.0
    %737 = vmatprep.subr.mxu0 0.0
    %738 = vmatpush1.msra.mxu0 0.0
    %739 = vmatprep.subr.mxu0 0.0
    %740 = vmatpush1.msra.mxu0 0.0
    %741 = vmatprep.subr.mxu0 0.0
    %742 = vmatpush1.msra.mxu0 0.0
    %743 = vmatprep.subr.mxu0 0.0
    %744 = vmatpush1.msra.mxu0 0.0
    %745 = vmatprep.subr.mxu0 0.0
    %746 = vmatpush1.msra.mxu0 0.0
    %747 = vmatprep.subr.mxu0 0.0
    %748 = vmatpush1.msra.mxu0 %v262
    %749 = vmatprep.subr.mxu0 0.0
    %750 = vmatpush1.msra.mxu0 %v261
    %751 = vmatprep.subr.mxu0 0.0
    %752 = vmatpush1.msra.mxu0 %v260
    %753 = vmatprep.subr.mxu0 0.0
    %754 = vmatpush1.msra.mxu0 %v259
    %755 = vmatprep.subr.mxu0 0.0
    %756 = vmatpush2.msra.mxu0 0.0
    %757 = vmatprep.subr.mxu0 0.0
    %758 = vmatpush2.msra.mxu0 0.0
    %759 = vmatprep.subr.mxu0 0.0
    %760 = vmatpush2.msra.mxu0 0.0
    %761 = vmatprep.subr.mxu0 0.0
    %762 = vmatpush2.msra.mxu0 0.0
    %763 = vmatprep.subr.mxu0 0.0
    %764 = vmatpush2.msra.mxu0 0.0
    %765 = vmatprep.subr.mxu0 0.0
    %766 = vmatpush2.msra.mxu0 0.0
    %767 = vmatprep.subr.mxu0 0.0
    %768 = vmatpush2.msra.mxu0 0.0
    %769 = vmatprep.subr.mxu0 0.0
    %770 = vmatpush2.msra.mxu0 0.0
    %771 = vmatprep.subr.mxu0 0.0
    %772 = vmatpush2.msra.mxu0 0.0
    %773 = vmatprep.subr.mxu0 0.0
    %774 = vmatpush2.msra.mxu0 0.0
    %775 = vmatprep.subr.mxu0 0.0
    %776 = vmatpush2.msra.mxu0 0.0
    %777 = vmatprep.subr.mxu0 0.0
    %778 = vmatpush2.msra.mxu0 0.0
    %779 = vmatprep.subr.mxu0 0.0
    %780 = vmatpush2.msra.mxu0 0.0
    %781 = vmatprep.subr.mxu0 0.0
    %782 = vmatpush2.msra.mxu0 0.0
    %783 = vmatprep.subr.mxu0 0.0
    %784 = vmatpush2.msra.mxu0 0.0
    %785 = vmatprep.subr.mxu0 0.0
    %786 = vmatpush2.msra.mxu0 0.0
    %787 = vmatprep.mubr.f32.mxu0 0.0
    %788 = vmatmul.mubr.f32.gmra.mxu0 %v721
    %v789 = vpop.f32.mrf.mxu0
    %v790 = vadd.f32 0.0, %v789
    %v791 = vpop.f32.mrf.mxu0
    %792 = vdwg.mxu0
    %v793 = vadd.f32 %v256, %v790
    %v794 = vxor.u32 %v793, 2147483648
    %v795 = vmul.f32 %v794, 1.442695
    %v796 = vpow.pop %v795
    %v797 = vadd.f32 %v796, 1.0
    %v798 = vrcp.pop %v797
    %v799 = vmul.f32 1.0, %v798
    %v800 = vadd.f32 %v790, %v351
    %802 = vrot.lane.b32.xlu0 %v800, 64
    %v803 = vpop.permute.xlu0 %802
    %v805 = vmul.f32 %v799, %v803
    %807 = vrot.lane.b32.xlu0 %v805, 64
    %v808 = vpop.permute.xlu0 %807
    %v810 = vadd.f32 %v256, %v808
    %v811 = vtanh.pop %v810
    %v812 = vsub.f32 1.0, %v799
    %814 = vrot.lane.b32.xlu0 %v811, 96
    %v815 = vpop.permute.xlu0 %814
    %v817 = vmul.f32 %v812, %v815
    %v819 = vmul.f32 %v799, %v718
    %v820 = vadd.f32 %v817, %v819
    %822 = vrot.lane.b32.xlu0 %v820, 96
    %v823 = vpop.permute.xlu0 %822
    %825 = vst.msk [vmem:[#allocation2 + $0x8] sm:$0x3] %vm377, %v823
    %v826 = vsel %vm264, %v823, 0
    %828 = vmatprep.subr.mxu0 0.0
    %829 = vmatpush1.msra.mxu0 0.0
    %830 = vmatprep.subr.mxu0 0.0
    %831 = vmatpush1.msra.mxu0 0.0
    %832 = vmatprep.subr.mxu0 0.0
    %833 = vmatpush1.msra.mxu0 0.0
    %834 = vmatprep.subr.mxu0 0.0
    %835 = vmatpush1.msra.mxu0 0.0
    %836 = vmatprep.subr.mxu0 0.0
    %837 = vmatpush1.msra.mxu0 0.0
    %838 = vmatprep.subr.mxu0 0.0
    %839 = vmatpush1.msra.mxu0 0.0
    %840 = vmatprep.subr.mxu0 0.0
    %841 = vmatpush1.msra.mxu0 0.0
    %842 = vmatprep.subr.mxu0 0.0
    %843 = vmatpush1.msra.mxu0 0.0
    %844 = vmatprep.subr.mxu0 0.0
    %845 = vmatpush1.msra.mxu0 0.0
    %846 = vmatprep.subr.mxu0 0.0
    %847 = vmatpush1.msra.mxu0 0.0
    %848 = vmatprep.subr.mxu0 0.0
    %849 = vmatpush1.msra.mxu0 0.0
    %850 = vmatprep.subr.mxu0 0.0
    %851 = vmatpush1.msra.mxu0 0.0
    %852 = vmatprep.subr.mxu0 0.0
    %853 = vmatpush1.msra.mxu0 %v262
    %854 = vmatprep.subr.mxu0 0.0
    %855 = vmatpush1.msra.mxu0 %v261
    %856 = vmatprep.subr.mxu0 0.0
    %857 = vmatpush1.msra.mxu0 %v260
    %858 = vmatprep.subr.mxu0 0.0
    %859 = vmatpush1.msra.mxu0 %v259
    %860 = vmatprep.subr.mxu0 0.0
    %861 = vmatpush2.msra.mxu0 0.0
    %862 = vmatprep.subr.mxu0 0.0
    %863 = vmatpush2.msra.mxu0 0.0
    %864 = vmatprep.subr.mxu0 0.0
    %865 = vmatpush2.msra.mxu0 0.0
    %866 = vmatprep.subr.mxu0 0.0
    %867 = vmatpush2.msra.mxu0 0.0
    %868 = vmatprep.subr.mxu0 0.0
    %869 = vmatpush2.msra.mxu0 0.0
    %870 = vmatprep.subr.mxu0 0.0
    %871 = vmatpush2.msra.mxu0 0.0
    %872 = vmatprep.subr.mxu0 0.0
    %873 = vmatpush2.msra.mxu0 0.0
    %874 = vmatprep.subr.mxu0 0.0
    %875 = vmatpush2.msra.mxu0 0.0
    %876 = vmatprep.subr.mxu0 0.0
    %877 = vmatpush2.msra.mxu0 0.0
    %878 = vmatprep.subr.mxu0 0.0
    %879 = vmatpush2.msra.mxu0 0.0
    %880 = vmatprep.subr.mxu0 0.0
    %881 = vmatpush2.msra.mxu0 0.0
    %882 = vmatprep.subr.mxu0 0.0
    %883 = vmatpush2.msra.mxu0 0.0
    %884 = vmatprep.subr.mxu0 0.0
    %885 = vmatpush2.msra.mxu0 0.0
    %886 = vmatprep.subr.mxu0 0.0
    %887 = vmatpush2.msra.mxu0 0.0
    %888 = vmatprep.subr.mxu0 0.0
    %889 = vmatpush2.msra.mxu0 0.0
    %890 = vmatprep.subr.mxu0 0.0
    %891 = vmatpush2.msra.mxu0 0.0
    %892 = vmatprep.mubr.f32.mxu0 0.0
    %893 = vmatmul.mubr.f32.gmra.mxu0 %v826
    %v894 = vpop.f32.mrf.mxu0
    %v895 = vadd.f32 0.0, %v894
    %v896 = vpop.f32.mrf.mxu0
    %897 = vdwg.mxu0
    %v899 = vrot.slane %v895, 6
    %v901 = vadd.f32 %v256, %v899
    %v902 = vxor.u32 %v901, 2147483648
    %v903 = vmul.f32 %v902, 1.442695
    %v904 = vpow.pop %v903
    %v905 = vadd.f32 %v904, 1.0
    %v906 = vrcp.pop %v905
    %v907 = vmul.f32 1.0, %v906
    %v908 = vadd.f32 %v895, %v351
    %v910 = vrot.slane %v908, 6
    %911 = vrot.lane.b32.xlu0 %v910, 64
    %v912 = vpop.permute.xlu0 %911
    %v914 = vmul.f32 %v907, %v912
    %916 = vrot.lane.b32.xlu0 %v914, 64
    %v917 = vpop.permute.xlu0 %916
    %v919 = vadd.f32 %v256, %v917
    %v920 = vtanh.pop %v919
    %v921 = vsub.f32 1.0, %v907
    %923 = vrot.lane.b32.xlu0 %v920, 96
    %v924 = vpop.permute.xlu0 %923
    %v926 = vmul.f32 %v921, %v924
    %v927 = vrot.slane %v820, 6
    %v929 = vmul.f32 %v907, %v927
    %v930 = vadd.f32 %v926, %v929
    %932 = vrot.lane.b32.xlu0 %v930, 96
    %v933 = vpop.permute.xlu0 %932
    %935 = vst.msk [vmem:[#allocation2 + $0x8] sm:$0xc] %vm488, %v933
    %v936 = vrot.slane %v930, 2
    %937 = vrot.lane.b32.xlu0 %v936, 96
    %v938 = vpop.permute.xlu0 %937
    %v939 = vsel %vm264, %v938, 0
    %941 = vmatprep.subr.mxu0 0.0
    %942 = vmatpush1.msra.mxu0 0.0
    %943 = vmatprep.subr.mxu0 0.0
    %944 = vmatpush1.msra.mxu0 0.0
    %945 = vmatprep.subr.mxu0 0.0
    %946 = vmatpush1.msra.mxu0 0.0
    %947 = vmatprep.subr.mxu0 0.0
    %948 = vmatpush1.msra.mxu0 0.0
    %949 = vmatprep.subr.mxu0 0.0
    %950 = vmatpush1.msra.mxu0 0.0
    %951 = vmatprep.subr.mxu0 0.0
    %952 = vmatpush1.msra.mxu0 0.0
    %953 = vmatprep.subr.mxu0 0.0
    %954 = vmatpush1.msra.mxu0 0.0
    %955 = vmatprep.subr.mxu0 0.0
    %956 = vmatpush1.msra.mxu0 0.0
    %957 = vmatprep.subr.mxu0 0.0
    %958 = vmatpush1.msra.mxu0 0.0
    %959 = vmatprep.subr.mxu0 0.0
    %960 = vmatpush1.msra.mxu0 0.0
    %961 = vmatprep.subr.mxu0 0.0
    %962 = vmatpush1.msra.mxu0 0.0
    %963 = vmatprep.subr.mxu0 0.0
    %964 = vmatpush1.msra.mxu0 0.0
    %965 = vmatprep.subr.mxu0 0.0
    %966 = vmatpush1.msra.mxu0 %v262
    %967 = vmatprep.subr.mxu0 0.0
    %968 = vmatpush1.msra.mxu0 %v261
    %969 = vmatprep.subr.mxu0 0.0
    %970 = vmatpush1.msra.mxu0 %v260
    %971 = vmatprep.subr.mxu0 0.0
    %972 = vmatpush1.msra.mxu0 %v259
    %973 = vmatprep.subr.mxu0 0.0
    %974 = vmatpush2.msra.mxu0 0.0
    %975 = vmatprep.subr.mxu0 0.0
    %976 = vmatpush2.msra.mxu0 0.0
    %977 = vmatprep.subr.mxu0 0.0
    %978 = vmatpush2.msra.mxu0 0.0
    %979 = vmatprep.subr.mxu0 0.0
    %980 = vmatpush2.msra.mxu0 0.0
    %981 = vmatprep.subr.mxu0 0.0
    %982 = vmatpush2.msra.mxu0 0.0
    %983 = vmatprep.subr.mxu0 0.0
    %984 = vmatpush2.msra.mxu0 0.0
    %985 = vmatprep.subr.mxu0 0.0
    %986 = vmatpush2.msra.mxu0 0.0
    %987 = vmatprep.subr.mxu0 0.0
    %988 = vmatpush2.msra.mxu0 0.0
    %989 = vmatprep.subr.mxu0 0.0
    %990 = vmatpush2.msra.mxu0 0.0
    %991 = vmatprep.subr.mxu0 0.0
    %992 = vmatpush2.msra.mxu0 0.0
    %993 = vmatprep.subr.mxu0 0.0
    %994 = vmatpush2.msra.mxu0 0.0
    %995 = vmatprep.subr.mxu0 0.0
    %996 = vmatpush2.msra.mxu0 0.0
    %997 = vmatprep.subr.mxu0 0.0
    %998 = vmatpush2.msra.mxu0 0.0
    %999 = vmatprep.subr.mxu0 0.0
    %1000 = vmatpush2.msra.mxu0 0.0
    %1001 = vmatprep.subr.mxu0 0.0
    %1002 = vmatpush2.msra.mxu0 0.0
    %1003 = vmatprep.subr.mxu0 0.0
    %1004 = vmatpush2.msra.mxu0 0.0
    %1005 = vmatprep.mubr.f32.mxu0 0.0
    %1006 = vmatmul.mubr.f32.gmra.mxu0 %v939
    %v1007 = vpop.f32.mrf.mxu0
    %v1008 = vadd.f32 0.0, %v1007
    %v1009 = vpop.f32.mrf.mxu0
    %1010 = vdwg.mxu0
    %v1012 = vrot.slane %v1008, 4
    %v1014 = vadd.f32 %v256, %v1012
    %v1015 = vxor.u32 %v1014, 2147483648
    %v1016 = vmul.f32 %v1015, 1.442695
    %v1017 = vpow.pop %v1016
    %v1018 = vadd.f32 %v1017, 1.0
    %v1019 = vrcp.pop %v1018
    %v1020 = vmul.f32 1.0, %v1019
    %v1021 = vadd.f32 %v1008, %v351
    %v1023 = vrot.slane %v1021, 4
    %1024 = vrot.lane.b32.xlu0 %v1023, 64
    %v1025 = vpop.permute.xlu0 %1024
    %v1027 = vmul.f32 %v1020, %v1025
    %1029 = vrot.lane.b32.xlu0 %v1027, 64
    %v1030 = vpop.permute.xlu0 %1029
    %v1032 = vadd.f32 %v256, %v1030
    %v1033 = vtanh.pop %v1032
    %v1034 = vsub.f32 1.0, %v1020
    %1036 = vrot.lane.b32.xlu0 %v1033, 96
    %v1037 = vpop.permute.xlu0 %1036
    %v1039 = vmul.f32 %v1034, %v1037
    %v1040 = vrot.slane %v930, 6
    %v1042 = vmul.f32 %v1020, %v1040
    %v1043 = vadd.f32 %v1039, %v1042
    %1045 = vrot.lane.b32.xlu0 %v1043, 96
    %v1046 = vpop.permute.xlu0 %1045
    %1048 = vst.msk [vmem:[#allocation2 + $0x8] sm:$0x30] %vm602, %v1046
    %v1049 = vrot.slane %v1043, 4
    %1050 = vrot.lane.b32.xlu0 %v1049, 96
    %v1051 = vpop.permute.xlu0 %1050
    %v1052 = vsel %vm264, %v1051, 0
    %1054 = vmatprep.subr.mxu0 0.0
    %1055 = vmatpush1.msra.mxu0 0.0
    %1056 = vmatprep.subr.mxu0 0.0
    %1057 = vmatpush1.msra.mxu0 0.0
    %1058 = vmatprep.subr.mxu0 0.0
    %1059 = vmatpush1.msra.mxu0 0.0
    %1060 = vmatprep.subr.mxu0 0.0
    %1061 = vmatpush1.msra.mxu0 0.0
    %1062 = vmatprep.subr.mxu0 0.0
    %1063 = vmatpush1.msra.mxu0 0.0
    %1064 = vmatprep.subr.mxu0 0.0
    %1065 = vmatpush1.msra.mxu0 0.0
    %1066 = vmatprep.subr.mxu0 0.0
    %1067 = vmatpush1.msra.mxu0 0.0
    %1068 = vmatprep.subr.mxu0 0.0
    %1069 = vmatpush1.msra.mxu0 0.0
    %1070 = vmatprep.subr.mxu0 0.0
    %1071 = vmatpush1.msra.mxu0 0.0
    %1072 = vmatprep.subr.mxu0 0.0
    %1073 = vmatpush1.msra.mxu0 0.0
    %1074 = vmatprep.subr.mxu0 0.0
    %1075 = vmatpush1.msra.mxu0 0.0
    %1076 = vmatprep.subr.mxu0 0.0
    %1077 = vmatpush1.msra.mxu0 0.0
    %1078 = vmatprep.subr.mxu0 0.0
    %1079 = vmatpush1.msra.mxu0 %v262
    %1080 = vmatprep.subr.mxu0 0.0
    %1081 = vmatpush1.msra.mxu0 %v261
    %1082 = vmatprep.subr.mxu0 0.0
    %1083 = vmatpush1.msra.mxu0 %v260
    %1084 = vmatprep.subr.mxu0 0.0
    %1085 = vmatpush1.msra.mxu0 %v259
    %1086 = vmatprep.subr.mxu0 0.0
    %1087 = vmatpush2.msra.mxu0 0.0
    %1088 = vmatprep.subr.mxu0 0.0
    %1089 = vmatpush2.msra.mxu0 0.0
    %1090 = vmatprep.subr.mxu0 0.0
    %1091 = vmatpush2.msra.mxu0 0.0
    %1092 = vmatprep.subr.mxu0 0.0
    %1093 = vmatpush2.msra.mxu0 0.0
    %1094 = vmatprep.subr.mxu0 0.0
    %1095 = vmatpush2.msra.mxu0 0.0
    %1096 = vmatprep.subr.mxu0 0.0
    %1097 = vmatpush2.msra.mxu0 0.0
    %1098 = vmatprep.subr.mxu0 0.0
    %1099 = vmatpush2.msra.mxu0 0.0
    %1100 = vmatprep.subr.mxu0 0.0
    %1101 = vmatpush2.msra.mxu0 0.0
    %1102 = vmatprep.subr.mxu0 0.0
    %1103 = vmatpush2.msra.mxu0 0.0
    %1104 = vmatprep.subr.mxu0 0.0
    %1105 = vmatpush2.msra.mxu0 0.0
    %1106 = vmatprep.subr.mxu0 0.0
    %1107 = vmatpush2.msra.mxu0 0.0
    %1108 = vmatprep.subr.mxu0 0.0
    %1109 = vmatpush2.msra.mxu0 0.0
    %1110 = vmatprep.subr.mxu0 0.0
    %1111 = vmatpush2.msra.mxu0 0.0
    %1112 = vmatprep.subr.mxu0 0.0
    %1113 = vmatpush2.msra.mxu0 0.0
    %1114 = vmatprep.subr.mxu0 0.0
    %1115 = vmatpush2.msra.mxu0 0.0
    %1116 = vmatprep.subr.mxu0 0.0
    %1117 = vmatpush2.msra.mxu0 0.0
    %1118 = vmatprep.mubr.f32.mxu0 0.0
    %1119 = vmatmul.mubr.f32.gmra.mxu0 %v1052
    %v1120 = vpop.f32.mrf.mxu0
    %v1121 = vadd.f32 0.0, %v1120
    %v1122 = vpop.f32.mrf.mxu0
    %1123 = vdwg.mxu0
    %v1125 = vrot.slane %v1121, 2
    %v1127 = vadd.f32 %v256, %v1125
    %v1128 = vxor.u32 %v1127, 2147483648
    %v1129 = vmul.f32 %v1128, 1.442695
    %v1130 = vpow.pop %v1129
    %v1131 = vadd.f32 %v1130, 1.0
    %v1132 = vrcp.pop %v1131
    %v1133 = vmul.f32 1.0, %v1132
    %v1134 = vadd.f32 %v1121, %v351
    %v1136 = vrot.slane %v1134, 2
    %1137 = vrot.lane.b32.xlu0 %v1136, 64
    %v1138 = vpop.permute.xlu0 %1137
    %v1140 = vmul.f32 %v1133, %v1138
    %1142 = vrot.lane.b32.xlu0 %v1140, 64
    %v1143 = vpop.permute.xlu0 %1142
    %v1145 = vadd.f32 %v256, %v1143
    %v1146 = vtanh.pop %v1145
    %v1147 = vsub.f32 1.0, %v1133
    %1149 = vrot.lane.b32.xlu0 %v1146, 96
    %v1150 = vpop.permute.xlu0 %1149
    %v1152 = vmul.f32 %v1147, %v1150
    %v1153 = vrot.slane %v1043, 6
    %v1155 = vmul.f32 %v1133, %v1153
    %v1156 = vadd.f32 %v1152, %v1155
    %1158 = vrot.lane.b32.xlu0 %v1156, 96
    %v1159 = vpop.permute.xlu0 %1158
    %1161 = vst.msk [vmem:[#allocation2 + $0x8] sm:$0xc0] %vm716, %v1159
    %v1162 = vld [vmem:[#allocation2] sm:$0xff]
    %v1163 = vld [vmem:[#allocation2 + $0x8] sm:$0xff]
    %v1164 = vld [vmem:[%s5] sm:$0xff]
    %v1165 = vld [vmem:[%s5 + $0x8] sm:$0xff]
    %v1166 = vld [vmem:[%s5 + $0x10] sm:$0xff]
    %v1167 = vld [vmem:[%s5 + $0x18] sm:$0xff]
    %v1168 = vld [vmem:[#allocation7] sm:$0x1]
    %v1170 = vlaneseq
    %v1171 = vshrl.u32 %v1170, 7
    %v1172 = vsub.s32 0, %v1171
    %v1173 = vrot.slane %v1168, %v1172
    %v1176 = vsel %vm264, %v1162, 0
    %v1179 = vsel %vm264, %v1163, 0
    %1181 = vmatprep.subr.mxu0 0.0
    %1182 = vmatpush1.msra.mxu0 0.0
    %1183 = vmatprep.subr.mxu0 0.0
    %1184 = vmatpush1.msra.mxu0 0.0
    %1185 = vmatprep.subr.mxu0 0.0
    %1186 = vmatpush1.msra.mxu0 0.0
    %1187 = vmatprep.subr.mxu0 0.0
    %1188 = vmatpush1.msra.mxu0 0.0
    %1189 = vmatprep.subr.mxu0 0.0
    %1190 = vmatpush1.msra.mxu0 0.0
    %1191 = vmatprep.subr.mxu0 0.0
    %1192 = vmatpush1.msra.mxu0 0.0
    %1193 = vmatprep.subr.mxu0 0.0
    %1194 = vmatpush1.msra.mxu0 0.0
    %1195 = vmatprep.subr.mxu0 0.0
    %1196 = vmatpush1.msra.mxu0 0.0
    %1197 = vmatprep.subr.mxu0 0.0
    %1198 = vmatpush1.msra.mxu0 0.0
    %1199 = vmatprep.subr.mxu0 0.0
    %1200 = vmatpush1.msra.mxu0 0.0
    %1201 = vmatprep.subr.mxu0 0.0
    %1202 = vmatpush1.msra.mxu0 0.0
    %1203 = vmatprep.subr.mxu0 0.0
    %1204 = vmatpush1.msra.mxu0 0.0
    %1205 = vmatprep.subr.mxu0 0.0
    %1206 = vmatpush1.msra.mxu0 %v1167
    %1207 = vmatprep.subr.mxu0 0.0
    %1208 = vmatpush1.msra.mxu0 %v1166
    %1209 = vmatprep.subr.mxu0 0.0
    %1210 = vmatpush1.msra.mxu0 %v1165
    %1211 = vmatprep.subr.mxu0 0.0
    %1212 = vmatpush1.msra.mxu0 %v1164
    %1213 = vmatprep.subr.mxu0 0.0
    %1214 = vmatpush2.msra.mxu0 0.0
    %1215 = vmatprep.subr.mxu0 0.0
    %1216 = vmatpush2.msra.mxu0 0.0
    %1217 = vmatprep.subr.mxu0 0.0
    %1218 = vmatpush2.msra.mxu0 0.0
    %1219 = vmatprep.subr.mxu0 0.0
    %1220 = vmatpush2.msra.mxu0 0.0
    %1221 = vmatprep.subr.mxu0 0.0
    %1222 = vmatpush2.msra.mxu0 0.0
    %1223 = vmatprep.subr.mxu0 0.0
    %1224 = vmatpush2.msra.mxu0 0.0
    %1225 = vmatprep.subr.mxu0 0.0
    %1226 = vmatpush2.msra.mxu0 0.0
    %1227 = vmatprep.subr.mxu0 0.0
    %1228 = vmatpush2.msra.mxu0 0.0
    %1229 = vmatprep.subr.mxu0 0.0
    %1230 = vmatpush2.msra.mxu0 0.0
    %1231 = vmatprep.subr.mxu0 0.0
    %1232 = vmatpush2.msra.mxu0 0.0
    %1233 = vmatprep.subr.mxu0 0.0
    %1234 = vmatpush2.msra.mxu0 0.0
    %1235 = vmatprep.subr.mxu0 0.0
    %1236 = vmatpush2.msra.mxu0 0.0
    %1237 = vmatprep.subr.mxu0 0.0
    %1238 = vmatpush2.msra.mxu0 0.0
    %1239 = vmatprep.subr.mxu0 0.0
    %1240 = vmatpush2.msra.mxu0 0.0
    %1241 = vmatprep.subr.mxu0 0.0
    %1242 = vmatpush2.msra.mxu0 0.0
    %1243 = vmatprep.subr.mxu0 0.0
    %1244 = vmatpush2.msra.mxu0 0.0
    %1245 = vmatprep.mubr.f32.mxu0 0.0
    %1246 = vmatmul.mubr.f32.gmra.mxu0 %v1176
    %v1247 = vpop.f32.mrf.mxu0
    %v1248 = vadd.f32 %v1173, %v1247
    %v1249 = vpop.f32.mrf.mxu0
    %1250 = vmatprep.mubr.f32.mxu0 0.0
    %1251 = vmatmul.mubr.f32.gmra.mxu0 %v1179
    %v1252 = vpop.f32.mrf.mxu0
    %v1253 = vadd.f32 %v1173, %v1252
    %v1254 = vpop.f32.mrf.mxu0
    %1255 = vdwg.mxu0
    %v1256 = vld [vmem:[%s6] sm:$0xff]
    %v1257 = vld [vmem:[%s6 + $0x8] sm:$0xff]
    %v1258 = vld [vmem:[%s6 + $0x10] sm:$0xff]
    %v1259 = vld [vmem:[%s6 + $0x18] sm:$0xff]
    %v1260 = vld [vmem:[#allocation8] sm:$0x1]
    %1261 = vmatprep.subr.mxu0 0.0
    %1262 = vmatpush1.msra.mxu0 0.0
    %1263 = vmatprep.subr.mxu0 0.0
    %1264 = vmatpush1.msra.mxu0 0.0
    %1265 = vmatprep.subr.mxu0 0.0
    %1266 = vmatpush1.msra.mxu0 0.0
    %1267 = vmatprep.subr.mxu0 0.0
    %1268 = vmatpush1.msra.mxu0 0.0
    %1269 = vmatprep.subr.mxu0 0.0
    %1270 = vmatpush1.msra.mxu0 0.0
    %1271 = vmatprep.subr.mxu0 0.0
    %1272 = vmatpush1.msra.mxu0 0.0
    %1273 = vmatprep.subr.mxu0 0.0
    %1274 = vmatpush1.msra.mxu0 0.0
    %1275 = vmatprep.subr.mxu0 0.0
    %1276 = vmatpush1.msra.mxu0 0.0
    %1277 = vmatprep.subr.mxu0 0.0
    %1278 = vmatpush1.msra.mxu0 0.0
    %1279 = vmatprep.subr.mxu0 0.0
    %1280 = vmatpush1.msra.mxu0 0.0
    %1281 = vmatprep.subr.mxu0 0.0
    %1282 = vmatpush1.msra.mxu0 0.0
    %1283 = vmatprep.subr.mxu0 0.0
    %1284 = vmatpush1.msra.mxu0 0.0
    %1285 = vmatprep.subr.mxu0 0.0
    %1286 = vmatpush1.msra.mxu0 %v1259
    %1287 = vmatprep.subr.mxu0 0.0
    %1288 = vmatpush1.msra.mxu0 %v1258
    %1289 = vmatprep.subr.mxu0 0.0
    %1290 = vmatpush1.msra.mxu0 %v1257
    %1291 = vmatprep.subr.mxu0 0.0
    %1292 = vmatpush1.msra.mxu0 %v1256
    %1293 = vmatprep.subr.mxu0 0.0
    %1294 = vmatpush2.msra.mxu0 0.0
    %1295 = vmatprep.subr.mxu0 0.0
    %1296 = vmatpush2.msra.mxu0 0.0
    %1297 = vmatprep.subr.mxu0 0.0
    %1298 = vmatpush2.msra.mxu0 0.0
    %1299 = vmatprep.subr.mxu0 0.0
    %1300 = vmatpush2.msra.mxu0 0.0
    %1301 = vmatprep.subr.mxu0 0.0
    %1302 = vmatpush2.msra.mxu0 0.0
    %1303 = vmatprep.subr.mxu0 0.0
    %1304 = vmatpush2.msra.mxu0 0.0
    %1305 = vmatprep.subr.mxu0 0.0
    %1306 = vmatpush2.msra.mxu0 0.0
    %1307 = vmatprep.subr.mxu0 0.0
    %1308 = vmatpush2.msra.mxu0 0.0
    %1309 = vmatprep.subr.mxu0 0.0
    %1310 = vmatpush2.msra.mxu0 0.0
    %1311 = vmatprep.subr.mxu0 0.0
    %1312 = vmatpush2.msra.mxu0 0.0
    %1313 = vmatprep.subr.mxu0 0.0
    %1314 = vmatpush2.msra.mxu0 0.0
    %1315 = vmatprep.subr.mxu0 0.0
    %1316 = vmatpush2.msra.mxu0 0.0
    %1317 = vmatprep.subr.mxu0 0.0
    %1318 = vmatpush2.msra.mxu0 0.0
    %1319 = vmatprep.subr.mxu0 0.0
    %1320 = vmatpush2.msra.mxu0 0.0
    %1321 = vmatprep.subr.mxu0 0.0
    %1322 = vmatpush2.msra.mxu0 0.0
    %1323 = vmatprep.subr.mxu0 0.0
    %1324 = vmatpush2.msra.mxu0 0.0
    %1325 = vmatprep.mubr.f32.mxu0 0.0
    %1326 = vmatmul.mubr.f32.gmra.mxu0 %v266
    %v1327 = vpop.f32.mrf.mxu0
    %v1328 = vadd.f32 0.0, %v1327
    %v1329 = vpop.f32.mrf.mxu0
    %1330 = vdwg.mxu0
    %v1331 = vadd.f32 %v1248, %v1328
    %v1332 = vxor.u32 %v1331, 2147483648
    %v1333 = vmul.f32 %v1332, 1.442695
    %v1334 = vpow.pop %v1333
    %v1335 = vadd.f32 %v1334, 1.0
    %v1336 = vrcp.pop %v1335
    %v1337 = vmul.f32 1.0, %v1336
    %v1339 = vlaneseq
    %v1340 = vshrl.u32 %v1339, 7
    %v1341 = vsub.s32 0, %v1340
    %v1342 = vrot.slane %v1260, %v1341
    %1343 = vrot.lane.b32.xlu0 %v1342, 64
    %v1344 = vpop.permute.xlu0 %1343
    %v1346 = vadd.f32 %v1328, %v1344
    %1348 = vrot.lane.b32.xlu0 %v1346, 64
    %v1349 = vpop.permute.xlu0 %1348
    %v1351 = vmul.f32 %v1337, %v1349
    %1353 = vrot.lane.b32.xlu0 %v1351, 64
    %v1354 = vpop.permute.xlu0 %1353
    %v1356 = vadd.f32 %v1248, %v1354
    %v1357 = vtanh.pop %v1356
    %v1358 = vsub.f32 1.0, %v1337
    %1360 = vrot.lane.b32.xlu0 %v1357, 96
    %v1361 = vpop.permute.xlu0 %1360
    %v1363 = vmul.f32 %v1358, %v1361
    %v1364 = vmul.f32 %v1337, 0.0
    %v1365 = vadd.f32 %v1363, %v1364
    %1367 = vrot.lane.b32.xlu0 %v1365, 96
    %v1368 = vpop.permute.xlu0 %1367
    %1370 = vst.msk [vmem:[#allocation2] sm:$0x3] %vm377, %v1368
    %v1371 = vsel %vm264, %v1368, 0
    %1373 = vmatprep.subr.mxu0 0.0
    %1374 = vmatpush1.msra.mxu0 0.0
    %1375 = vmatprep.subr.mxu0 0.0
    %1376 = vmatpush1.msra.mxu0 0.0
    %1377 = vmatprep.subr.mxu0 0.0
    %1378 = vmatpush1.msra.mxu0 0.0
    %1379 = vmatprep.subr.mxu0 0.0
    %1380 = vmatpush1.msra.mxu0 0.0
    %1381 = vmatprep.subr.mxu0 0.0
    %1382 = vmatpush1.msra.mxu0 0.0
    %1383 = vmatprep.subr.mxu0 0.0
    %1384 = vmatpush1.msra.mxu0 0.0
    %1385 = vmatprep.subr.mxu0 0.0
    %1386 = vmatpush1.msra.mxu0 0.0
    %1387 = vmatprep.subr.mxu0 0.0
    %1388 = vmatpush1.msra.mxu0 0.0
    %1389 = vmatprep.subr.mxu0 0.0
    %1390 = vmatpush1.msra.mxu0 0.0
    %1391 = vmatprep.subr.mxu0 0.0
    %1392 = vmatpush1.msra.mxu0 0.0
    %1393 = vmatprep.subr.mxu0 0.0
    %1394 = vmatpush1.msra.mxu0 0.0
    %1395 = vmatprep.subr.mxu0 0.0
    %1396 = vmatpush1.msra.mxu0 0.0
    %1397 = vmatprep.subr.mxu0 0.0
    %1398 = vmatpush1.msra.mxu0 %v1259
    %1399 = vmatprep.subr.mxu0 0.0
    %1400 = vmatpush1.msra.mxu0 %v1258
    %1401 = vmatprep.subr.mxu0 0.0
    %1402 = vmatpush1.msra.mxu0 %v1257
    %1403 = vmatprep.subr.mxu0 0.0
    %1404 = vmatpush1.msra.mxu0 %v1256
    %1405 = vmatprep.subr.mxu0 0.0
    %1406 = vmatpush2.msra.mxu0 0.0
    %1407 = vmatprep.subr.mxu0 0.0
    %1408 = vmatpush2.msra.mxu0 0.0
    %1409 = vmatprep.subr.mxu0 0.0
    %1410 = vmatpush2.msra.mxu0 0.0
    %1411 = vmatprep.subr.mxu0 0.0
    %1412 = vmatpush2.msra.mxu0 0.0
    %1413 = vmatprep.subr.mxu0 0.0
    %1414 = vmatpush2.msra.mxu0 0.0
    %1415 = vmatprep.subr.mxu0 0.0
    %1416 = vmatpush2.msra.mxu0 0.0
    %1417 = vmatprep.subr.mxu0 0.0
    %1418 = vmatpush2.msra.mxu0 0.0
    %1419 = vmatprep.subr.mxu0 0.0
    %1420 = vmatpush2.msra.mxu0 0.0
    %1421 = vmatprep.subr.mxu0 0.0
    %1422 = vmatpush2.msra.mxu0 0.0
    %1423 = vmatprep.subr.mxu0 0.0
    %1424 = vmatpush2.msra.mxu0 0.0
    %1425 = vmatprep.subr.mxu0 0.0
    %1426 = vmatpush2.msra.mxu0 0.0
    %1427 = vmatprep.subr.mxu0 0.0
    %1428 = vmatpush2.msra.mxu0 0.0
    %1429 = vmatprep.subr.mxu0 0.0
    %1430 = vmatpush2.msra.mxu0 0.0
    %1431 = vmatprep.subr.mxu0 0.0
    %1432 = vmatpush2.msra.mxu0 0.0
    %1433 = vmatprep.subr.mxu0 0.0
    %1434 = vmatpush2.msra.mxu0 0.0
    %1435 = vmatprep.subr.mxu0 0.0
    %1436 = vmatpush2.msra.mxu0 0.0
    %1437 = vmatprep.mubr.f32.mxu0 0.0
    %1438 = vmatmul.mubr.f32.gmra.mxu0 %v1371
    %v1439 = vpop.f32.mrf.mxu0
    %v1440 = vadd.f32 0.0, %v1439
    %v1441 = vpop.f32.mrf.mxu0
    %1442 = vdwg.mxu0
    %v1444 = vrot.slane %v1440, 6
    %v1446 = vadd.f32 %v1248, %v1444
    %v1447 = vxor.u32 %v1446, 2147483648
    %v1448 = vmul.f32 %v1447, 1.442695
    %v1449 = vpow.pop %v1448
    %v1450 = vadd.f32 %v1449, 1.0
    %v1451 = vrcp.pop %v1450
    %v1452 = vmul.f32 1.0, %v1451
    %v1453 = vadd.f32 %v1440, %v1344
    %v1455 = vrot.slane %v1453, 6
    %1456 = vrot.lane.b32.xlu0 %v1455, 64
    %v1457 = vpop.permute.xlu0 %1456
    %v1459 = vmul.f32 %v1452, %v1457
    %1461 = vrot.lane.b32.xlu0 %v1459, 64
    %v1462 = vpop.permute.xlu0 %1461
    %v1464 = vadd.f32 %v1248, %v1462
    %v1465 = vtanh.pop %v1464
    %v1466 = vsub.f32 1.0, %v1452
    %1468 = vrot.lane.b32.xlu0 %v1465, 96
    %v1469 = vpop.permute.xlu0 %1468
    %v1471 = vmul.f32 %v1466, %v1469
    %v1472 = vrot.slane %v1365, 6
    %v1474 = vmul.f32 %v1452, %v1472
    %v1475 = vadd.f32 %v1471, %v1474
    %1477 = vrot.lane.b32.xlu0 %v1475, 96
    %v1478 = vpop.permute.xlu0 %1477
    %1480 = vst.msk [vmem:[#allocation2] sm:$0xc] %vm488, %v1478
    %v1481 = vrot.slane %v1475, 2
    %1482 = vrot.lane.b32.xlu0 %v1481, 96
    %v1483 = vpop.permute.xlu0 %1482
    %v1484 = vsel %vm264, %v1483, 0
    %1486 = vmatprep.subr.mxu0 0.0
    %1487 = vmatpush1.msra.mxu0 0.0
    %1488 = vmatprep.subr.mxu0 0.0
    %1489 = vmatpush1.msra.mxu0 0.0
    %1490 = vmatprep.subr.mxu0 0.0
    %1491 = vmatpush1.msra.mxu0 0.0
    %1492 = vmatprep.subr.mxu0 0.0
    %1493 = vmatpush1.msra.mxu0 0.0
    %1494 = vmatprep.subr.mxu0 0.0
    %1495 = vmatpush1.msra.mxu0 0.0
    %1496 = vmatprep.subr.mxu0 0.0
    %1497 = vmatpush1.msra.mxu0 0.0
    %1498 = vmatprep.subr.mxu0 0.0
    %1499 = vmatpush1.msra.mxu0 0.0
    %1500 = vmatprep.subr.mxu0 0.0
    %1501 = vmatpush1.msra.mxu0 0.0
    %1502 = vmatprep.subr.mxu0 0.0
    %1503 = vmatpush1.msra.mxu0 0.0
    %1504 = vmatprep.subr.mxu0 0.0
    %1505 = vmatpush1.msra.mxu0 0.0
    %1506 = vmatprep.subr.mxu0 0.0
    %1507 = vmatpush1.msra.mxu0 0.0
    %1508 = vmatprep.subr.mxu0 0.0
    %1509 = vmatpush1.msra.mxu0 0.0
    %1510 = vmatprep.subr.mxu0 0.0
    %1511 = vmatpush1.msra.mxu0 %v1259
    %1512 = vmatprep.subr.mxu0 0.0
    %1513 = vmatpush1.msra.mxu0 %v1258
    %1514 = vmatprep.subr.mxu0 0.0
    %1515 = vmatpush1.msra.mxu0 %v1257
    %1516 = vmatprep.subr.mxu0 0.0
    %1517 = vmatpush1.msra.mxu0 %v1256
    %1518 = vmatprep.subr.mxu0 0.0
    %1519 = vmatpush2.msra.mxu0 0.0
    %1520 = vmatprep.subr.mxu0 0.0
    %1521 = vmatpush2.msra.mxu0 0.0
    %1522 = vmatprep.subr.mxu0 0.0
    %1523 = vmatpush2.msra.mxu0 0.0
    %1524 = vmatprep.subr.mxu0 0.0
    %1525 = vmatpush2.msra.mxu0 0.0
    %1526 = vmatprep.subr.mxu0 0.0
    %1527 = vmatpush2.msra.mxu0 0.0
    %1528 = vmatprep.subr.mxu0 0.0
    %1529 = vmatpush2.msra.mxu0 0.0
    %1530 = vmatprep.subr.mxu0 0.0
    %1531 = vmatpush2.msra.mxu0 0.0
    %1532 = vmatprep.subr.mxu0 0.0
    %1533 = vmatpush2.msra.mxu0 0.0
    %1534 = vmatprep.subr.mxu0 0.0
    %1535 = vmatpush2.msra.mxu0 0.0
    %1536 = vmatprep.subr.mxu0 0.0
    %1537 = vmatpush2.msra.mxu0 0.0
    %1538 = vmatprep.subr.mxu0 0.0
    %1539 = vmatpush2.msra.mxu0 0.0
    %1540 = vmatprep.subr.mxu0 0.0
    %1541 = vmatpush2.msra.mxu0 0.0
    %1542 = vmatprep.subr.mxu0 0.0
    %1543 = vmatpush2.msra.mxu0 0.0
    %1544 = vmatprep.subr.mxu0 0.0
    %1545 = vmatpush2.msra.mxu0 0.0
    %1546 = vmatprep.subr.mxu0 0.0
    %1547 = vmatpush2.msra.mxu0 0.0
    %1548 = vmatprep.subr.mxu0 0.0
    %1549 = vmatpush2.msra.mxu0 0.0
    %1550 = vmatprep.mubr.f32.mxu0 0.0
    %1551 = vmatmul.mubr.f32.gmra.mxu0 %v1484
    %v1552 = vpop.f32.mrf.mxu0
    %v1553 = vadd.f32 0.0, %v1552
    %v1554 = vpop.f32.mrf.mxu0
    %1555 = vdwg.mxu0
    %v1557 = vrot.slane %v1553, 4
    %v1559 = vadd.f32 %v1248, %v1557
    %v1560 = vxor.u32 %v1559, 2147483648
    %v1561 = vmul.f32 %v1560, 1.442695
    %v1562 = vpow.pop %v1561
    %v1563 = vadd.f32 %v1562, 1.0
    %v1564 = vrcp.pop %v1563
    %v1565 = vmul.f32 1.0, %v1564
    %v1566 = vadd.f32 %v1553, %v1344
    %v1568 = vrot.slane %v1566, 4
    %1569 = vrot.lane.b32.xlu0 %v1568, 64
    %v1570 = vpop.permute.xlu0 %1569
    %v1572 = vmul.f32 %v1565, %v1570
    %1574 = vrot.lane.b32.xlu0 %v1572, 64
    %v1575 = vpop.permute.xlu0 %1574
    %v1577 = vadd.f32 %v1248, %v1575
    %v1578 = vtanh.pop %v1577
    %v1579 = vsub.f32 1.0, %v1565
    %1581 = vrot.lane.b32.xlu0 %v1578, 96
    %v1582 = vpop.permute.xlu0 %1581
    %v1584 = vmul.f32 %v1579, %v1582
    %v1585 = vrot.slane %v1475, 6
    %v1587 = vmul.f32 %v1565, %v1585
    %v1588 = vadd.f32 %v1584, %v1587
    %1590 = vrot.lane.b32.xlu0 %v1588, 96
    %v1591 = vpop.permute.xlu0 %1590
    %1593 = vst.msk [vmem:[#allocation2] sm:$0x30] %vm602, %v1591
    %v1594 = vrot.slane %v1588, 4
    %1595 = vrot.lane.b32.xlu0 %v1594, 96
    %v1596 = vpop.permute.xlu0 %1595
    %v1597 = vsel %vm264, %v1596, 0
    %1599 = vmatprep.subr.mxu0 0.0
    %1600 = vmatpush1.msra.mxu0 0.0
    %1601 = vmatprep.subr.mxu0 0.0
    %1602 = vmatpush1.msra.mxu0 0.0
    %1603 = vmatprep.subr.mxu0 0.0
    %1604 = vmatpush1.msra.mxu0 0.0
    %1605 = vmatprep.subr.mxu0 0.0
    %1606 = vmatpush1.msra.mxu0 0.0
    %1607 = vmatprep.subr.mxu0 0.0
    %1608 = vmatpush1.msra.mxu0 0.0
    %1609 = vmatprep.subr.mxu0 0.0
    %1610 = vmatpush1.msra.mxu0 0.0
    %1611 = vmatprep.subr.mxu0 0.0
    %1612 = vmatpush1.msra.mxu0 0.0
    %1613 = vmatprep.subr.mxu0 0.0
    %1614 = vmatpush1.msra.mxu0 0.0
    %1615 = vmatprep.subr.mxu0 0.0
    %1616 = vmatpush1.msra.mxu0 0.0
    %1617 = vmatprep.subr.mxu0 0.0
    %1618 = vmatpush1.msra.mxu0 0.0
    %1619 = vmatprep.subr.mxu0 0.0
    %1620 = vmatpush1.msra.mxu0 0.0
    %1621 = vmatprep.subr.mxu0 0.0
    %1622 = vmatpush1.msra.mxu0 0.0
    %1623 = vmatprep.subr.mxu0 0.0
    %1624 = vmatpush1.msra.mxu0 %v1259
    %1625 = vmatprep.subr.mxu0 0.0
    %1626 = vmatpush1.msra.mxu0 %v1258
    %1627 = vmatprep.subr.mxu0 0.0
    %1628 = vmatpush1.msra.mxu0 %v1257
    %1629 = vmatprep.subr.mxu0 0.0
    %1630 = vmatpush1.msra.mxu0 %v1256
    %1631 = vmatprep.subr.mxu0 0.0
    %1632 = vmatpush2.msra.mxu0 0.0
    %1633 = vmatprep.subr.mxu0 0.0
    %1634 = vmatpush2.msra.mxu0 0.0
    %1635 = vmatprep.subr.mxu0 0.0
    %1636 = vmatpush2.msra.mxu0 0.0
    %1637 = vmatprep.subr.mxu0 0.0
    %1638 = vmatpush2.msra.mxu0 0.0
    %1639 = vmatprep.subr.mxu0 0.0
    %1640 = vmatpush2.msra.mxu0 0.0
    %1641 = vmatprep.subr.mxu0 0.0
    %1642 = vmatpush2.msra.mxu0 0.0
    %1643 = vmatprep.subr.mxu0 0.0
    %1644 = vmatpush2.msra.mxu0 0.0
    %1645 = vmatprep.subr.mxu0 0.0
    %1646 = vmatpush2.msra.mxu0 0.0
    %1647 = vmatprep.subr.mxu0 0.0
    %1648 = vmatpush2.msra.mxu0 0.0
    %1649 = vmatprep.subr.mxu0 0.0
    %1650 = vmatpush2.msra.mxu0 0.0
    %1651 = vmatprep.subr.mxu0 0.0
    %1652 = vmatpush2.msra.mxu0 0.0
    %1653 = vmatprep.subr.mxu0 0.0
    %1654 = vmatpush2.msra.mxu0 0.0
    %1655 = vmatprep.subr.mxu0 0.0
    %1656 = vmatpush2.msra.mxu0 0.0
    %1657 = vmatprep.subr.mxu0 0.0
    %1658 = vmatpush2.msra.mxu0 0.0
    %1659 = vmatprep.subr.mxu0 0.0
    %1660 = vmatpush2.msra.mxu0 0.0
    %1661 = vmatprep.subr.mxu0 0.0
    %1662 = vmatpush2.msra.mxu0 0.0
    %1663 = vmatprep.mubr.f32.mxu0 0.0
    %1664 = vmatmul.mubr.f32.gmra.mxu0 %v1597
    %v1665 = vpop.f32.mrf.mxu0
    %v1666 = vadd.f32 0.0, %v1665
    %v1667 = vpop.f32.mrf.mxu0
    %1668 = vdwg.mxu0
    %v1670 = vrot.slane %v1666, 2
    %v1672 = vadd.f32 %v1248, %v1670
    %v1673 = vxor.u32 %v1672, 2147483648
    %v1674 = vmul.f32 %v1673, 1.442695
    %v1675 = vpow.pop %v1674
    %v1676 = vadd.f32 %v1675, 1.0
    %v1677 = vrcp.pop %v1676
    %v1678 = vmul.f32 1.0, %v1677
    %v1679 = vadd.f32 %v1666, %v1344
    %v1681 = vrot.slane %v1679, 2
    %1682 = vrot.lane.b32.xlu0 %v1681, 64
    %v1683 = vpop.permute.xlu0 %1682
    %v1685 = vmul.f32 %v1678, %v1683
    %1687 = vrot.lane.b32.xlu0 %v1685, 64
    %v1688 = vpop.permute.xlu0 %1687
    %v1690 = vadd.f32 %v1248, %v1688
    %v1691 = vtanh.pop %v1690
    %v1692 = vsub.f32 1.0, %v1678
    %1694 = vrot.lane.b32.xlu0 %v1691, 96
    %v1695 = vpop.permute.xlu0 %1694
    %v1697 = vmul.f32 %v1692, %v1695
    %v1698 = vrot.slane %v1588, 6
    %v1700 = vmul.f32 %v1678, %v1698
    %v1701 = vadd.f32 %v1697, %v1700
    %1703 = vrot.lane.b32.xlu0 %v1701, 96
    %v1704 = vpop.permute.xlu0 %1703
    %1706 = vst.msk [vmem:[#allocation2] sm:$0xc0] %vm716, %v1704
    %v1707 = vrot.slane %v1701, 6
    %1708 = vrot.lane.b32.xlu0 %v1707, 96
    %v1709 = vpop.permute.xlu0 %1708
    %v1710 = vsel %vm264, %v1709, 0
    %1712 = vmatprep.subr.mxu0 0.0
    %1713 = vmatpush1.msra.mxu0 0.0
    %1714 = vmatprep.subr.mxu0 0.0
    %1715 = vmatpush1.msra.mxu0 0.0
    %1716 = vmatprep.subr.mxu0 0.0
    %1717 = vmatpush1.msra.mxu0 0.0
    %1718 = vmatprep.subr.mxu0 0.0
    %1719 = vmatpush1.msra.mxu0 0.0
    %1720 = vmatprep.subr.mxu0 0.0
    %1721 = vmatpush1.msra.mxu0 0.0
    %1722 = vmatprep.subr.mxu0 0.0
    %1723 = vmatpush1.msra.mxu0 0.0
    %1724 = vmatprep.subr.mxu0 0.0
    %1725 = vmatpush1.msra.mxu0 0.0
    %1726 = vmatprep.subr.mxu0 0.0
    %1727 = vmatpush1.msra.mxu0 0.0
    %1728 = vmatprep.subr.mxu0 0.0
    %1729 = vmatpush1.msra.mxu0 0.0
    %1730 = vmatprep.subr.mxu0 0.0
    %1731 = vmatpush1.msra.mxu0 0.0
    %1732 = vmatprep.subr.mxu0 0.0
    %1733 = vmatpush1.msra.mxu0 0.0
    %1734 = vmatprep.subr.mxu0 0.0
    %1735 = vmatpush1.msra.mxu0 0.0
    %1736 = vmatprep.subr.mxu0 0.0
    %1737 = vmatpush1.msra.mxu0 %v1259
    %1738 = vmatprep.subr.mxu0 0.0
    %1739 = vmatpush1.msra.mxu0 %v1258
    %1740 = vmatprep.subr.mxu0 0.0
    %1741 = vmatpush1.msra.mxu0 %v1257
    %1742 = vmatprep.subr.mxu0 0.0
    %1743 = vmatpush1.msra.mxu0 %v1256
    %1744 = vmatprep.subr.mxu0 0.0
    %1745 = vmatpush2.msra.mxu0 0.0
    %1746 = vmatprep.subr.mxu0 0.0
    %1747 = vmatpush2.msra.mxu0 0.0
    %1748 = vmatprep.subr.mxu0 0.0
    %1749 = vmatpush2.msra.mxu0 0.0
    %1750 = vmatprep.subr.mxu0 0.0
    %1751 = vmatpush2.msra.mxu0 0.0
    %1752 = vmatprep.subr.mxu0 0.0
    %1753 = vmatpush2.msra.mxu0 0.0
    %1754 = vmatprep.subr.mxu0 0.0
    %1755 = vmatpush2.msra.mxu0 0.0
    %1756 = vmatprep.subr.mxu0 0.0
    %1757 = vmatpush2.msra.mxu0 0.0
    %1758 = vmatprep.subr.mxu0 0.0
    %1759 = vmatpush2.msra.mxu0 0.0
    %1760 = vmatprep.subr.mxu0 0.0
    %1761 = vmatpush2.msra.mxu0 0.0
    %1762 = vmatprep.subr.mxu0 0.0
    %1763 = vmatpush2.msra.mxu0 0.0
    %1764 = vmatprep.subr.mxu0 0.0
    %1765 = vmatpush2.msra.mxu0 0.0
    %1766 = vmatprep.subr.mxu0 0.0
    %1767 = vmatpush2.msra.mxu0 0.0
    %1768 = vmatprep.subr.mxu0 0.0
    %1769 = vmatpush2.msra.mxu0 0.0
    %1770 = vmatprep.subr.mxu0 0.0
    %1771 = vmatpush2.msra.mxu0 0.0
    %1772 = vmatprep.subr.mxu0 0.0
    %1773 = vmatpush2.msra.mxu0 0.0
    %1774 = vmatprep.subr.mxu0 0.0
    %1775 = vmatpush2.msra.mxu0 0.0
    %1776 = vmatprep.mubr.f32.mxu0 0.0
    %1777 = vmatmul.mubr.f32.gmra.mxu0 %v1710
    %v1778 = vpop.f32.mrf.mxu0
    %v1779 = vadd.f32 0.0, %v1778
    %v1780 = vpop.f32.mrf.mxu0
    %1781 = vdwg.mxu0
    %v1782 = vadd.f32 %v1253, %v1779
    %v1783 = vxor.u32 %v1782, 2147483648
    %v1784 = vmul.f32 %v1783, 1.442695
    %v1785 = vpow.pop %v1784
    %v1786 = vadd.f32 %v1785, 1.0
    %v1787 = vrcp.pop %v1786
    %v1788 = vmul.f32 1.0, %v1787
    %v1789 = vadd.f32 %v1779, %v1344
    %1791 = vrot.lane.b32.xlu0 %v1789, 64
    %v1792 = vpop.permute.xlu0 %1791
    %v1794 = vmul.f32 %v1788, %v1792
    %1796 = vrot.lane.b32.xlu0 %v1794, 64
    %v1797 = vpop.permute.xlu0 %1796
    %v1799 = vadd.f32 %v1253, %v1797
    %v1800 = vtanh.pop %v1799
    %v1801 = vsub.f32 1.0, %v1788
    %1803 = vrot.lane.b32.xlu0 %v1800, 96
    %v1804 = vpop.permute.xlu0 %1803
    %v1806 = vmul.f32 %v1801, %v1804
    %v1808 = vmul.f32 %v1788, %v1707
    %v1809 = vadd.f32 %v1806, %v1808
    %1811 = vrot.lane.b32.xlu0 %v1809, 96
    %v1812 = vpop.permute.xlu0 %1811
    %1814 = vst.msk [vmem:[#allocation2 + $0x8] sm:$0x3] %vm377, %v1812
    %v1815 = vsel %vm264, %v1812, 0
    %1817 = vmatprep.subr.mxu0 0.0
    %1818 = vmatpush1.msra.mxu0 0.0
    %1819 = vmatprep.subr.mxu0 0.0
    %1820 = vmatpush1.msra.mxu0 0.0
    %1821 = vmatprep.subr.mxu0 0.0
    %1822 = vmatpush1.msra.mxu0 0.0
    %1823 = vmatprep.subr.mxu0 0.0
    %1824 = vmatpush1.msra.mxu0 0.0
    %1825 = vmatprep.subr.mxu0 0.0
    %1826 = vmatpush1.msra.mxu0 0.0
    %1827 = vmatprep.subr.mxu0 0.0
    %1828 = vmatpush1.msra.mxu0 0.0
    %1829 = vmatprep.subr.mxu0 0.0
    %1830 = vmatpush1.msra.mxu0 0.0
    %1831 = vmatprep.subr.mxu0 0.0
    %1832 = vmatpush1.msra.mxu0 0.0
    %1833 = vmatprep.subr.mxu0 0.0
    %1834 = vmatpush1.msra.mxu0 0.0
    %1835 = vmatprep.subr.mxu0 0.0
    %1836 = vmatpush1.msra.mxu0 0.0
    %1837 = vmatprep.subr.mxu0 0.0
    %1838 = vmatpush1.msra.mxu0 0.0
    %1839 = vmatprep.subr.mxu0 0.0
    %1840 = vmatpush1.msra.mxu0 0.0
    %1841 = vmatprep.subr.mxu0 0.0
    %1842 = vmatpush1.msra.mxu0 %v1259
    %1843 = vmatprep.subr.mxu0 0.0
    %1844 = vmatpush1.msra.mxu0 %v1258
    %1845 = vmatprep.subr.mxu0 0.0
    %1846 = vmatpush1.msra.mxu0 %v1257
    %1847 = vmatprep.subr.mxu0 0.0
    %1848 = vmatpush1.msra.mxu0 %v1256
    %1849 = vmatprep.subr.mxu0 0.0
    %1850 = vmatpush2.msra.mxu0 0.0
    %1851 = vmatprep.subr.mxu0 0.0
    %1852 = vmatpush2.msra.mxu0 0.0
    %1853 = vmatprep.subr.mxu0 0.0
    %1854 = vmatpush2.msra.mxu0 0.0
    %1855 = vmatprep.subr.mxu0 0.0
    %1856 = vmatpush2.msra.mxu0 0.0
    %1857 = vmatprep.subr.mxu0 0.0
    %1858 = vmatpush2.msra.mxu0 0.0
    %1859 = vmatprep.subr.mxu0 0.0
    %1860 = vmatpush2.msra.mxu0 0.0
    %1861 = vmatprep.subr.mxu0 0.0
    %1862 = vmatpush2.msra.mxu0 0.0
    %1863 = vmatprep.subr.mxu0 0.0
    %1864 = vmatpush2.msra.mxu0 0.0
    %1865 = vmatprep.subr.mxu0 0.0
    %1866 = vmatpush2.msra.mxu0 0.0
    %1867 = vmatprep.subr.mxu0 0.0
    %1868 = vmatpush2.msra.mxu0 0.0
    %1869 = vmatprep.subr.mxu0 0.0
    %1870 = vmatpush2.msra.mxu0 0.0
    %1871 = vmatprep.subr.mxu0 0.0
    %1872 = vmatpush2.msra.mxu0 0.0
    %1873 = vmatprep.subr.mxu0 0.0
    %1874 = vmatpush2.msra.mxu0 0.0
    %1875 = vmatprep.subr.mxu0 0.0
    %1876 = vmatpush2.msra.mxu0 0.0
    %1877 = vmatprep.subr.mxu0 0.0
    %1878 = vmatpush2.msra.mxu0 0.0
    %1879 = vmatprep.subr.mxu0 0.0
    %1880 = vmatpush2.msra.mxu0 0.0
    %1881 = vmatprep.mubr.f32.mxu0 0.0
    %1882 = vmatmul.mubr.f32.gmra.mxu0 %v1815
    %v1883 = vpop.f32.mrf.mxu0
    %v1884 = vadd.f32 0.0, %v1883
    %v1885 = vpop.f32.mrf.mxu0
    %1886 = vdwg.mxu0
    %v1888 = vrot.slane %v1884, 6
    %v1890 = vadd.f32 %v1253, %v1888
    %v1891 = vxor.u32 %v1890, 2147483648
    %v1892 = vmul.f32 %v1891, 1.442695
    %v1893 = vpow.pop %v1892
    %v1894 = vadd.f32 %v1893, 1.0
    %v1895 = vrcp.pop %v1894
    %v1896 = vmul.f32 1.0, %v1895
    %v1897 = vadd.f32 %v1884, %v1344
    %v1899 = vrot.slane %v1897, 6
    %1900 = vrot.lane.b32.xlu0 %v1899, 64
    %v1901 = vpop.permute.xlu0 %1900
    %v1903 = vmul.f32 %v1896, %v1901
    %1905 = vrot.lane.b32.xlu0 %v1903, 64
    %v1906 = vpop.permute.xlu0 %1905
    %v1908 = vadd.f32 %v1253, %v1906
    %v1909 = vtanh.pop %v1908
    %v1910 = vsub.f32 1.0, %v1896
    %1912 = vrot.lane.b32.xlu0 %v1909, 96
    %v1913 = vpop.permute.xlu0 %1912
    %v1915 = vmul.f32 %v1910, %v1913
    %v1916 = vrot.slane %v1809, 6
    %v1918 = vmul.f32 %v1896, %v1916
    %v1919 = vadd.f32 %v1915, %v1918
    %1921 = vrot.lane.b32.xlu0 %v1919, 96
    %v1922 = vpop.permute.xlu0 %1921
    %1924 = vst.msk [vmem:[#allocation2 + $0x8] sm:$0xc] %vm488, %v1922
    %v1925 = vrot.slane %v1919, 2
    %1926 = vrot.lane.b32.xlu0 %v1925, 96
    %v1927 = vpop.permute.xlu0 %1926
    %v1928 = vsel %vm264, %v1927, 0
    %1930 = vmatprep.subr.mxu0 0.0
    %1931 = vmatpush1.msra.mxu0 0.0
    %1932 = vmatprep.subr.mxu0 0.0
    %1933 = vmatpush1.msra.mxu0 0.0
    %1934 = vmatprep.subr.mxu0 0.0
    %1935 = vmatpush1.msra.mxu0 0.0
    %1936 = vmatprep.subr.mxu0 0.0
    %1937 = vmatpush1.msra.mxu0 0.0
    %1938 = vmatprep.subr.mxu0 0.0
    %1939 = vmatpush1.msra.mxu0 0.0
    %1940 = vmatprep.subr.mxu0 0.0
    %1941 = vmatpush1.msra.mxu0 0.0
    %1942 = vmatprep.subr.mxu0 0.0
    %1943 = vmatpush1.msra.mxu0 0.0
    %1944 = vmatprep.subr.mxu0 0.0
    %1945 = vmatpush1.msra.mxu0 0.0
    %1946 = vmatprep.subr.mxu0 0.0
    %1947 = vmatpush1.msra.mxu0 0.0
    %1948 = vmatprep.subr.mxu0 0.0
    %1949 = vmatpush1.msra.mxu0 0.0
    %1950 = vmatprep.subr.mxu0 0.0
    %1951 = vmatpush1.msra.mxu0 0.0
    %1952 = vmatprep.subr.mxu0 0.0
    %1953 = vmatpush1.msra.mxu0 0.0
    %1954 = vmatprep.subr.mxu0 0.0
    %1955 = vmatpush1.msra.mxu0 %v1259
    %1956 = vmatprep.subr.mxu0 0.0
    %1957 = vmatpush1.msra.mxu0 %v1258
    %1958 = vmatprep.subr.mxu0 0.0
    %1959 = vmatpush1.msra.mxu0 %v1257
    %1960 = vmatprep.subr.mxu0 0.0
    %1961 = vmatpush1.msra.mxu0 %v1256
    %1962 = vmatprep.subr.mxu0 0.0
    %1963 = vmatpush2.msra.mxu0 0.0
    %1964 = vmatprep.subr.mxu0 0.0
    %1965 = vmatpush2.msra.mxu0 0.0
    %1966 = vmatprep.subr.mxu0 0.0
    %1967 = vmatpush2.msra.mxu0 0.0
    %1968 = vmatprep.subr.mxu0 0.0
    %1969 = vmatpush2.msra.mxu0 0.0
    %1970 = vmatprep.subr.mxu0 0.0
    %1971 = vmatpush2.msra.mxu0 0.0
    %1972 = vmatprep.subr.mxu0 0.0
    %1973 = vmatpush2.msra.mxu0 0.0
    %1974 = vmatprep.subr.mxu0 0.0
    %1975 = vmatpush2.msra.mxu0 0.0
    %1976 = vmatprep.subr.mxu0 0.0
    %1977 = vmatpush2.msra.mxu0 0.0
    %1978 = vmatprep.subr.mxu0 0.0
    %1979 = vmatpush2.msra.mxu0 0.0
    %1980 = vmatprep.subr.mxu0 0.0
    %1981 = vmatpush2.msra.mxu0 0.0
    %1982 = vmatprep.subr.mxu0 0.0
    %1983 = vmatpush2.msra.mxu0 0.0
    %1984 = vmatprep.subr.mxu0 0.0
    %1985 = vmatpush2.msra.mxu0 0.0
    %1986 = vmatprep.subr.mxu0 0.0
    %1987 = vmatpush2.msra.mxu0 0.0
    %1988 = vmatprep.subr.mxu0 0.0
    %1989 = vmatpush2.msra.mxu0 0.0
    %1990 = vmatprep.subr.mxu0 0.0
    %1991 = vmatpush2.msra.mxu0 0.0
    %1992 = vmatprep.subr.mxu0 0.0
    %1993 = vmatpush2.msra.mxu0 0.0
    %1994 = vmatprep.mubr.f32.mxu0 0.0
    %1995 = vmatmul.mubr.f32.gmra.mxu0 %v1928
    %v1996 = vpop.f32.mrf.mxu0
    %v1997 = vadd.f32 0.0, %v1996
    %v1998 = vpop.f32.mrf.mxu0
    %1999 = vdwg.mxu0
    %v2001 = vrot.slane %v1997, 4
    %v2003 = vadd.f32 %v1253, %v2001
    %v2004 = vxor.u32 %v2003, 2147483648
    %v2005 = vmul.f32 %v2004, 1.442695
    %v2006 = vpow.pop %v2005
    %v2007 = vadd.f32 %v2006, 1.0
    %v2008 = vrcp.pop %v2007
    %v2009 = vmul.f32 1.0, %v2008
    %v2010 = vadd.f32 %v1997, %v1344
    %v2012 = vrot.slane %v2010, 4
    %2013 = vrot.lane.b32.xlu0 %v2012, 64
    %v2014 = vpop.permute.xlu0 %2013
    %v2016 = vmul.f32 %v2009, %v2014
    %2018 = vrot.lane.b32.xlu0 %v2016, 64
    %v2019 = vpop.permute.xlu0 %2018
    %v2021 = vadd.f32 %v1253, %v2019
    %v2022 = vtanh.pop %v2021
    %v2023 = vsub.f32 1.0, %v2009
    %2025 = vrot.lane.b32.xlu0 %v2022, 96
    %v2026 = vpop.permute.xlu0 %2025
    %v2028 = vmul.f32 %v2023, %v2026
    %v2029 = vrot.slane %v1919, 6
    %v2031 = vmul.f32 %v2009, %v2029
    %v2032 = vadd.f32 %v2028, %v2031
    %2034 = vrot.lane.b32.xlu0 %v2032, 96
    %v2035 = vpop.permute.xlu0 %2034
    %2037 = vst.msk [vmem:[#allocation2 + $0x8] sm:$0x30] %vm602, %v2035
    %v2038 = vrot.slane %v2032, 4
    %2039 = vrot.lane.b32.xlu0 %v2038, 96
    %v2040 = vpop.permute.xlu0 %2039
    %v2041 = vsel %vm264, %v2040, 0
    %2043 = vmatprep.subr.mxu0 0.0
    %2044 = vmatpush1.msra.mxu0 0.0
    %2045 = vmatprep.subr.mxu0 0.0
    %2046 = vmatpush1.msra.mxu0 0.0
    %2047 = vmatprep.subr.mxu0 0.0
    %2048 = vmatpush1.msra.mxu0 0.0
    %2049 = vmatprep.subr.mxu0 0.0
    %2050 = vmatpush1.msra.mxu0 0.0
    %2051 = vmatprep.subr.mxu0 0.0
    %2052 = vmatpush1.msra.mxu0 0.0
    %2053 = vmatprep.subr.mxu0 0.0
    %2054 = vmatpush1.msra.mxu0 0.0
    %2055 = vmatprep.subr.mxu0 0.0
    %2056 = vmatpush1.msra.mxu0 0.0
    %2057 = vmatprep.subr.mxu0 0.0
    %2058 = vmatpush1.msra.mxu0 0.0
    %2059 = vmatprep.subr.mxu0 0.0
    %2060 = vmatpush1.msra.mxu0 0.0
    %2061 = vmatprep.subr.mxu0 0.0
    %2062 = vmatpush1.msra.mxu0 0.0
    %2063 = vmatprep.subr.mxu0 0.0
    %2064 = vmatpush1.msra.mxu0 0.0
    %2065 = vmatprep.subr.mxu0 0.0
    %2066 = vmatpush1.msra.mxu0 0.0
    %2067 = vmatprep.subr.mxu0 0.0
    %2068 = vmatpush1.msra.mxu0 %v1259
    %2069 = vmatprep.subr.mxu0 0.0
    %2070 = vmatpush1.msra.mxu0 %v1258
    %2071 = vmatprep.subr.mxu0 0.0
    %2072 = vmatpush1.msra.mxu0 %v1257
    %2073 = vmatprep.subr.mxu0 0.0
    %2074 = vmatpush1.msra.mxu0 %v1256
    %2075 = vmatprep.subr.mxu0 0.0
    %2076 = vmatpush2.msra.mxu0 0.0
    %2077 = vmatprep.subr.mxu0 0.0
    %2078 = vmatpush2.msra.mxu0 0.0
    %2079 = vmatprep.subr.mxu0 0.0
    %2080 = vmatpush2.msra.mxu0 0.0
    %2081 = vmatprep.subr.mxu0 0.0
    %2082 = vmatpush2.msra.mxu0 0.0
    %2083 = vmatprep.subr.mxu0 0.0
    %2084 = vmatpush2.msra.mxu0 0.0
    %2085 = vmatprep.subr.mxu0 0.0
    %2086 = vmatpush2.msra.mxu0 0.0
    %2087 = vmatprep.subr.mxu0 0.0
    %2088 = vmatpush2.msra.mxu0 0.0
    %2089 = vmatprep.subr.mxu0 0.0
    %2090 = vmatpush2.msra.mxu0 0.0
    %2091 = vmatprep.subr.mxu0 0.0
    %2092 = vmatpush2.msra.mxu0 0.0
    %2093 = vmatprep.subr.mxu0 0.0
    %2094 = vmatpush2.msra.mxu0 0.0
    %2095 = vmatprep.subr.mxu0 0.0
    %2096 = vmatpush2.msra.mxu0 0.0
    %2097 = vmatprep.subr.mxu0 0.0
    %2098 = vmatpush2.msra.mxu0 0.0
    %2099 = vmatprep.subr.mxu0 0.0
    %2100 = vmatpush2.msra.mxu0 0.0
    %2101 = vmatprep.subr.mxu0 0.0
    %2102 = vmatpush2.msra.mxu0 0.0
    %2103 = vmatprep.subr.mxu0 0.0
    %2104 = vmatpush2.msra.mxu0 0.0
    %2105 = vmatprep.subr.mxu0 0.0
    %2106 = vmatpush2.msra.mxu0 0.0
    %2107 = vmatprep.mubr.f32.mxu0 0.0
    %2108 = vmatmul.mubr.f32.gmra.mxu0 %v2041
    %v2109 = vpop.f32.mrf.mxu0
    %v2110 = vadd.f32 0.0, %v2109
    %v2111 = vpop.f32.mrf.mxu0
    %2112 = vdwg.mxu0
    %v2114 = vrot.slane %v2110, 2
    %v2116 = vadd.f32 %v1253, %v2114
    %v2117 = vxor.u32 %v2116, 2147483648
    %v2118 = vmul.f32 %v2117, 1.442695
    %v2119 = vpow.pop %v2118
    %v2120 = vadd.f32 %v2119, 1.0
    %v2121 = vrcp.pop %v2120
    %v2122 = vmul.f32 1.0, %v2121
    %v2123 = vadd.f32 %v2110, %v1344
    %v2125 = vrot.slane %v2123, 2
    %2126 = vrot.lane.b32.xlu0 %v2125, 64
    %v2127 = vpop.permute.xlu0 %2126
    %v2129 = vmul.f32 %v2122, %v2127
    %2131 = vrot.lane.b32.xlu0 %v2129, 64
    %v2132 = vpop.permute.xlu0 %2131
    %v2134 = vadd.f32 %v1253, %v2132
    %v2135 = vtanh.pop %v2134
    %v2136 = vsub.f32 1.0, %v2122
    %2138 = vrot.lane.b32.xlu0 %v2135, 96
    %v2139 = vpop.permute.xlu0 %2138
    %v2141 = vmul.f32 %v2136, %v2139
    %v2142 = vrot.slane %v2032, 6
    %v2144 = vmul.f32 %v2122, %v2142
    %v2145 = vadd.f32 %v2141, %v2144
    %2147 = vrot.lane.b32.xlu0 %v2145, 96
    %v2148 = vpop.permute.xlu0 %2147
    %2150 = vst.msk [vmem:[#allocation2 + $0x8] sm:$0xc0] %vm716, %v2148
    %v2151 = vld [vmem:[#allocation2] sm:$0xff]
    %v2152 = vld [vmem:[#allocation2 + $0x8] sm:$0xff]
    %v2153 = vld [vmem:[%s9] sm:$0xff]
    %v2154 = vld [vmem:[%s9 + $0x8] sm:$0xff]
    %v2155 = vld [vmem:[%s9 + $0x10] sm:$0xff]
    %v2156 = vld [vmem:[%s9 + $0x18] sm:$0xff]
    %v2157 = vld [vmem:[#allocation11] sm:$0x1]
    %v2159 = vlaneseq
    %v2160 = vshrl.u32 %v2159, 7
    %v2161 = vsub.s32 0, %v2160
    %v2162 = vrot.slane %v2157, %v2161
    %v2165 = vsel %vm264, %v2151, 0
    %v2168 = vsel %vm264, %v2152, 0
    %2170 = vmatprep.subr.mxu0 0.0
    %2171 = vmatpush1.msra.mxu0 0.0
    %2172 = vmatprep.subr.mxu0 0.0
    %2173 = vmatpush1.msra.mxu0 0.0
    %2174 = vmatprep.subr.mxu0 0.0
    %2175 = vmatpush1.msra.mxu0 0.0
    %2176 = vmatprep.subr.mxu0 0.0
    %2177 = vmatpush1.msra.mxu0 0.0
    %2178 = vmatprep.subr.mxu0 0.0
    %2179 = vmatpush1.msra.mxu0 0.0
    %2180 = vmatprep.subr.mxu0 0.0
    %2181 = vmatpush1.msra.mxu0 0.0
    %2182 = vmatprep.subr.mxu0 0.0
    %2183 = vmatpush1.msra.mxu0 0.0
    %2184 = vmatprep.subr.mxu0 0.0
    %2185 = vmatpush1.msra.mxu0 0.0
    %2186 = vmatprep.subr.mxu0 0.0
    %2187 = vmatpush1.msra.mxu0 0.0
    %2188 = vmatprep.subr.mxu0 0.0
    %2189 = vmatpush1.msra.mxu0 0.0
    %2190 = vmatprep.subr.mxu0 0.0
    %2191 = vmatpush1.msra.mxu0 0.0
    %2192 = vmatprep.subr.mxu0 0.0
    %2193 = vmatpush1.msra.mxu0 0.0
    %2194 = vmatprep.subr.mxu0 0.0
    %2195 = vmatpush1.msra.mxu0 %v2156
    %2196 = vmatprep.subr.mxu0 0.0
    %2197 = vmatpush1.msra.mxu0 %v2155
    %2198 = vmatprep.subr.mxu0 0.0
    %2199 = vmatpush1.msra.mxu0 %v2154
    %2200 = vmatprep.subr.mxu0 0.0
    %2201 = vmatpush1.msra.mxu0 %v2153
    %2202 = vmatprep.subr.mxu0 0.0
    %2203 = vmatpush2.msra.mxu0 0.0
    %2204 = vmatprep.subr.mxu0 0.0
    %2205 = vmatpush2.msra.mxu0 0.0
    %2206 = vmatprep.subr.mxu0 0.0
    %2207 = vmatpush2.msra.mxu0 0.0
    %2208 = vmatprep.subr.mxu0 0.0
    %2209 = vmatpush2.msra.mxu0 0.0
    %2210 = vmatprep.subr.mxu0 0.0
    %2211 = vmatpush2.msra.mxu0 0.0
    %2212 = vmatprep.subr.mxu0 0.0
    %2213 = vmatpush2.msra.mxu0 0.0
    %2214 = vmatprep.subr.mxu0 0.0
    %2215 = vmatpush2.msra.mxu0 0.0
    %2216 = vmatprep.subr.mxu0 0.0
    %2217 = vmatpush2.msra.mxu0 0.0
    %2218 = vmatprep.subr.mxu0 0.0
    %2219 = vmatpush2.msra.mxu0 0.0
    %2220 = vmatprep.subr.mxu0 0.0
    %2221 = vmatpush2.msra.mxu0 0.0
    %2222 = vmatprep.subr.mxu0 0.0
    %2223 = vmatpush2.msra.mxu0 0.0
    %2224 = vmatprep.subr.mxu0 0.0
    %2225 = vmatpush2.msra.mxu0 0.0
    %2226 = vmatprep.subr.mxu0 0.0
    %2227 = vmatpush2.msra.mxu0 0.0
    %2228 = vmatprep.subr.mxu0 0.0
    %2229 = vmatpush2.msra.mxu0 0.0
    %2230 = vmatprep.subr.mxu0 0.0
    %2231 = vmatpush2.msra.mxu0 0.0
    %2232 = vmatprep.subr.mxu0 0.0
    %2233 = vmatpush2.msra.mxu0 0.0
    %2234 = vmatprep.mubr.f32.mxu0 0.0
    %2235 = vmatmul.mubr.f32.gmra.mxu0 %v2165
    %v2236 = vpop.f32.mrf.mxu0
    %v2237 = vadd.f32 %v2162, %v2236
    %v2238 = vpop.f32.mrf.mxu0
    %2239 = vmatprep.mubr.f32.mxu0 0.0
    %2240 = vmatmul.mubr.f32.gmra.mxu0 %v2168
    %v2241 = vpop.f32.mrf.mxu0
    %v2242 = vadd.f32 %v2162, %v2241
    %v2243 = vpop.f32.mrf.mxu0
    %2244 = vdwg.mxu0
    %v2245 = vld [vmem:[#allocation10] sm:$0xff]
    %v2246 = vld [vmem:[#allocation10 + $0x8] sm:$0xff]
    %v2247 = vld [vmem:[#allocation10 + $0x10] sm:$0xff]
    %v2248 = vld [vmem:[#allocation10 + $0x18] sm:$0xff]
    %2249 = vmatprep.subr.mxu0 0.0
    %2250 = vmatpush1.msra.mxu0 0.0
    %2251 = vmatprep.subr.mxu0 0.0
    %2252 = vmatpush1.msra.mxu0 0.0
    %2253 = vmatprep.subr.mxu0 0.0
    %2254 = vmatpush1.msra.mxu0 0.0
    %2255 = vmatprep.subr.mxu0 0.0
    %2256 = vmatpush1.msra.mxu0 0.0
    %2257 = vmatprep.subr.mxu0 0.0
    %2258 = vmatpush1.msra.mxu0 0.0
    %2259 = vmatprep.subr.mxu0 0.0
    %2260 = vmatpush1.msra.mxu0 0.0
    %2261 = vmatprep.subr.mxu0 0.0
    %2262 = vmatpush1.msra.mxu0 0.0
    %2263 = vmatprep.subr.mxu0 0.0
    %2264 = vmatpush1.msra.mxu0 0.0
    %2265 = vmatprep.subr.mxu0 0.0
    %2266 = vmatpush1.msra.mxu0 0.0
    %2267 = vmatprep.subr.mxu0 0.0
    %2268 = vmatpush1.msra.mxu0 0.0
    %2269 = vmatprep.subr.mxu0 0.0
    %2270 = vmatpush1.msra.mxu0 0.0
    %2271 = vmatprep.subr.mxu0 0.0
    %2272 = vmatpush1.msra.mxu0 0.0
    %2273 = vmatprep.subr.mxu0 0.0
    %2274 = vmatpush1.msra.mxu0 %v2248
    %2275 = vmatprep.subr.mxu0 0.0
    %2276 = vmatpush1.msra.mxu0 %v2247
    %2277 = vmatprep.subr.mxu0 0.0
    %2278 = vmatpush1.msra.mxu0 %v2246
    %2279 = vmatprep.subr.mxu0 0.0
    %2280 = vmatpush1.msra.mxu0 %v2245
    %2281 = vmatprep.subr.mxu0 0.0
    %2282 = vmatpush2.msra.mxu0 0.0
    %2283 = vmatprep.subr.mxu0 0.0
    %2284 = vmatpush2.msra.mxu0 0.0
    %2285 = vmatprep.subr.mxu0 0.0
    %2286 = vmatpush2.msra.mxu0 0.0
    %2287 = vmatprep.subr.mxu0 0.0
    %2288 = vmatpush2.msra.mxu0 0.0
    %2289 = vmatprep.subr.mxu0 0.0
    %2290 = vmatpush2.msra.mxu0 0.0
    %2291 = vmatprep.subr.mxu0 0.0
    %2292 = vmatpush2.msra.mxu0 0.0
    %2293 = vmatprep.subr.mxu0 0.0
    %2294 = vmatpush2.msra.mxu0 0.0
    %2295 = vmatprep.subr.mxu0 0.0
    %2296 = vmatpush2.msra.mxu0 0.0
    %2297 = vmatprep.subr.mxu0 0.0
    %2298 = vmatpush2.msra.mxu0 0.0
    %2299 = vmatprep.subr.mxu0 0.0
    %2300 = vmatpush2.msra.mxu0 0.0
    %2301 = vmatprep.subr.mxu0 0.0
    %2302 = vmatpush2.msra.mxu0 0.0
    %2303 = vmatprep.subr.mxu0 0.0
    %2304 = vmatpush2.msra.mxu0 0.0
    %2305 = vmatprep.subr.mxu0 0.0
    %2306 = vmatpush2.msra.mxu0 0.0
    %2307 = vmatprep.subr.mxu0 0.0
    %2308 = vmatpush2.msra.mxu0 0.0
    %2309 = vmatprep.subr.mxu0 0.0
    %2310 = vmatpush2.msra.mxu0 0.0
    %2311 = vmatprep.subr.mxu0 0.0
    %2312 = vmatpush2.msra.mxu0 0.0
    %2313 = vmatprep.mubr.f32.mxu0 0.0
    %2314 = vmatmul.mubr.f32.gmra.mxu0 %v266
    %v2315 = vpop.f32.mrf.mxu0
    %v2316 = vadd.f32 0.0, %v2315
    %v2317 = vpop.f32.mrf.mxu0
    %2318 = vdwg.mxu0
    %v2319 = vadd.f32 %v2237, %v2316
    %v2320 = vxor.u32 %v2319, 2147483648
    %v2321 = vmul.f32 %v2320, 1.442695
    %v2322 = vpow.pop %v2321
    %v2323 = vadd.f32 %v2322, 1.0
    %v2324 = vrcp.pop %v2323
    %v2325 = vmul.f32 1.0, %v2324
    %v2326 = vtanh.pop %v2319
    %v2327 = vmul.f32 %v2325, 0.0
    %2329 = vrot.lane.b32.xlu0 %v2326, 64
    %v2330 = vpop.permute.xlu0 %2329
    %v2332 = vmul.f32 %v2325, %v2330
    %2334 = vrot.lane.b32.xlu0 %v2332, 32
    %v2335 = vpop.permute.xlu0 %2334
    %v2337 = vadd.f32 %v2327, %v2335
    %v2338 = vtanh.pop %v2337
    %2340 = vrot.lane.b32.xlu0 %v2338, 64
    %v2341 = vpop.permute.xlu0 %2340
    %v2343 = vmul.f32 %v2325, %v2341
    %2345 = vrot.lane.b32.xlu0 %v2343, 32
    %v2346 = vpop.permute.xlu0 %2345
    %2348 = vst.msk [vmem:[#allocation2] sm:$0x3] %vm377, %v2346
    %v2349 = vsel %vm264, %v2346, 0
    %2351 = vmatprep.subr.mxu0 0.0
    %2352 = vmatpush1.msra.mxu0 0.0
    %2353 = vmatprep.subr.mxu0 0.0
    %2354 = vmatpush1.msra.mxu0 0.0
    %2355 = vmatprep.subr.mxu0 0.0
    %2356 = vmatpush1.msra.mxu0 0.0
    %2357 = vmatprep.subr.mxu0 0.0
    %2358 = vmatpush1.msra.mxu0 0.0
    %2359 = vmatprep.subr.mxu0 0.0
    %2360 = vmatpush1.msra.mxu0 0.0
    %2361 = vmatprep.subr.mxu0 0.0
    %2362 = vmatpush1.msra.mxu0 0.0
    %2363 = vmatprep.subr.mxu0 0.0
    %2364 = vmatpush1.msra.mxu0 0.0
    %2365 = vmatprep.subr.mxu0 0.0
    %2366 = vmatpush1.msra.mxu0 0.0
    %2367 = vmatprep.subr.mxu0 0.0
    %2368 = vmatpush1.msra.mxu0 0.0
    %2369 = vmatprep.subr.mxu0 0.0
    %2370 = vmatpush1.msra.mxu0 0.0
    %2371 = vmatprep.subr.mxu0 0.0
    %2372 = vmatpush1.msra.mxu0 0.0
    %2373 = vmatprep.subr.mxu0 0.0
    %2374 = vmatpush1.msra.mxu0 0.0
    %2375 = vmatprep.subr.mxu0 0.0
    %2376 = vmatpush1.msra.mxu0 %v2248
    %2377 = vmatprep.subr.mxu0 0.0
    %2378 = vmatpush1.msra.mxu0 %v2247
    %2379 = vmatprep.subr.mxu0 0.0
    %2380 = vmatpush1.msra.mxu0 %v2246
    %2381 = vmatprep.subr.mxu0 0.0
    %2382 = vmatpush1.msra.mxu0 %v2245
    %2383 = vmatprep.subr.mxu0 0.0
    %2384 = vmatpush2.msra.mxu0 0.0
    %2385 = vmatprep.subr.mxu0 0.0
    %2386 = vmatpush2.msra.mxu0 0.0
    %2387 = vmatprep.subr.mxu0 0.0
    %2388 = vmatpush2.msra.mxu0 0.0
    %2389 = vmatprep.subr.mxu0 0.0
    %2390 = vmatpush2.msra.mxu0 0.0
    %2391 = vmatprep.subr.mxu0 0.0
    %2392 = vmatpush2.msra.mxu0 0.0
    %2393 = vmatprep.subr.mxu0 0.0
    %2394 = vmatpush2.msra.mxu0 0.0
    %2395 = vmatprep.subr.mxu0 0.0
    %2396 = vmatpush2.msra.mxu0 0.0
    %2397 = vmatprep.subr.mxu0 0.0
    %2398 = vmatpush2.msra.mxu0 0.0
    %2399 = vmatprep.subr.mxu0 0.0
    %2400 = vmatpush2.msra.mxu0 0.0
    %2401 = vmatprep.subr.mxu0 0.0
    %2402 = vmatpush2.msra.mxu0 0.0
    %2403 = vmatprep.subr.mxu0 0.0
    %2404 = vmatpush2.msra.mxu0 0.0
    %2405 = vmatprep.subr.mxu0 0.0
    %2406 = vmatpush2.msra.mxu0 0.0
    %2407 = vmatprep.subr.mxu0 0.0
    %2408 = vmatpush2.msra.mxu0 0.0
    %2409 = vmatprep.subr.mxu0 0.0
    %2410 = vmatpush2.msra.mxu0 0.0
    %2411 = vmatprep.subr.mxu0 0.0
    %2412 = vmatpush2.msra.mxu0 0.0
    %2413 = vmatprep.subr.mxu0 0.0
    %2414 = vmatpush2.msra.mxu0 0.0
    %2415 = vmatprep.mubr.f32.mxu0 0.0
    %2416 = vmatmul.mubr.f32.gmra.mxu0 %v2349
    %v2417 = vpop.f32.mrf.mxu0
    %v2418 = vadd.f32 0.0, %v2417
    %v2419 = vpop.f32.mrf.mxu0
    %2420 = vdwg.mxu0
    %v2422 = vrot.slane %v2418, 6
    %v2424 = vadd.f32 %v2237, %v2422
    %v2425 = vxor.u32 %v2424, 2147483648
    %v2426 = vmul.f32 %v2425, 1.442695
    %v2427 = vpow.pop %v2426
    %v2428 = vadd.f32 %v2427, 1.0
    %v2429 = vrcp.pop %v2428
    %v2430 = vmul.f32 1.0, %v2429
    %v2431 = vtanh.pop %v2424
    %v2433 = vrot.slane %v2337, 6
    %v2435 = vmul.f32 %v2430, %v2433
    %2437 = vrot.lane.b32.xlu0 %v2431, 64
    %v2438 = vpop.permute.xlu0 %2437
    %v2440 = vmul.f32 %v2430, %v2438
    %2442 = vrot.lane.b32.xlu0 %v2440, 32
    %v2443 = vpop.permute.xlu0 %2442
    %v2445 = vadd.f32 %v2435, %v2443
    %v2446 = vtanh.pop %v2445
    %2448 = vrot.lane.b32.xlu0 %v2446, 64
    %v2449 = vpop.permute.xlu0 %2448
    %v2451 = vmul.f32 %v2430, %v2449
    %2453 = vrot.lane.b32.xlu0 %v2451, 32
    %v2454 = vpop.permute.xlu0 %2453
    %2456 = vst.msk [vmem:[#allocation2] sm:$0xc] %vm488, %v2454
    %v2457 = vrot.slane %v2451, 2
    %2458 = vrot.lane.b32.xlu0 %v2457, 32
    %v2459 = vpop.permute.xlu0 %2458
    %v2460 = vsel %vm264, %v2459, 0
    %2462 = vmatprep.subr.mxu0 0.0
    %2463 = vmatpush1.msra.mxu0 0.0
    %2464 = vmatprep.subr.mxu0 0.0
    %2465 = vmatpush1.msra.mxu0 0.0
    %2466 = vmatprep.subr.mxu0 0.0
    %2467 = vmatpush1.msra.mxu0 0.0
    %2468 = vmatprep.subr.mxu0 0.0
    %2469 = vmatpush1.msra.mxu0 0.0
    %2470 = vmatprep.subr.mxu0 0.0
    %2471 = vmatpush1.msra.mxu0 0.0
    %2472 = vmatprep.subr.mxu0 0.0
    %2473 = vmatpush1.msra.mxu0 0.0
    %2474 = vmatprep.subr.mxu0 0.0
    %2475 = vmatpush1.msra.mxu0 0.0
    %2476 = vmatprep.subr.mxu0 0.0
    %2477 = vmatpush1.msra.mxu0 0.0
    %2478 = vmatprep.subr.mxu0 0.0
    %2479 = vmatpush1.msra.mxu0 0.0
    %2480 = vmatprep.subr.mxu0 0.0
    %2481 = vmatpush1.msra.mxu0 0.0
    %2482 = vmatprep.subr.mxu0 0.0
    %2483 = vmatpush1.msra.mxu0 0.0
    %2484 = vmatprep.subr.mxu0 0.0
    %2485 = vmatpush1.msra.mxu0 0.0
    %2486 = vmatprep.subr.mxu0 0.0
    %2487 = vmatpush1.msra.mxu0 %v2248
    %2488 = vmatprep.subr.mxu0 0.0
    %2489 = vmatpush1.msra.mxu0 %v2247
    %2490 = vmatprep.subr.mxu0 0.0
    %2491 = vmatpush1.msra.mxu0 %v2246
    %2492 = vmatprep.subr.mxu0 0.0
    %2493 = vmatpush1.msra.mxu0 %v2245
    %2494 = vmatprep.subr.mxu0 0.0
    %2495 = vmatpush2.msra.mxu0 0.0
    %2496 = vmatprep.subr.mxu0 0.0
    %2497 = vmatpush2.msra.mxu0 0.0
    %2498 = vmatprep.subr.mxu0 0.0
    %2499 = vmatpush2.msra.mxu0 0.0
    %2500 = vmatprep.subr.mxu0 0.0
    %2501 = vmatpush2.msra.mxu0 0.0
    %2502 = vmatprep.subr.mxu0 0.0
    %2503 = vmatpush2.msra.mxu0 0.0
    %2504 = vmatprep.subr.mxu0 0.0
    %2505 = vmatpush2.msra.mxu0 0.0
    %2506 = vmatprep.subr.mxu0 0.0
    %2507 = vmatpush2.msra.mxu0 0.0
    %2508 = vmatprep.subr.mxu0 0.0
    %2509 = vmatpush2.msra.mxu0 0.0
    %2510 = vmatprep.subr.mxu0 0.0
    %2511 = vmatpush2.msra.mxu0 0.0
    %2512 = vmatprep.subr.mxu0 0.0
    %2513 = vmatpush2.msra.mxu0 0.0
    %2514 = vmatprep.subr.mxu0 0.0
    %2515 = vmatpush2.msra.mxu0 0.0
    %2516 = vmatprep.subr.mxu0 0.0
    %2517 = vmatpush2.msra.mxu0 0.0
    %2518 = vmatprep.subr.mxu0 0.0
    %2519 = vmatpush2.msra.mxu0 0.0
    %2520 = vmatprep.subr.mxu0 0.0
    %2521 = vmatpush2.msra.mxu0 0.0
    %2522 = vmatprep.subr.mxu0 0.0
    %2523 = vmatpush2.msra.mxu0 0.0
    %2524 = vmatprep.subr.mxu0 0.0
    %2525 = vmatpush2.msra.mxu0 0.0
    %2526 = vmatprep.mubr.f32.mxu0 0.0
    %2527 = vmatmul.mubr.f32.gmra.mxu0 %v2460
    %v2528 = vpop.f32.mrf.mxu0
    %v2529 = vadd.f32 0.0, %v2528
    %v2530 = vpop.f32.mrf.mxu0
    %2531 = vdwg.mxu0
    %v2533 = vrot.slane %v2529, 4
    %v2535 = vadd.f32 %v2237, %v2533
    %v2536 = vxor.u32 %v2535, 2147483648
    %v2537 = vmul.f32 %v2536, 1.442695
    %v2538 = vpow.pop %v2537
    %v2539 = vadd.f32 %v2538, 1.0
    %v2540 = vrcp.pop %v2539
    %v2541 = vmul.f32 1.0, %v2540
    %v2542 = vtanh.pop %v2535
    %v2544 = vrot.slane %v2445, 6
    %v2546 = vmul.f32 %v2541, %v2544
    %2548 = vrot.lane.b32.xlu0 %v2542, 64
    %v2549 = vpop.permute.xlu0 %2548
    %v2551 = vmul.f32 %v2541, %v2549
    %2553 = vrot.lane.b32.xlu0 %v2551, 32
    %v2554 = vpop.permute.xlu0 %2553
    %v2556 = vadd.f32 %v2546, %v2554
    %v2557 = vtanh.pop %v2556
    %2559 = vrot.lane.b32.xlu0 %v2557, 64
    %v2560 = vpop.permute.xlu0 %2559
    %v2562 = vmul.f32 %v2541, %v2560
    %2564 = vrot.lane.b32.xlu0 %v2562, 32
    %v2565 = vpop.permute.xlu0 %2564
    %2567 = vst.msk [vmem:[#allocation2] sm:$0x30] %vm602, %v2565
    %v2568 = vrot.slane %v2562, 4
    %2569 = vrot.lane.b32.xlu0 %v2568, 32
    %v2570 = vpop.permute.xlu0 %2569
    %v2571 = vsel %vm264, %v2570, 0
    %2573 = vmatprep.subr.mxu0 0.0
    %2574 = vmatpush1.msra.mxu0 0.0
    %2575 = vmatprep.subr.mxu0 0.0
    %2576 = vmatpush1.msra.mxu0 0.0
    %2577 = vmatprep.subr.mxu0 0.0
    %2578 = vmatpush1.msra.mxu0 0.0
    %2579 = vmatprep.subr.mxu0 0.0
    %2580 = vmatpush1.msra.mxu0 0.0
    %2581 = vmatprep.subr.mxu0 0.0
    %2582 = vmatpush1.msra.mxu0 0.0
    %2583 = vmatprep.subr.mxu0 0.0
    %2584 = vmatpush1.msra.mxu0 0.0
    %2585 = vmatprep.subr.mxu0 0.0
    %2586 = vmatpush1.msra.mxu0 0.0
    %2587 = vmatprep.subr.mxu0 0.0
    %2588 = vmatpush1.msra.mxu0 0.0
    %2589 = vmatprep.subr.mxu0 0.0
    %2590 = vmatpush1.msra.mxu0 0.0
    %2591 = vmatprep.subr.mxu0 0.0
    %2592 = vmatpush1.msra.mxu0 0.0
    %2593 = vmatprep.subr.mxu0 0.0
    %2594 = vmatpush1.msra.mxu0 0.0
    %2595 = vmatprep.subr.mxu0 0.0
    %2596 = vmatpush1.msra.mxu0 0.0
    %2597 = vmatprep.subr.mxu0 0.0
    %2598 = vmatpush1.msra.mxu0 %v2248
    %2599 = vmatprep.subr.mxu0 0.0
    %2600 = vmatpush1.msra.mxu0 %v2247
    %2601 = vmatprep.subr.mxu0 0.0
    %2602 = vmatpush1.msra.mxu0 %v2246
    %2603 = vmatprep.subr.mxu0 0.0
    %2604 = vmatpush1.msra.mxu0 %v2245
    %2605 = vmatprep.subr.mxu0 0.0
    %2606 = vmatpush2.msra.mxu0 0.0
    %2607 = vmatprep.subr.mxu0 0.0
    %2608 = vmatpush2.msra.mxu0 0.0
    %2609 = vmatprep.subr.mxu0 0.0
    %2610 = vmatpush2.msra.mxu0 0.0
    %2611 = vmatprep.subr.mxu0 0.0
    %2612 = vmatpush2.msra.mxu0 0.0
    %2613 = vmatprep.subr.mxu0 0.0
    %2614 = vmatpush2.msra.mxu0 0.0
    %2615 = vmatprep.subr.mxu0 0.0
    %2616 = vmatpush2.msra.mxu0 0.0
    %2617 = vmatprep.subr.mxu0 0.0
    %2618 = vmatpush2.msra.mxu0 0.0
    %2619 = vmatprep.subr.mxu0 0.0
    %2620 = vmatpush2.msra.mxu0 0.0
    %2621 = vmatprep.subr.mxu0 0.0
    %2622 = vmatpush2.msra.mxu0 0.0
    %2623 = vmatprep.subr.mxu0 0.0
    %2624 = vmatpush2.msra.mxu0 0.0
    %2625 = vmatprep.subr.mxu0 0.0
    %2626 = vmatpush2.msra.mxu0 0.0
    %2627 = vmatprep.subr.mxu0 0.0
    %2628 = vmatpush2.msra.mxu0 0.0
    %2629 = vmatprep.subr.mxu0 0.0
    %2630 = vmatpush2.msra.mxu0 0.0
    %2631 = vmatprep.subr.mxu0 0.0
    %2632 = vmatpush2.msra.mxu0 0.0
    %2633 = vmatprep.subr.mxu0 0.0
    %2634 = vmatpush2.msra.mxu0 0.0
    %2635 = vmatprep.subr.mxu0 0.0
    %2636 = vmatpush2.msra.mxu0 0.0
    %2637 = vmatprep.mubr.f32.mxu0 0.0
    %2638 = vmatmul.mubr.f32.gmra.mxu0 %v2571
    %v2639 = vpop.f32.mrf.mxu0
    %v2640 = vadd.f32 0.0, %v2639
    %v2641 = vpop.f32.mrf.mxu0
    %2642 = vdwg.mxu0
    %v2644 = vrot.slane %v2640, 2
    %v2646 = vadd.f32 %v2237, %v2644
    %v2647 = vxor.u32 %v2646, 2147483648
    %v2648 = vmul.f32 %v2647, 1.442695
    %v2649 = vpow.pop %v2648
    %v2650 = vadd.f32 %v2649, 1.0
    %v2651 = vrcp.pop %v2650
    %v2652 = vmul.f32 1.0, %v2651
    %v2653 = vtanh.pop %v2646
    %v2655 = vrot.slane %v2556, 6
    %v2657 = vmul.f32 %v2652, %v2655
    %2659 = vrot.lane.b32.xlu0 %v2653, 64
    %v2660 = vpop.permute.xlu0 %2659
    %v2662 = vmul.f32 %v2652, %v2660
    %2664 = vrot.lane.b32.xlu0 %v2662, 32
    %v2665 = vpop.permute.xlu0 %2664
    %v2667 = vadd.f32 %v2657, %v2665
    %v2668 = vtanh.pop %v2667
    %2670 = vrot.lane.b32.xlu0 %v2668, 64
    %v2671 = vpop.permute.xlu0 %2670
    %v2673 = vmul.f32 %v2652, %v2671
    %2675 = vrot.lane.b32.xlu0 %v2673, 32
    %v2676 = vpop.permute.xlu0 %2675
    %2678 = vst.msk [vmem:[#allocation2] sm:$0xc0] %vm716, %v2676
    %v2679 = vrot.slane %v2673, 6
    %2680 = vrot.lane.b32.xlu0 %v2679, 32
    %v2681 = vpop.permute.xlu0 %2680
    %v2682 = vsel %vm264, %v2681, 0
    %2684 = vmatprep.subr.mxu0 0.0
    %2685 = vmatpush1.msra.mxu0 0.0
    %2686 = vmatprep.subr.mxu0 0.0
    %2687 = vmatpush1.msra.mxu0 0.0
    %2688 = vmatprep.subr.mxu0 0.0
    %2689 = vmatpush1.msra.mxu0 0.0
    %2690 = vmatprep.subr.mxu0 0.0
    %2691 = vmatpush1.msra.mxu0 0.0
    %2692 = vmatprep.subr.mxu0 0.0
    %2693 = vmatpush1.msra.mxu0 0.0
    %2694 = vmatprep.subr.mxu0 0.0
    %2695 = vmatpush1.msra.mxu0 0.0
    %2696 = vmatprep.subr.mxu0 0.0
    %2697 = vmatpush1.msra.mxu0 0.0
    %2698 = vmatprep.subr.mxu0 0.0
    %2699 = vmatpush1.msra.mxu0 0.0
    %2700 = vmatprep.subr.mxu0 0.0
    %2701 = vmatpush1.msra.mxu0 0.0
    %2702 = vmatprep.subr.mxu0 0.0
    %2703 = vmatpush1.msra.mxu0 0.0
    %2704 = vmatprep.subr.mxu0 0.0
    %2705 = vmatpush1.msra.mxu0 0.0
    %2706 = vmatprep.subr.mxu0 0.0
    %2707 = vmatpush1.msra.mxu0 0.0
    %2708 = vmatprep.subr.mxu0 0.0
    %2709 = vmatpush1.msra.mxu0 %v2248
    %2710 = vmatprep.subr.mxu0 0.0
    %2711 = vmatpush1.msra.mxu0 %v2247
    %2712 = vmatprep.subr.mxu0 0.0
    %2713 = vmatpush1.msra.mxu0 %v2246
    %2714 = vmatprep.subr.mxu0 0.0
    %2715 = vmatpush1.msra.mxu0 %v2245
    %2716 = vmatprep.subr.mxu0 0.0
    %2717 = vmatpush2.msra.mxu0 0.0
    %2718 = vmatprep.subr.mxu0 0.0
    %2719 = vmatpush2.msra.mxu0 0.0
    %2720 = vmatprep.subr.mxu0 0.0
    %2721 = vmatpush2.msra.mxu0 0.0
    %2722 = vmatprep.subr.mxu0 0.0
    %2723 = vmatpush2.msra.mxu0 0.0
    %2724 = vmatprep.subr.mxu0 0.0
    %2725 = vmatpush2.msra.mxu0 0.0
    %2726 = vmatprep.subr.mxu0 0.0
    %2727 = vmatpush2.msra.mxu0 0.0
    %2728 = vmatprep.subr.mxu0 0.0
    %2729 = vmatpush2.msra.mxu0 0.0
    %2730 = vmatprep.subr.mxu0 0.0
    %2731 = vmatpush2.msra.mxu0 0.0
    %2732 = vmatprep.subr.mxu0 0.0
    %2733 = vmatpush2.msra.mxu0 0.0
    %2734 = vmatprep.subr.mxu0 0.0
    %2735 = vmatpush2.msra.mxu0 0.0
    %2736 = vmatprep.subr.mxu0 0.0
    %2737 = vmatpush2.msra.mxu0 0.0
    %2738 = vmatprep.subr.mxu0 0.0
    %2739 = vmatpush2.msra.mxu0 0.0
    %2740 = vmatprep.subr.mxu0 0.0
    %2741 = vmatpush2.msra.mxu0 0.0
    %2742 = vmatprep.subr.mxu0 0.0
    %2743 = vmatpush2.msra.mxu0 0.0
    %2744 = vmatprep.subr.mxu0 0.0
    %2745 = vmatpush2.msra.mxu0 0.0
    %2746 = vmatprep.subr.mxu0 0.0
    %2747 = vmatpush2.msra.mxu0 0.0
    %2748 = vmatprep.mubr.f32.mxu0 0.0
    %2749 = vmatmul.mubr.f32.gmra.mxu0 %v2682
    %v2750 = vpop.f32.mrf.mxu0
    %v2751 = vadd.f32 0.0, %v2750
    %v2752 = vpop.f32.mrf.mxu0
    %2753 = vdwg.mxu0
    %v2754 = vadd.f32 %v2242, %v2751
    %v2755 = vxor.u32 %v2754, 2147483648
    %v2756 = vmul.f32 %v2755, 1.442695
    %v2757 = vpow.pop %v2756
    %v2758 = vadd.f32 %v2757, 1.0
    %v2759 = vrcp.pop %v2758
    %v2760 = vmul.f32 1.0, %v2759
    %v2761 = vtanh.pop %v2754
    %v2763 = vrot.slane %v2667, 6
    %v2765 = vmul.f32 %v2760, %v2763
    %2767 = vrot.lane.b32.xlu0 %v2761, 64
    %v2768 = vpop.permute.xlu0 %2767
    %v2770 = vmul.f32 %v2760, %v2768
    %2772 = vrot.lane.b32.xlu0 %v2770, 32
    %v2773 = vpop.permute.xlu0 %2772
    %v2775 = vadd.f32 %v2765, %v2773
    %v2776 = vtanh.pop %v2775
    %2778 = vrot.lane.b32.xlu0 %v2776, 64
    %v2779 = vpop.permute.xlu0 %2778
    %v2781 = vmul.f32 %v2760, %v2779
    %2783 = vrot.lane.b32.xlu0 %v2781, 32
    %v2784 = vpop.permute.xlu0 %2783
    %2786 = vst.msk [vmem:[#allocation2 + $0x8] sm:$0x3] %vm377, %v2784
    %v2787 = vsel %vm264, %v2784, 0
    %2789 = vmatprep.subr.mxu0 0.0
    %2790 = vmatpush1.msra.mxu0 0.0
    %2791 = vmatprep.subr.mxu0 0.0
    %2792 = vmatpush1.msra.mxu0 0.0
    %2793 = vmatprep.subr.mxu0 0.0
    %2794 = vmatpush1.msra.mxu0 0.0
    %2795 = vmatprep.subr.mxu0 0.0
    %2796 = vmatpush1.msra.mxu0 0.0
    %2797 = vmatprep.subr.mxu0 0.0
    %2798 = vmatpush1.msra.mxu0 0.0
    %2799 = vmatprep.subr.mxu0 0.0
    %2800 = vmatpush1.msra.mxu0 0.0
    %2801 = vmatprep.subr.mxu0 0.0
    %2802 = vmatpush1.msra.mxu0 0.0
    %2803 = vmatprep.subr.mxu0 0.0
    %2804 = vmatpush1.msra.mxu0 0.0
    %2805 = vmatprep.subr.mxu0 0.0
    %2806 = vmatpush1.msra.mxu0 0.0
    %2807 = vmatprep.subr.mxu0 0.0
    %2808 = vmatpush1.msra.mxu0 0.0
    %2809 = vmatprep.subr.mxu0 0.0
    %2810 = vmatpush1.msra.mxu0 0.0
    %2811 = vmatprep.subr.mxu0 0.0
    %2812 = vmatpush1.msra.mxu0 0.0
    %2813 = vmatprep.subr.mxu0 0.0
    %2814 = vmatpush1.msra.mxu0 %v2248
    %2815 = vmatprep.subr.mxu0 0.0
    %2816 = vmatpush1.msra.mxu0 %v2247
    %2817 = vmatprep.subr.mxu0 0.0
    %2818 = vmatpush1.msra.mxu0 %v2246
    %2819 = vmatprep.subr.mxu0 0.0
    %2820 = vmatpush1.msra.mxu0 %v2245
    %2821 = vmatprep.subr.mxu0 0.0
    %2822 = vmatpush2.msra.mxu0 0.0
    %2823 = vmatprep.subr.mxu0 0.0
    %2824 = vmatpush2.msra.mxu0 0.0
    %2825 = vmatprep.subr.mxu0 0.0
    %2826 = vmatpush2.msra.mxu0 0.0
    %2827 = vmatprep.subr.mxu0 0.0
    %2828 = vmatpush2.msra.mxu0 0.0
    %2829 = vmatprep.subr.mxu0 0.0
    %2830 = vmatpush2.msra.mxu0 0.0
    %2831 = vmatprep.subr.mxu0 0.0
    %2832 = vmatpush2.msra.mxu0 0.0
    %2833 = vmatprep.subr.mxu0 0.0
    %2834 = vmatpush2.msra.mxu0 0.0
    %2835 = vmatprep.subr.mxu0 0.0
    %2836 = vmatpush2.msra.mxu0 0.0
    %2837 = vmatprep.subr.mxu0 0.0
    %2838 = vmatpush2.msra.mxu0 0.0
    %2839 = vmatprep.subr.mxu0 0.0
    %2840 = vmatpush2.msra.mxu0 0.0
    %2841 = vmatprep.subr.mxu0 0.0
    %2842 = vmatpush2.msra.mxu0 0.0
    %2843 = vmatprep.subr.mxu0 0.0
    %2844 = vmatpush2.msra.mxu0 0.0
    %2845 = vmatprep.subr.mxu0 0.0
    %2846 = vmatpush2.msra.mxu0 0.0
    %2847 = vmatprep.subr.mxu0 0.0
    %2848 = vmatpush2.msra.mxu0 0.0
    %2849 = vmatprep.subr.mxu0 0.0
    %2850 = vmatpush2.msra.mxu0 0.0
    %2851 = vmatprep.subr.mxu0 0.0
    %2852 = vmatpush2.msra.mxu0 0.0
    %2853 = vmatprep.mubr.f32.mxu0 0.0
    %2854 = vmatmul.mubr.f32.gmra.mxu0 %v2787
    %v2855 = vpop.f32.mrf.mxu0
    %v2856 = vadd.f32 0.0, %v2855
    %v2857 = vpop.f32.mrf.mxu0
    %2858 = vdwg.mxu0
    %v2860 = vrot.slane %v2856, 6
    %v2862 = vadd.f32 %v2242, %v2860
    %v2863 = vxor.u32 %v2862, 2147483648
    %v2864 = vmul.f32 %v2863, 1.442695
    %v2865 = vpow.pop %v2864
    %v2866 = vadd.f32 %v2865, 1.0
    %v2867 = vrcp.pop %v2866
    %v2868 = vmul.f32 1.0, %v2867
    %v2869 = vtanh.pop %v2862
    %v2871 = vrot.slane %v2775, 6
    %v2873 = vmul.f32 %v2868, %v2871
    %2875 = vrot.lane.b32.xlu0 %v2869, 64
    %v2876 = vpop.permute.xlu0 %2875
    %v2878 = vmul.f32 %v2868, %v2876
    %2880 = vrot.lane.b32.xlu0 %v2878, 32
    %v2881 = vpop.permute.xlu0 %2880
    %v2883 = vadd.f32 %v2873, %v2881
    %v2884 = vtanh.pop %v2883
    %2886 = vrot.lane.b32.xlu0 %v2884, 64
    %v2887 = vpop.permute.xlu0 %2886
    %v2889 = vmul.f32 %v2868, %v2887
    %2891 = vrot.lane.b32.xlu0 %v2889, 32
    %v2892 = vpop.permute.xlu0 %2891
    %2894 = vst.msk [vmem:[#allocation2 + $0x8] sm:$0xc] %vm488, %v2892
    %v2895 = vrot.slane %v2889, 2
    %2896 = vrot.lane.b32.xlu0 %v2895, 32
    %v2897 = vpop.permute.xlu0 %2896
    %v2898 = vsel %vm264, %v2897, 0
    %2900 = vmatprep.subr.mxu0 0.0
    %2901 = vmatpush1.msra.mxu0 0.0
    %2902 = vmatprep.subr.mxu0 0.0
    %2903 = vmatpush1.msra.mxu0 0.0
    %2904 = vmatprep.subr.mxu0 0.0
    %2905 = vmatpush1.msra.mxu0 0.0
    %2906 = vmatprep.subr.mxu0 0.0
    %2907 = vmatpush1.msra.mxu0 0.0
    %2908 = vmatprep.subr.mxu0 0.0
    %2909 = vmatpush1.msra.mxu0 0.0
    %2910 = vmatprep.subr.mxu0 0.0
    %2911 = vmatpush1.msra.mxu0 0.0
    %2912 = vmatprep.subr.mxu0 0.0
    %2913 = vmatpush1.msra.mxu0 0.0
    %2914 = vmatprep.subr.mxu0 0.0
    %2915 = vmatpush1.msra.mxu0 0.0
    %2916 = vmatprep.subr.mxu0 0.0
    %2917 = vmatpush1.msra.mxu0 0.0
    %2918 = vmatprep.subr.mxu0 0.0
    %2919 = vmatpush1.msra.mxu0 0.0
    %2920 = vmatprep.subr.mxu0 0.0
    %2921 = vmatpush1.msra.mxu0 0.0
    %2922 = vmatprep.subr.mxu0 0.0
    %2923 = vmatpush1.msra.mxu0 0.0
    %2924 = vmatprep.subr.mxu0 0.0
    %2925 = vmatpush1.msra.mxu0 %v2248
    %2926 = vmatprep.subr.mxu0 0.0
    %2927 = vmatpush1.msra.mxu0 %v2247
    %2928 = vmatprep.subr.mxu0 0.0
    %2929 = vmatpush1.msra.mxu0 %v2246
    %2930 = vmatprep.subr.mxu0 0.0
    %2931 = vmatpush1.msra.mxu0 %v2245
    %2932 = vmatprep.subr.mxu0 0.0
    %2933 = vmatpush2.msra.mxu0 0.0
    %2934 = vmatprep.subr.mxu0 0.0
    %2935 = vmatpush2.msra.mxu0 0.0
    %2936 = vmatprep.subr.mxu0 0.0
    %2937 = vmatpush2.msra.mxu0 0.0
    %2938 = vmatprep.subr.mxu0 0.0
    %2939 = vmatpush2.msra.mxu0 0.0
    %2940 = vmatprep.subr.mxu0 0.0
    %2941 = vmatpush2.msra.mxu0 0.0
    %2942 = vmatprep.subr.mxu0 0.0
    %2943 = vmatpush2.msra.mxu0 0.0
    %2944 = vmatprep.subr.mxu0 0.0
    %2945 = vmatpush2.msra.mxu0 0.0
    %2946 = vmatprep.subr.mxu0 0.0
    %2947 = vmatpush2.msra.mxu0 0.0
    %2948 = vmatprep.subr.mxu0 0.0
    %2949 = vmatpush2.msra.mxu0 0.0
    %2950 = vmatprep.subr.mxu0 0.0
    %2951 = vmatpush2.msra.mxu0 0.0
    %2952 = vmatprep.subr.mxu0 0.0
    %2953 = vmatpush2.msra.mxu0 0.0
    %2954 = vmatprep.subr.mxu0 0.0
    %2955 = vmatpush2.msra.mxu0 0.0
    %2956 = vmatprep.subr.mxu0 0.0
    %2957 = vmatpush2.msra.mxu0 0.0
    %2958 = vmatprep.subr.mxu0 0.0
    %2959 = vmatpush2.msra.mxu0 0.0
    %2960 = vmatprep.subr.mxu0 0.0
    %2961 = vmatpush2.msra.mxu0 0.0
    %2962 = vmatprep.subr.mxu0 0.0
    %2963 = vmatpush2.msra.mxu0 0.0
    %2964 = vmatprep.mubr.f32.mxu0 0.0
    %2965 = vmatmul.mubr.f32.gmra.mxu0 %v2898
    %v2966 = vpop.f32.mrf.mxu0
    %v2967 = vadd.f32 0.0, %v2966
    %v2968 = vpop.f32.mrf.mxu0
    %2969 = vdwg.mxu0
    %v2971 = vrot.slane %v2967, 4
    %v2973 = vadd.f32 %v2242, %v2971
    %v2974 = vxor.u32 %v2973, 2147483648
    %v2975 = vmul.f32 %v2974, 1.442695
    %v2976 = vpow.pop %v2975
    %v2977 = vadd.f32 %v2976, 1.0
    %v2978 = vrcp.pop %v2977
    %v2979 = vmul.f32 1.0, %v2978
    %v2980 = vtanh.pop %v2973
    %v2982 = vrot.slane %v2883, 6
    %v2984 = vmul.f32 %v2979, %v2982
    %2986 = vrot.lane.b32.xlu0 %v2980, 64
    %v2987 = vpop.permute.xlu0 %2986
    %v2989 = vmul.f32 %v2979, %v2987
    %2991 = vrot.lane.b32.xlu0 %v2989, 32
    %v2992 = vpop.permute.xlu0 %2991
    %v2994 = vadd.f32 %v2984, %v2992
    %v2995 = vtanh.pop %v2994
    %2997 = vrot.lane.b32.xlu0 %v2995, 64
    %v2998 = vpop.permute.xlu0 %2997
    %v3000 = vmul.f32 %v2979, %v2998
    %3002 = vrot.lane.b32.xlu0 %v3000, 32
    %v3003 = vpop.permute.xlu0 %3002
    %3005 = vst.msk [vmem:[#allocation2 + $0x8] sm:$0x30] %vm602, %v3003
    %v3006 = vrot.slane %v3000, 4
    %3007 = vrot.lane.b32.xlu0 %v3006, 32
    %v3008 = vpop.permute.xlu0 %3007
    %v3009 = vsel %vm264, %v3008, 0
    %3011 = vmatprep.subr.mxu0 0.0
    %3012 = vmatpush1.msra.mxu0 0.0
    %3013 = vmatprep.subr.mxu0 0.0
    %3014 = vmatpush1.msra.mxu0 0.0
    %3015 = vmatprep.subr.mxu0 0.0
    %3016 = vmatpush1.msra.mxu0 0.0
    %3017 = vmatprep.subr.mxu0 0.0
    %3018 = vmatpush1.msra.mxu0 0.0
    %3019 = vmatprep.subr.mxu0 0.0
    %3020 = vmatpush1.msra.mxu0 0.0
    %3021 = vmatprep.subr.mxu0 0.0
    %3022 = vmatpush1.msra.mxu0 0.0
    %3023 = vmatprep.subr.mxu0 0.0
    %3024 = vmatpush1.msra.mxu0 0.0
    %3025 = vmatprep.subr.mxu0 0.0
    %3026 = vmatpush1.msra.mxu0 0.0
    %3027 = vmatprep.subr.mxu0 0.0
    %3028 = vmatpush1.msra.mxu0 0.0
    %3029 = vmatprep.subr.mxu0 0.0
    %3030 = vmatpush1.msra.mxu0 0.0
    %3031 = vmatprep.subr.mxu0 0.0
    %3032 = vmatpush1.msra.mxu0 0.0
    %3033 = vmatprep.subr.mxu0 0.0
    %3034 = vmatpush1.msra.mxu0 0.0
    %3035 = vmatprep.subr.mxu0 0.0
    %3036 = vmatpush1.msra.mxu0 %v2248
    %3037 = vmatprep.subr.mxu0 0.0
    %3038 = vmatpush1.msra.mxu0 %v2247
    %3039 = vmatprep.subr.mxu0 0.0
    %3040 = vmatpush1.msra.mxu0 %v2246
    %3041 = vmatprep.subr.mxu0 0.0
    %3042 = vmatpush1.msra.mxu0 %v2245
    %3043 = vmatprep.subr.mxu0 0.0
    %3044 = vmatpush2.msra.mxu0 0.0
    %3045 = vmatprep.subr.mxu0 0.0
    %3046 = vmatpush2.msra.mxu0 0.0
    %3047 = vmatprep.subr.mxu0 0.0
    %3048 = vmatpush2.msra.mxu0 0.0
    %3049 = vmatprep.subr.mxu0 0.0
    %3050 = vmatpush2.msra.mxu0 0.0
    %3051 = vmatprep.subr.mxu0 0.0
    %3052 = vmatpush2.msra.mxu0 0.0
    %3053 = vmatprep.subr.mxu0 0.0
    %3054 = vmatpush2.msra.mxu0 0.0
    %3055 = vmatprep.subr.mxu0 0.0
    %3056 = vmatpush2.msra.mxu0 0.0
    %3057 = vmatprep.subr.mxu0 0.0
    %3058 = vmatpush2.msra.mxu0 0.0
    %3059 = vmatprep.subr.mxu0 0.0
    %3060 = vmatpush2.msra.mxu0 0.0
    %3061 = vmatprep.subr.mxu0 0.0
    %3062 = vmatpush2.msra.mxu0 0.0
    %3063 = vmatprep.subr.mxu0 0.0
    %3064 = vmatpush2.msra.mxu0 0.0
    %3065 = vmatprep.subr.mxu0 0.0
    %3066 = vmatpush2.msra.mxu0 0.0
    %3067 = vmatprep.subr.mxu0 0.0
    %3068 = vmatpush2.msra.mxu0 0.0
    %3069 = vmatprep.subr.mxu0 0.0
    %3070 = vmatpush2.msra.mxu0 0.0
    %3071 = vmatprep.subr.mxu0 0.0
    %3072 = vmatpush2.msra.mxu0 0.0
    %3073 = vmatprep.subr.mxu0 0.0
    %3074 = vmatpush2.msra.mxu0 0.0
    %3075 = vmatprep.mubr.f32.mxu0 0.0
    %3076 = vmatmul.mubr.f32.gmra.mxu0 %v3009
    %v3077 = vpop.f32.mrf.mxu0
    %v3078 = vadd.f32 0.0, %v3077
    %v3079 = vpop.f32.mrf.mxu0
    %3080 = vdwg.mxu0
    %v3082 = vrot.slane %v3078, 2
    %v3084 = vadd.f32 %v2242, %v3082
    %v3085 = vxor.u32 %v3084, 2147483648
    %v3086 = vmul.f32 %v3085, 1.442695
    %v3087 = vpow.pop %v3086
    %v3088 = vadd.f32 %v3087, 1.0
    %v3089 = vrcp.pop %v3088
    %v3090 = vmul.f32 1.0, %v3089
    %v3091 = vtanh.pop %v3084
    %v3093 = vrot.slane %v2994, 6
    %v3095 = vmul.f32 %v3090, %v3093
    %3097 = vrot.lane.b32.xlu0 %v3091, 64
    %v3098 = vpop.permute.xlu0 %3097
    %v3100 = vmul.f32 %v3090, %v3098
    %3102 = vrot.lane.b32.xlu0 %v3100, 32
    %v3103 = vpop.permute.xlu0 %3102
    %v3105 = vadd.f32 %v3095, %v3103
    %v3106 = vtanh.pop %v3105
    %3108 = vrot.lane.b32.xlu0 %v3106, 64
    %v3109 = vpop.permute.xlu0 %3108
    %v3111 = vmul.f32 %v3090, %v3109
    %3113 = vrot.lane.b32.xlu0 %v3111, 32
    %v3114 = vpop.permute.xlu0 %3113
    %3116 = vst.msk [vmem:[#allocation2 + $0x8] sm:$0xc0] %vm716, %v3114
    %v3117 = vld [vmem:[#allocation2] sm:$0xff]
    %v3118 = vld [vmem:[#allocation2 + $0x8] sm:$0xff]
    %v3119 = vld [vmem:[#allocation13] sm:$0xff]
    %v3120 = vld [vmem:[#allocation13 + $0x8] sm:$0xff]
    %v3121 = vld [vmem:[#allocation13 + $0x10] sm:$0xff]
    %v3122 = vld [vmem:[#allocation13 + $0x18] sm:$0xff]
    %v3123 = vld [vmem:[#allocation16] sm:$0x1]
    %v3125 = vlaneseq
    %v3126 = vshrl.u32 %v3125, 7
    %v3127 = vsub.s32 0, %v3126
    %v3128 = vrot.slane %v3123, %v3127
    %v3131 = vsel %vm264, %v3117, 0
    %v3134 = vsel %vm264, %v3118, 0
    %3136 = vmatprep.subr.mxu0 0.0
    %3137 = vmatpush1.msra.mxu0 0.0
    %3138 = vmatprep.subr.mxu0 0.0
    %3139 = vmatpush1.msra.mxu0 0.0
    %3140 = vmatprep.subr.mxu0 0.0
    %3141 = vmatpush1.msra.mxu0 0.0
    %3142 = vmatprep.subr.mxu0 0.0
    %3143 = vmatpush1.msra.mxu0 0.0
    %3144 = vmatprep.subr.mxu0 0.0
    %3145 = vmatpush1.msra.mxu0 0.0
    %3146 = vmatprep.subr.mxu0 0.0
    %3147 = vmatpush1.msra.mxu0 0.0
    %3148 = vmatprep.subr.mxu0 0.0
    %3149 = vmatpush1.msra.mxu0 0.0
    %3150 = vmatprep.subr.mxu0 0.0
    %3151 = vmatpush1.msra.mxu0 0.0
    %3152 = vmatprep.subr.mxu0 0.0
    %3153 = vmatpush1.msra.mxu0 0.0
    %3154 = vmatprep.subr.mxu0 0.0
    %3155 = vmatpush1.msra.mxu0 0.0
    %3156 = vmatprep.subr.mxu0 0.0
    %3157 = vmatpush1.msra.mxu0 0.0
    %3158 = vmatprep.subr.mxu0 0.0
    %3159 = vmatpush1.msra.mxu0 0.0
    %3160 = vmatprep.subr.mxu0 0.0
    %3161 = vmatpush1.msra.mxu0 %v3122
    %3162 = vmatprep.subr.mxu0 0.0
    %3163 = vmatpush1.msra.mxu0 %v3121
    %3164 = vmatprep.subr.mxu0 0.0
    %3165 = vmatpush1.msra.mxu0 %v3120
    %3166 = vmatprep.subr.mxu0 0.0
    %3167 = vmatpush1.msra.mxu0 %v3119
    %3168 = vmatprep.subr.mxu0 0.0
    %3169 = vmatpush2.msra.mxu0 0.0
    %3170 = vmatprep.subr.mxu0 0.0
    %3171 = vmatpush2.msra.mxu0 0.0
    %3172 = vmatprep.subr.mxu0 0.0
    %3173 = vmatpush2.msra.mxu0 0.0
    %3174 = vmatprep.subr.mxu0 0.0
    %3175 = vmatpush2.msra.mxu0 0.0
    %3176 = vmatprep.subr.mxu0 0.0
    %3177 = vmatpush2.msra.mxu0 0.0
    %3178 = vmatprep.subr.mxu0 0.0
    %3179 = vmatpush2.msra.mxu0 0.0
    %3180 = vmatprep.subr.mxu0 0.0
    %3181 = vmatpush2.msra.mxu0 0.0
    %3182 = vmatprep.subr.mxu0 0.0
    %3183 = vmatpush2.msra.mxu0 0.0
    %3184 = vmatprep.subr.mxu0 0.0
    %3185 = vmatpush2.msra.mxu0 0.0
    %3186 = vmatprep.subr.mxu0 0.0
    %3187 = vmatpush2.msra.mxu0 0.0
    %3188 = vmatprep.subr.mxu0 0.0
    %3189 = vmatpush2.msra.mxu0 0.0
    %3190 = vmatprep.subr.mxu0 0.0
    %3191 = vmatpush2.msra.mxu0 0.0
    %3192 = vmatprep.subr.mxu0 0.0
    %3193 = vmatpush2.msra.mxu0 0.0
    %3194 = vmatprep.subr.mxu0 0.0
    %3195 = vmatpush2.msra.mxu0 0.0
    %3196 = vmatprep.subr.mxu0 0.0
    %3197 = vmatpush2.msra.mxu0 0.0
    %3198 = vmatprep.subr.mxu0 0.0
    %3199 = vmatpush2.msra.mxu0 0.0
    %3200 = vmatprep.mubr.f32.mxu0 0.0
    %3201 = vmatmul.mubr.f32.gmra.mxu0 %v3131
    %v3202 = vpop.f32.mrf.mxu0
    %v3203 = vadd.f32 %v3128, %v3202
    %v3204 = vpop.f32.mrf.mxu0
    %3205 = vmatprep.mubr.f32.mxu0 0.0
    %3206 = vmatmul.mubr.f32.gmra.mxu0 %v3134
    %v3207 = vpop.f32.mrf.mxu0
    %v3208 = vadd.f32 %v3128, %v3207
    %v3209 = vpop.f32.mrf.mxu0
    %3210 = vdwg.mxu0
    %v3211 = vld [vmem:[#allocation14] sm:$0xff]
    %v3212 = vld [vmem:[#allocation14 + $0x8] sm:$0xff]
    %v3213 = vld [vmem:[#allocation14 + $0x10] sm:$0xff]
    %v3214 = vld [vmem:[#allocation14 + $0x18] sm:$0xff]
    %3215 = vmatprep.subr.mxu0 0.0
    %3216 = vmatpush1.msra.mxu0 0.0
    %3217 = vmatprep.subr.mxu0 0.0
    %3218 = vmatpush1.msra.mxu0 0.0
    %3219 = vmatprep.subr.mxu0 0.0
    %3220 = vmatpush1.msra.mxu0 0.0
    %3221 = vmatprep.subr.mxu0 0.0
    %3222 = vmatpush1.msra.mxu0 0.0
    %3223 = vmatprep.subr.mxu0 0.0
    %3224 = vmatpush1.msra.mxu0 0.0
    %3225 = vmatprep.subr.mxu0 0.0
    %3226 = vmatpush1.msra.mxu0 0.0
    %3227 = vmatprep.subr.mxu0 0.0
    %3228 = vmatpush1.msra.mxu0 0.0
    %3229 = vmatprep.subr.mxu0 0.0
    %3230 = vmatpush1.msra.mxu0 0.0
    %3231 = vmatprep.subr.mxu0 0.0
    %3232 = vmatpush1.msra.mxu0 0.0
    %3233 = vmatprep.subr.mxu0 0.0
    %3234 = vmatpush1.msra.mxu0 0.0
    %3235 = vmatprep.subr.mxu0 0.0
    %3236 = vmatpush1.msra.mxu0 0.0
    %3237 = vmatprep.subr.mxu0 0.0
    %3238 = vmatpush1.msra.mxu0 0.0
    %3239 = vmatprep.subr.mxu0 0.0
    %3240 = vmatpush1.msra.mxu0 %v3214
    %3241 = vmatprep.subr.mxu0 0.0
    %3242 = vmatpush1.msra.mxu0 %v3213
    %3243 = vmatprep.subr.mxu0 0.0
    %3244 = vmatpush1.msra.mxu0 %v3212
    %3245 = vmatprep.subr.mxu0 0.0
    %3246 = vmatpush1.msra.mxu0 %v3211
    %3247 = vmatprep.subr.mxu0 0.0
    %3248 = vmatpush2.msra.mxu0 0.0
    %3249 = vmatprep.subr.mxu0 0.0
    %3250 = vmatpush2.msra.mxu0 0.0
    %3251 = vmatprep.subr.mxu0 0.0
    %3252 = vmatpush2.msra.mxu0 0.0
    %3253 = vmatprep.subr.mxu0 0.0
    %3254 = vmatpush2.msra.mxu0 0.0
    %3255 = vmatprep.subr.mxu0 0.0
    %3256 = vmatpush2.msra.mxu0 0.0
    %3257 = vmatprep.subr.mxu0 0.0
    %3258 = vmatpush2.msra.mxu0 0.0
    %3259 = vmatprep.subr.mxu0 0.0
    %3260 = vmatpush2.msra.mxu0 0.0
    %3261 = vmatprep.subr.mxu0 0.0
    %3262 = vmatpush2.msra.mxu0 0.0
    %3263 = vmatprep.subr.mxu0 0.0
    %3264 = vmatpush2.msra.mxu0 0.0
    %3265 = vmatprep.subr.mxu0 0.0
    %3266 = vmatpush2.msra.mxu0 0.0
    %3267 = vmatprep.subr.mxu0 0.0
    %3268 = vmatpush2.msra.mxu0 0.0
    %3269 = vmatprep.subr.mxu0 0.0
    %3270 = vmatpush2.msra.mxu0 0.0
    %3271 = vmatprep.subr.mxu0 0.0
    %3272 = vmatpush2.msra.mxu0 0.0
    %3273 = vmatprep.subr.mxu0 0.0
    %3274 = vmatpush2.msra.mxu0 0.0
    %3275 = vmatprep.subr.mxu0 0.0
    %3276 = vmatpush2.msra.mxu0 0.0
    %3277 = vmatprep.subr.mxu0 0.0
    %3278 = vmatpush2.msra.mxu0 0.0
    %3279 = vmatprep.mubr.f32.mxu0 0.0
    %3280 = vmatmul.mubr.f32.gmra.mxu0 %v266
    %v3281 = vpop.f32.mrf.mxu0
    %v3282 = vadd.f32 0.0, %v3281
    %v3283 = vpop.f32.mrf.mxu0
    %3284 = vdwg.mxu0
    %v3285 = vadd.f32 %v3203, %v3282
    %v3286 = vxor.u32 %v3285, 2147483648
    %v3287 = vmul.f32 %v3286, 1.442695
    %v3288 = vpow.pop %v3287
    %v3289 = vadd.f32 %v3288, 1.0
    %v3290 = vrcp.pop %v3289
    %v3291 = vmul.f32 1.0, %v3290
    %v3292 = vtanh.pop %v3285
    %v3293 = vmul.f32 %v3291, 0.0
    %3295 = vrot.lane.b32.xlu0 %v3292, 64
    %v3296 = vpop.permute.xlu0 %3295
    %v3298 = vmul.f32 %v3291, %v3296
    %3300 = vrot.lane.b32.xlu0 %v3298, 32
    %v3301 = vpop.permute.xlu0 %3300
    %v3303 = vadd.f32 %v3293, %v3301
    %v3304 = vtanh.pop %v3303
    %3306 = vrot.lane.b32.xlu0 %v3304, 64
    %v3307 = vpop.permute.xlu0 %3306
    %v3309 = vmul.f32 %v3291, %v3307
    %3311 = vrot.lane.b32.xlu0 %v3309, 32
    %v3312 = vpop.permute.xlu0 %3311
    %3314 = vst.msk [vmem:[#allocation2] sm:$0x3] %vm377, %v3312
    %v3315 = vsel %vm264, %v3312, 0
    %3317 = vmatprep.subr.mxu0 0.0
    %3318 = vmatpush1.msra.mxu0 0.0
    %3319 = vmatprep.subr.mxu0 0.0
    %3320 = vmatpush1.msra.mxu0 0.0
    %3321 = vmatprep.subr.mxu0 0.0
    %3322 = vmatpush1.msra.mxu0 0.0
    %3323 = vmatprep.subr.mxu0 0.0
    %3324 = vmatpush1.msra.mxu0 0.0
    %3325 = vmatprep.subr.mxu0 0.0
    %3326 = vmatpush1.msra.mxu0 0.0
    %3327 = vmatprep.subr.mxu0 0.0
    %3328 = vmatpush1.msra.mxu0 0.0
    %3329 = vmatprep.subr.mxu0 0.0
    %3330 = vmatpush1.msra.mxu0 0.0
    %3331 = vmatprep.subr.mxu0 0.0
    %3332 = vmatpush1.msra.mxu0 0.0
    %3333 = vmatprep.subr.mxu0 0.0
    %3334 = vmatpush1.msra.mxu0 0.0
    %3335 = vmatprep.subr.mxu0 0.0
    %3336 = vmatpush1.msra.mxu0 0.0
    %3337 = vmatprep.subr.mxu0 0.0
    %3338 = vmatpush1.msra.mxu0 0.0
    %3339 = vmatprep.subr.mxu0 0.0
    %3340 = vmatpush1.msra.mxu0 0.0
    %3341 = vmatprep.subr.mxu0 0.0
    %3342 = vmatpush1.msra.mxu0 %v3214
    %3343 = vmatprep.subr.mxu0 0.0
    %3344 = vmatpush1.msra.mxu0 %v3213
    %3345 = vmatprep.subr.mxu0 0.0
    %3346 = vmatpush1.msra.mxu0 %v3212
    %3347 = vmatprep.subr.mxu0 0.0
    %3348 = vmatpush1.msra.mxu0 %v3211
    %3349 = vmatprep.subr.mxu0 0.0
    %3350 = vmatpush2.msra.mxu0 0.0
    %3351 = vmatprep.subr.mxu0 0.0
    %3352 = vmatpush2.msra.mxu0 0.0
    %3353 = vmatprep.subr.mxu0 0.0
    %3354 = vmatpush2.msra.mxu0 0.0
    %3355 = vmatprep.subr.mxu0 0.0
    %3356 = vmatpush2.msra.mxu0 0.0
    %3357 = vmatprep.subr.mxu0 0.0
    %3358 = vmatpush2.msra.mxu0 0.0
    %3359 = vmatprep.subr.mxu0 0.0
    %3360 = vmatpush2.msra.mxu0 0.0
    %3361 = vmatprep.subr.mxu0 0.0
    %3362 = vmatpush2.msra.mxu0 0.0
    %3363 = vmatprep.subr.mxu0 0.0
    %3364 = vmatpush2.msra.mxu0 0.0
    %3365 = vmatprep.subr.mxu0 0.0
    %3366 = vmatpush2.msra.mxu0 0.0
    %3367 = vmatprep.subr.mxu0 0.0
    %3368 = vmatpush2.msra.mxu0 0.0
    %3369 = vmatprep.subr.mxu0 0.0
    %3370 = vmatpush2.msra.mxu0 0.0
    %3371 = vmatprep.subr.mxu0 0.0
    %3372 = vmatpush2.msra.mxu0 0.0
    %3373 = vmatprep.subr.mxu0 0.0
    %3374 = vmatpush2.msra.mxu0 0.0
    %3375 = vmatprep.subr.mxu0 0.0
    %3376 = vmatpush2.msra.mxu0 0.0
    %3377 = vmatprep.subr.mxu0 0.0
    %3378 = vmatpush2.msra.mxu0 0.0
    %3379 = vmatprep.subr.mxu0 0.0
    %3380 = vmatpush2.msra.mxu0 0.0
    %3381 = vmatprep.mubr.f32.mxu0 0.0
    %3382 = vmatmul.mubr.f32.gmra.mxu0 %v3315
    %v3383 = vpop.f32.mrf.mxu0
    %v3384 = vadd.f32 0.0, %v3383
    %v3385 = vpop.f32.mrf.mxu0
    %3386 = vdwg.mxu0
    %v3388 = vrot.slane %v3384, 6
    %v3390 = vadd.f32 %v3203, %v3388
    %v3391 = vxor.u32 %v3390, 2147483648
    %v3392 = vmul.f32 %v3391, 1.442695
    %v3393 = vpow.pop %v3392
    %v3394 = vadd.f32 %v3393, 1.0
    %v3395 = vrcp.pop %v3394
    %v3396 = vmul.f32 1.0, %v3395
    %v3397 = vtanh.pop %v3390
    %v3399 = vrot.slane %v3303, 6
    %v3401 = vmul.f32 %v3396, %v3399
    %3403 = vrot.lane.b32.xlu0 %v3397, 64
    %v3404 = vpop.permute.xlu0 %3403
    %v3406 = vmul.f32 %v3396, %v3404
    %3408 = vrot.lane.b32.xlu0 %v3406, 32
    %v3409 = vpop.permute.xlu0 %3408
    %v3411 = vadd.f32 %v3401, %v3409
    %v3412 = vtanh.pop %v3411
    %3414 = vrot.lane.b32.xlu0 %v3412, 64
    %v3415 = vpop.permute.xlu0 %3414
    %v3417 = vmul.f32 %v3396, %v3415
    %3419 = vrot.lane.b32.xlu0 %v3417, 32
    %v3420 = vpop.permute.xlu0 %3419
    %3422 = vst.msk [vmem:[#allocation2] sm:$0xc] %vm488, %v3420
    %v3423 = vrot.slane %v3417, 2
    %3424 = vrot.lane.b32.xlu0 %v3423, 32
    %v3425 = vpop.permute.xlu0 %3424
    %v3426 = vsel %vm264, %v3425, 0
    %3428 = vmatprep.subr.mxu0 0.0
    %3429 = vmatpush1.msra.mxu0 0.0
    %3430 = vmatprep.subr.mxu0 0.0
    %3431 = vmatpush1.msra.mxu0 0.0
    %3432 = vmatprep.subr.mxu0 0.0
    %3433 = vmatpush1.msra.mxu0 0.0
    %3434 = vmatprep.subr.mxu0 0.0
    %3435 = vmatpush1.msra.mxu0 0.0
    %3436 = vmatprep.subr.mxu0 0.0
    %3437 = vmatpush1.msra.mxu0 0.0
    %3438 = vmatprep.subr.mxu0 0.0
    %3439 = vmatpush1.msra.mxu0 0.0
    %3440 = vmatprep.subr.mxu0 0.0
    %3441 = vmatpush1.msra.mxu0 0.0
    %3442 = vmatprep.subr.mxu0 0.0
    %3443 = vmatpush1.msra.mxu0 0.0
    %3444 = vmatprep.subr.mxu0 0.0
    %3445 = vmatpush1.msra.mxu0 0.0
    %3446 = vmatprep.subr.mxu0 0.0
    %3447 = vmatpush1.msra.mxu0 0.0
    %3448 = vmatprep.subr.mxu0 0.0
    %3449 = vmatpush1.msra.mxu0 0.0
    %3450 = vmatprep.subr.mxu0 0.0
    %3451 = vmatpush1.msra.mxu0 0.0
    %3452 = vmatprep.subr.mxu0 0.0
    %3453 = vmatpush1.msra.mxu0 %v3214
    %3454 = vmatprep.subr.mxu0 0.0
    %3455 = vmatpush1.msra.mxu0 %v3213
    %3456 = vmatprep.subr.mxu0 0.0
    %3457 = vmatpush1.msra.mxu0 %v3212
    %3458 = vmatprep.subr.mxu0 0.0
    %3459 = vmatpush1.msra.mxu0 %v3211
    %3460 = vmatprep.subr.mxu0 0.0
    %3461 = vmatpush2.msra.mxu0 0.0
    %3462 = vmatprep.subr.mxu0 0.0
    %3463 = vmatpush2.msra.mxu0 0.0
    %3464 = vmatprep.subr.mxu0 0.0
    %3465 = vmatpush2.msra.mxu0 0.0
    %3466 = vmatprep.subr.mxu0 0.0
    %3467 = vmatpush2.msra.mxu0 0.0
    %3468 = vmatprep.subr.mxu0 0.0
    %3469 = vmatpush2.msra.mxu0 0.0
    %3470 = vmatprep.subr.mxu0 0.0
    %3471 = vmatpush2.msra.mxu0 0.0
    %3472 = vmatprep.subr.mxu0 0.0
    %3473 = vmatpush2.msra.mxu0 0.0
    %3474 = vmatprep.subr.mxu0 0.0
    %3475 = vmatpush2.msra.mxu0 0.0
    %3476 = vmatprep.subr.mxu0 0.0
    %3477 = vmatpush2.msra.mxu0 0.0
    %3478 = vmatprep.subr.mxu0 0.0
    %3479 = vmatpush2.msra.mxu0 0.0
    %3480 = vmatprep.subr.mxu0 0.0
    %3481 = vmatpush2.msra.mxu0 0.0
    %3482 = vmatprep.subr.mxu0 0.0
    %3483 = vmatpush2.msra.mxu0 0.0
    %3484 = vmatprep.subr.mxu0 0.0
    %3485 = vmatpush2.msra.mxu0 0.0
    %3486 = vmatprep.subr.mxu0 0.0
    %3487 = vmatpush2.msra.mxu0 0.0
    %3488 = vmatprep.subr.mxu0 0.0
    %3489 = vmatpush2.msra.mxu0 0.0
    %3490 = vmatprep.subr.mxu0 0.0
    %3491 = vmatpush2.msra.mxu0 0.0
    %3492 = vmatprep.mubr.f32.mxu0 0.0
    %3493 = vmatmul.mubr.f32.gmra.mxu0 %v3426
    %v3494 = vpop.f32.mrf.mxu0
    %v3495 = vadd.f32 0.0, %v3494
    %v3496 = vpop.f32.mrf.mxu0
    %3497 = vdwg.mxu0
    %v3499 = vrot.slane %v3495, 4
    %v3501 = vadd.f32 %v3203, %v3499
    %v3502 = vxor.u32 %v3501, 2147483648
    %v3503 = vmul.f32 %v3502, 1.442695
    %v3504 = vpow.pop %v3503
    %v3505 = vadd.f32 %v3504, 1.0
    %v3506 = vrcp.pop %v3505
    %v3507 = vmul.f32 1.0, %v3506
    %v3508 = vtanh.pop %v3501
    %v3510 = vrot.slane %v3411, 6
    %v3512 = vmul.f32 %v3507, %v3510
    %3514 = vrot.lane.b32.xlu0 %v3508, 64
    %v3515 = vpop.permute.xlu0 %3514
    %v3517 = vmul.f32 %v3507, %v3515
    %3519 = vrot.lane.b32.xlu0 %v3517, 32
    %v3520 = vpop.permute.xlu0 %3519
    %v3522 = vadd.f32 %v3512, %v3520
    %v3523 = vtanh.pop %v3522
    %3525 = vrot.lane.b32.xlu0 %v3523, 64
    %v3526 = vpop.permute.xlu0 %3525
    %v3528 = vmul.f32 %v3507, %v3526
    %3530 = vrot.lane.b32.xlu0 %v3528, 32
    %v3531 = vpop.permute.xlu0 %3530
    %3533 = vst.msk [vmem:[#allocation2] sm:$0x30] %vm602, %v3531
    %v3534 = vrot.slane %v3528, 4
    %3535 = vrot.lane.b32.xlu0 %v3534, 32
    %v3536 = vpop.permute.xlu0 %3535
    %v3537 = vsel %vm264, %v3536, 0
    %3539 = vmatprep.subr.mxu0 0.0
    %3540 = vmatpush1.msra.mxu0 0.0
    %3541 = vmatprep.subr.mxu0 0.0
    %3542 = vmatpush1.msra.mxu0 0.0
    %3543 = vmatprep.subr.mxu0 0.0
    %3544 = vmatpush1.msra.mxu0 0.0
    %3545 = vmatprep.subr.mxu0 0.0
    %3546 = vmatpush1.msra.mxu0 0.0
    %3547 = vmatprep.subr.mxu0 0.0
    %3548 = vmatpush1.msra.mxu0 0.0
    %3549 = vmatprep.subr.mxu0 0.0
    %3550 = vmatpush1.msra.mxu0 0.0
    %3551 = vmatprep.subr.mxu0 0.0
    %3552 = vmatpush1.msra.mxu0 0.0
    %3553 = vmatprep.subr.mxu0 0.0
    %3554 = vmatpush1.msra.mxu0 0.0
    %3555 = vmatprep.subr.mxu0 0.0
    %3556 = vmatpush1.msra.mxu0 0.0
    %3557 = vmatprep.subr.mxu0 0.0
    %3558 = vmatpush1.msra.mxu0 0.0
    %3559 = vmatprep.subr.mxu0 0.0
    %3560 = vmatpush1.msra.mxu0 0.0
    %3561 = vmatprep.subr.mxu0 0.0
    %3562 = vmatpush1.msra.mxu0 0.0
    %3563 = vmatprep.subr.mxu0 0.0
    %3564 = vmatpush1.msra.mxu0 %v3214
    %3565 = vmatprep.subr.mxu0 0.0
    %3566 = vmatpush1.msra.mxu0 %v3213
    %3567 = vmatprep.subr.mxu0 0.0
    %3568 = vmatpush1.msra.mxu0 %v3212
    %3569 = vmatprep.subr.mxu0 0.0
    %3570 = vmatpush1.msra.mxu0 %v3211
    %3571 = vmatprep.subr.mxu0 0.0
    %3572 = vmatpush2.msra.mxu0 0.0
    %3573 = vmatprep.subr.mxu0 0.0
    %3574 = vmatpush2.msra.mxu0 0.0
    %3575 = vmatprep.subr.mxu0 0.0
    %3576 = vmatpush2.msra.mxu0 0.0
    %3577 = vmatprep.subr.mxu0 0.0
    %3578 = vmatpush2.msra.mxu0 0.0
    %3579 = vmatprep.subr.mxu0 0.0
    %3580 = vmatpush2.msra.mxu0 0.0
    %3581 = vmatprep.subr.mxu0 0.0
    %3582 = vmatpush2.msra.mxu0 0.0
    %3583 = vmatprep.subr.mxu0 0.0
    %3584 = vmatpush2.msra.mxu0 0.0
    %3585 = vmatprep.subr.mxu0 0.0
    %3586 = vmatpush2.msra.mxu0 0.0
    %3587 = vmatprep.subr.mxu0 0.0
    %3588 = vmatpush2.msra.mxu0 0.0
    %3589 = vmatprep.subr.mxu0 0.0
    %3590 = vmatpush2.msra.mxu0 0.0
    %3591 = vmatprep.subr.mxu0 0.0
    %3592 = vmatpush2.msra.mxu0 0.0
    %3593 = vmatprep.subr.mxu0 0.0
    %3594 = vmatpush2.msra.mxu0 0.0
    %3595 = vmatprep.subr.mxu0 0.0
    %3596 = vmatpush2.msra.mxu0 0.0
    %3597 = vmatprep.subr.mxu0 0.0
    %3598 = vmatpush2.msra.mxu0 0.0
    %3599 = vmatprep.subr.mxu0 0.0
    %3600 = vmatpush2.msra.mxu0 0.0
    %3601 = vmatprep.subr.mxu0 0.0
    %3602 = vmatpush2.msra.mxu0 0.0
    %3603 = vmatprep.mubr.f32.mxu0 0.0
    %3604 = vmatmul.mubr.f32.gmra.mxu0 %v3537
    %v3605 = vpop.f32.mrf.mxu0
    %v3606 = vadd.f32 0.0, %v3605
    %v3607 = vpop.f32.mrf.mxu0
    %3608 = vdwg.mxu0
    %v3610 = vrot.slane %v3606, 2
    %v3612 = vadd.f32 %v3203, %v3610
    %v3613 = vxor.u32 %v3612, 2147483648
    %v3614 = vmul.f32 %v3613, 1.442695
    %v3615 = vpow.pop %v3614
    %v3616 = vadd.f32 %v3615, 1.0
    %v3617 = vrcp.pop %v3616
    %v3618 = vmul.f32 1.0, %v3617
    %v3619 = vtanh.pop %v3612
    %v3621 = vrot.slane %v3522, 6
    %v3623 = vmul.f32 %v3618, %v3621
    %3625 = vrot.lane.b32.xlu0 %v3619, 64
    %v3626 = vpop.permute.xlu0 %3625
    %v3628 = vmul.f32 %v3618, %v3626
    %3630 = vrot.lane.b32.xlu0 %v3628, 32
    %v3631 = vpop.permute.xlu0 %3630
    %v3633 = vadd.f32 %v3623, %v3631
    %v3634 = vtanh.pop %v3633
    %3636 = vrot.lane.b32.xlu0 %v3634, 64
    %v3637 = vpop.permute.xlu0 %3636
    %v3639 = vmul.f32 %v3618, %v3637
    %3641 = vrot.lane.b32.xlu0 %v3639, 32
    %v3642 = vpop.permute.xlu0 %3641
    %3644 = vst.msk [vmem:[#allocation2] sm:$0xc0] %vm716, %v3642
    %v3645 = vrot.slane %v3639, 6
    %3646 = vrot.lane.b32.xlu0 %v3645, 32
    %v3647 = vpop.permute.xlu0 %3646
    %v3648 = vsel %vm264, %v3647, 0
    %3650 = vmatprep.subr.mxu0 0.0
    %3651 = vmatpush1.msra.mxu0 0.0
    %3652 = vmatprep.subr.mxu0 0.0
    %3653 = vmatpush1.msra.mxu0 0.0
    %3654 = vmatprep.subr.mxu0 0.0
    %3655 = vmatpush1.msra.mxu0 0.0
    %3656 = vmatprep.subr.mxu0 0.0
    %3657 = vmatpush1.msra.mxu0 0.0
    %3658 = vmatprep.subr.mxu0 0.0
    %3659 = vmatpush1.msra.mxu0 0.0
    %3660 = vmatprep.subr.mxu0 0.0
    %3661 = vmatpush1.msra.mxu0 0.0
    %3662 = vmatprep.subr.mxu0 0.0
    %3663 = vmatpush1.msra.mxu0 0.0
    %3664 = vmatprep.subr.mxu0 0.0
    %3665 = vmatpush1.msra.mxu0 0.0
    %3666 = vmatprep.subr.mxu0 0.0
    %3667 = vmatpush1.msra.mxu0 0.0
    %3668 = vmatprep.subr.mxu0 0.0
    %3669 = vmatpush1.msra.mxu0 0.0
    %3670 = vmatprep.subr.mxu0 0.0
    %3671 = vmatpush1.msra.mxu0 0.0
    %3672 = vmatprep.subr.mxu0 0.0
    %3673 = vmatpush1.msra.mxu0 0.0
    %3674 = vmatprep.subr.mxu0 0.0
    %3675 = vmatpush1.msra.mxu0 %v3214
    %3676 = vmatprep.subr.mxu0 0.0
    %3677 = vmatpush1.msra.mxu0 %v3213
    %3678 = vmatprep.subr.mxu0 0.0
    %3679 = vmatpush1.msra.mxu0 %v3212
    %3680 = vmatprep.subr.mxu0 0.0
    %3681 = vmatpush1.msra.mxu0 %v3211
    %3682 = vmatprep.subr.mxu0 0.0
    %3683 = vmatpush2.msra.mxu0 0.0
    %3684 = vmatprep.subr.mxu0 0.0
    %3685 = vmatpush2.msra.mxu0 0.0
    %3686 = vmatprep.subr.mxu0 0.0
    %3687 = vmatpush2.msra.mxu0 0.0
    %3688 = vmatprep.subr.mxu0 0.0
    %3689 = vmatpush2.msra.mxu0 0.0
    %3690 = vmatprep.subr.mxu0 0.0
    %3691 = vmatpush2.msra.mxu0 0.0
    %3692 = vmatprep.subr.mxu0 0.0
    %3693 = vmatpush2.msra.mxu0 0.0
    %3694 = vmatprep.subr.mxu0 0.0
    %3695 = vmatpush2.msra.mxu0 0.0
    %3696 = vmatprep.subr.mxu0 0.0
    %3697 = vmatpush2.msra.mxu0 0.0
    %3698 = vmatprep.subr.mxu0 0.0
    %3699 = vmatpush2.msra.mxu0 0.0
    %3700 = vmatprep.subr.mxu0 0.0
    %3701 = vmatpush2.msra.mxu0 0.0
    %3702 = vmatprep.subr.mxu0 0.0
    %3703 = vmatpush2.msra.mxu0 0.0
    %3704 = vmatprep.subr.mxu0 0.0
    %3705 = vmatpush2.msra.mxu0 0.0
    %3706 = vmatprep.subr.mxu0 0.0
    %3707 = vmatpush2.msra.mxu0 0.0
    %3708 = vmatprep.subr.mxu0 0.0
    %3709 = vmatpush2.msra.mxu0 0.0
    %3710 = vmatprep.subr.mxu0 0.0
    %3711 = vmatpush2.msra.mxu0 0.0
    %3712 = vmatprep.subr.mxu0 0.0
    %3713 = vmatpush2.msra.mxu0 0.0
    %3714 = vmatprep.mubr.f32.mxu0 0.0
    %3715 = vmatmul.mubr.f32.gmra.mxu0 %v3648
    %v3716 = vpop.f32.mrf.mxu0
    %v3717 = vadd.f32 0.0, %v3716
    %v3718 = vpop.f32.mrf.mxu0
    %3719 = vdwg.mxu0
    %v3720 = vadd.f32 %v3208, %v3717
    %v3721 = vxor.u32 %v3720, 2147483648
    %v3722 = vmul.f32 %v3721, 1.442695
    %v3723 = vpow.pop %v3722
    %v3724 = vadd.f32 %v3723, 1.0
    %v3725 = vrcp.pop %v3724
    %v3726 = vmul.f32 1.0, %v3725
    %v3727 = vtanh.pop %v3720
    %v3729 = vrot.slane %v3633, 6
    %v3731 = vmul.f32 %v3726, %v3729
    %3733 = vrot.lane.b32.xlu0 %v3727, 64
    %v3734 = vpop.permute.xlu0 %3733
    %v3736 = vmul.f32 %v3726, %v3734
    %3738 = vrot.lane.b32.xlu0 %v3736, 32
    %v3739 = vpop.permute.xlu0 %3738
    %v3741 = vadd.f32 %v3731, %v3739
    %v3742 = vtanh.pop %v3741
    %3744 = vrot.lane.b32.xlu0 %v3742, 64
    %v3745 = vpop.permute.xlu0 %3744
    %v3747 = vmul.f32 %v3726, %v3745
    %3749 = vrot.lane.b32.xlu0 %v3747, 32
    %v3750 = vpop.permute.xlu0 %3749
    %3752 = vst.msk [vmem:[#allocation2 + $0x8] sm:$0x3] %vm377, %v3750
    %v3753 = vsel %vm264, %v3750, 0
    %3755 = vmatprep.subr.mxu0 0.0
    %3756 = vmatpush1.msra.mxu0 0.0
    %3757 = vmatprep.subr.mxu0 0.0
    %3758 = vmatpush1.msra.mxu0 0.0
    %3759 = vmatprep.subr.mxu0 0.0
    %3760 = vmatpush1.msra.mxu0 0.0
    %3761 = vmatprep.subr.mxu0 0.0
    %3762 = vmatpush1.msra.mxu0 0.0
    %3763 = vmatprep.subr.mxu0 0.0
    %3764 = vmatpush1.msra.mxu0 0.0
    %3765 = vmatprep.subr.mxu0 0.0
    %3766 = vmatpush1.msra.mxu0 0.0
    %3767 = vmatprep.subr.mxu0 0.0
    %3768 = vmatpush1.msra.mxu0 0.0
    %3769 = vmatprep.subr.mxu0 0.0
    %3770 = vmatpush1.msra.mxu0 0.0
    %3771 = vmatprep.subr.mxu0 0.0
    %3772 = vmatpush1.msra.mxu0 0.0
    %3773 = vmatprep.subr.mxu0 0.0
    %3774 = vmatpush1.msra.mxu0 0.0
    %3775 = vmatprep.subr.mxu0 0.0
    %3776 = vmatpush1.msra.mxu0 0.0
    %3777 = vmatprep.subr.mxu0 0.0
    %3778 = vmatpush1.msra.mxu0 0.0
    %3779 = vmatprep.subr.mxu0 0.0
    %3780 = vmatpush1.msra.mxu0 %v3214
    %3781 = vmatprep.subr.mxu0 0.0
    %3782 = vmatpush1.msra.mxu0 %v3213
    %3783 = vmatprep.subr.mxu0 0.0
    %3784 = vmatpush1.msra.mxu0 %v3212
    %3785 = vmatprep.subr.mxu0 0.0
    %3786 = vmatpush1.msra.mxu0 %v3211
    %3787 = vmatprep.subr.mxu0 0.0
    %3788 = vmatpush2.msra.mxu0 0.0
    %3789 = vmatprep.subr.mxu0 0.0
    %3790 = vmatpush2.msra.mxu0 0.0
    %3791 = vmatprep.subr.mxu0 0.0
    %3792 = vmatpush2.msra.mxu0 0.0
    %3793 = vmatprep.subr.mxu0 0.0
    %3794 = vmatpush2.msra.mxu0 0.0
    %3795 = vmatprep.subr.mxu0 0.0
    %3796 = vmatpush2.msra.mxu0 0.0
    %3797 = vmatprep.subr.mxu0 0.0
    %3798 = vmatpush2.msra.mxu0 0.0
    %3799 = vmatprep.subr.mxu0 0.0
    %3800 = vmatpush2.msra.mxu0 0.0
    %3801 = vmatprep.subr.mxu0 0.0
    %3802 = vmatpush2.msra.mxu0 0.0
    %3803 = vmatprep.subr.mxu0 0.0
    %3804 = vmatpush2.msra.mxu0 0.0
    %3805 = vmatprep.subr.mxu0 0.0
    %3806 = vmatpush2.msra.mxu0 0.0
    %3807 = vmatprep.subr.mxu0 0.0
    %3808 = vmatpush2.msra.mxu0 0.0
    %3809 = vmatprep.subr.mxu0 0.0
    %3810 = vmatpush2.msra.mxu0 0.0
    %3811 = vmatprep.subr.mxu0 0.0
    %3812 = vmatpush2.msra.mxu0 0.0
    %3813 = vmatprep.subr.mxu0 0.0
    %3814 = vmatpush2.msra.mxu0 0.0
    %3815 = vmatprep.subr.mxu0 0.0
    %3816 = vmatpush2.msra.mxu0 0.0
    %3817 = vmatprep.subr.mxu0 0.0
    %3818 = vmatpush2.msra.mxu0 0.0
    %3819 = vmatprep.mubr.f32.mxu0 0.0
    %3820 = vmatmul.mubr.f32.gmra.mxu0 %v3753
    %v3821 = vpop.f32.mrf.mxu0
    %v3822 = vadd.f32 0.0, %v3821
    %v3823 = vpop.f32.mrf.mxu0
    %3824 = vdwg.mxu0
    %v3826 = vrot.slane %v3822, 6
    %v3828 = vadd.f32 %v3208, %v3826
    %v3829 = vxor.u32 %v3828, 2147483648
    %v3830 = vmul.f32 %v3829, 1.442695
    %v3831 = vpow.pop %v3830
    %v3832 = vadd.f32 %v3831, 1.0
    %v3833 = vrcp.pop %v3832
    %v3834 = vmul.f32 1.0, %v3833
    %v3835 = vtanh.pop %v3828
    %v3837 = vrot.slane %v3741, 6
    %v3839 = vmul.f32 %v3834, %v3837
    %3841 = vrot.lane.b32.xlu0 %v3835, 64
    %v3842 = vpop.permute.xlu0 %3841
    %v3844 = vmul.f32 %v3834, %v3842
    %3846 = vrot.lane.b32.xlu0 %v3844, 32
    %v3847 = vpop.permute.xlu0 %3846
    %v3849 = vadd.f32 %v3839, %v3847
    %v3850 = vtanh.pop %v3849
    %3852 = vrot.lane.b32.xlu0 %v3850, 64
    %v3853 = vpop.permute.xlu0 %3852
    %v3855 = vmul.f32 %v3834, %v3853
    %3857 = vrot.lane.b32.xlu0 %v3855, 32
    %v3858 = vpop.permute.xlu0 %3857
    %3860 = vst.msk [vmem:[#allocation2 + $0x8] sm:$0xc] %vm488, %v3858
    %v3861 = vrot.slane %v3855, 2
    %3862 = vrot.lane.b32.xlu0 %v3861, 32
    %v3863 = vpop.permute.xlu0 %3862
    %v3864 = vsel %vm264, %v3863, 0
    %3866 = vmatprep.subr.mxu0 0.0
    %3867 = vmatpush1.msra.mxu0 0.0
    %3868 = vmatprep.subr.mxu0 0.0
    %3869 = vmatpush1.msra.mxu0 0.0
    %3870 = vmatprep.subr.mxu0 0.0
    %3871 = vmatpush1.msra.mxu0 0.0
    %3872 = vmatprep.subr.mxu0 0.0
    %3873 = vmatpush1.msra.mxu0 0.0
    %3874 = vmatprep.subr.mxu0 0.0
    %3875 = vmatpush1.msra.mxu0 0.0
    %3876 = vmatprep.subr.mxu0 0.0
    %3877 = vmatpush1.msra.mxu0 0.0
    %3878 = vmatprep.subr.mxu0 0.0
    %3879 = vmatpush1.msra.mxu0 0.0
    %3880 = vmatprep.subr.mxu0 0.0
    %3881 = vmatpush1.msra.mxu0 0.0
    %3882 = vmatprep.subr.mxu0 0.0
    %3883 = vmatpush1.msra.mxu0 0.0
    %3884 = vmatprep.subr.mxu0 0.0
    %3885 = vmatpush1.msra.mxu0 0.0
    %3886 = vmatprep.subr.mxu0 0.0
    %3887 = vmatpush1.msra.mxu0 0.0
    %3888 = vmatprep.subr.mxu0 0.0
    %3889 = vmatpush1.msra.mxu0 0.0
    %3890 = vmatprep.subr.mxu0 0.0
    %3891 = vmatpush1.msra.mxu0 %v3214
    %3892 = vmatprep.subr.mxu0 0.0
    %3893 = vmatpush1.msra.mxu0 %v3213
    %3894 = vmatprep.subr.mxu0 0.0
    %3895 = vmatpush1.msra.mxu0 %v3212
    %3896 = vmatprep.subr.mxu0 0.0
    %3897 = vmatpush1.msra.mxu0 %v3211
    %3898 = vmatprep.subr.mxu0 0.0
    %3899 = vmatpush2.msra.mxu0 0.0
    %3900 = vmatprep.subr.mxu0 0.0
    %3901 = vmatpush2.msra.mxu0 0.0
    %3902 = vmatprep.subr.mxu0 0.0
    %3903 = vmatpush2.msra.mxu0 0.0
    %3904 = vmatprep.subr.mxu0 0.0
    %3905 = vmatpush2.msra.mxu0 0.0
    %3906 = vmatprep.subr.mxu0 0.0
    %3907 = vmatpush2.msra.mxu0 0.0
    %3908 = vmatprep.subr.mxu0 0.0
    %3909 = vmatpush2.msra.mxu0 0.0
    %3910 = vmatprep.subr.mxu0 0.0
    %3911 = vmatpush2.msra.mxu0 0.0
    %3912 = vmatprep.subr.mxu0 0.0
    %3913 = vmatpush2.msra.mxu0 0.0
    %3914 = vmatprep.subr.mxu0 0.0
    %3915 = vmatpush2.msra.mxu0 0.0
    %3916 = vmatprep.subr.mxu0 0.0
    %3917 = vmatpush2.msra.mxu0 0.0
    %3918 = vmatprep.subr.mxu0 0.0
    %3919 = vmatpush2.msra.mxu0 0.0
    %3920 = vmatprep.subr.mxu0 0.0
    %3921 = vmatpush2.msra.mxu0 0.0
    %3922 = vmatprep.subr.mxu0 0.0
    %3923 = vmatpush2.msra.mxu0 0.0
    %3924 = vmatprep.subr.mxu0 0.0
    %3925 = vmatpush2.msra.mxu0 0.0
    %3926 = vmatprep.subr.mxu0 0.0
    %3927 = vmatpush2.msra.mxu0 0.0
    %3928 = vmatprep.subr.mxu0 0.0
    %3929 = vmatpush2.msra.mxu0 0.0
    %3930 = vmatprep.mubr.f32.mxu0 0.0
    %3931 = vmatmul.mubr.f32.gmra.mxu0 %v3864
    %v3932 = vpop.f32.mrf.mxu0
    %v3933 = vadd.f32 0.0, %v3932
    %v3934 = vpop.f32.mrf.mxu0
    %3935 = vdwg.mxu0
    %v3937 = vrot.slane %v3933, 4
    %v3939 = vadd.f32 %v3208, %v3937
    %v3940 = vxor.u32 %v3939, 2147483648
    %v3941 = vmul.f32 %v3940, 1.442695
    %v3942 = vpow.pop %v3941
    %v3943 = vadd.f32 %v3942, 1.0
    %v3944 = vrcp.pop %v3943
    %v3945 = vmul.f32 1.0, %v3944
    %v3946 = vtanh.pop %v3939
    %v3948 = vrot.slane %v3849, 6
    %v3950 = vmul.f32 %v3945, %v3948
    %3952 = vrot.lane.b32.xlu0 %v3946, 64
    %v3953 = vpop.permute.xlu0 %3952
    %v3955 = vmul.f32 %v3945, %v3953
    %3957 = vrot.lane.b32.xlu0 %v3955, 32
    %v3958 = vpop.permute.xlu0 %3957
    %v3960 = vadd.f32 %v3950, %v3958
    %v3961 = vtanh.pop %v3960
    %3963 = vrot.lane.b32.xlu0 %v3961, 64
    %v3964 = vpop.permute.xlu0 %3963
    %v3966 = vmul.f32 %v3945, %v3964
    %3968 = vrot.lane.b32.xlu0 %v3966, 32
    %v3969 = vpop.permute.xlu0 %3968
    %3971 = vst.msk [vmem:[#allocation2 + $0x8] sm:$0x30] %vm602, %v3969
    %v3972 = vrot.slane %v3966, 4
    %3973 = vrot.lane.b32.xlu0 %v3972, 32
    %v3974 = vpop.permute.xlu0 %3973
    %v3975 = vsel %vm264, %v3974, 0
    %3977 = vmatprep.subr.mxu0 0.0
    %3978 = vmatpush1.msra.mxu0 0.0
    %3979 = vmatprep.subr.mxu0 0.0
    %3980 = vmatpush1.msra.mxu0 0.0
    %3981 = vmatprep.subr.mxu0 0.0
    %3982 = vmatpush1.msra.mxu0 0.0
    %3983 = vmatprep.subr.mxu0 0.0
    %3984 = vmatpush1.msra.mxu0 0.0
    %3985 = vmatprep.subr.mxu0 0.0
    %3986 = vmatpush1.msra.mxu0 0.0
    %3987 = vmatprep.subr.mxu0 0.0
    %3988 = vmatpush1.msra.mxu0 0.0
    %3989 = vmatprep.subr.mxu0 0.0
    %3990 = vmatpush1.msra.mxu0 0.0
    %3991 = vmatprep.subr.mxu0 0.0
    %3992 = vmatpush1.msra.mxu0 0.0
    %3993 = vmatprep.subr.mxu0 0.0
    %3994 = vmatpush1.msra.mxu0 0.0
    %3995 = vmatprep.subr.mxu0 0.0
    %3996 = vmatpush1.msra.mxu0 0.0
    %3997 = vmatprep.subr.mxu0 0.0
    %3998 = vmatpush1.msra.mxu0 0.0
    %3999 = vmatprep.subr.mxu0 0.0
    %4000 = vmatpush1.msra.mxu0 0.0
    %4001 = vmatprep.subr.mxu0 0.0
    %4002 = vmatpush1.msra.mxu0 %v3214
    %4003 = vmatprep.subr.mxu0 0.0
    %4004 = vmatpush1.msra.mxu0 %v3213
    %4005 = vmatprep.subr.mxu0 0.0
    %4006 = vmatpush1.msra.mxu0 %v3212
    %4007 = vmatprep.subr.mxu0 0.0
    %4008 = vmatpush1.msra.mxu0 %v3211
    %4009 = vmatprep.subr.mxu0 0.0
    %4010 = vmatpush2.msra.mxu0 0.0
    %4011 = vmatprep.subr.mxu0 0.0
    %4012 = vmatpush2.msra.mxu0 0.0
    %4013 = vmatprep.subr.mxu0 0.0
    %4014 = vmatpush2.msra.mxu0 0.0
    %4015 = vmatprep.subr.mxu0 0.0
    %4016 = vmatpush2.msra.mxu0 0.0
    %4017 = vmatprep.subr.mxu0 0.0
    %4018 = vmatpush2.msra.mxu0 0.0
    %4019 = vmatprep.subr.mxu0 0.0
    %4020 = vmatpush2.msra.mxu0 0.0
    %4021 = vmatprep.subr.mxu0 0.0
    %4022 = vmatpush2.msra.mxu0 0.0
    %4023 = vmatprep.subr.mxu0 0.0
    %4024 = vmatpush2.msra.mxu0 0.0
    %4025 = vmatprep.subr.mxu0 0.0
    %4026 = vmatpush2.msra.mxu0 0.0
    %4027 = vmatprep.subr.mxu0 0.0
    %4028 = vmatpush2.msra.mxu0 0.0
    %4029 = vmatprep.subr.mxu0 0.0
    %4030 = vmatpush2.msra.mxu0 0.0
    %4031 = vmatprep.subr.mxu0 0.0
    %4032 = vmatpush2.msra.mxu0 0.0
    %4033 = vmatprep.subr.mxu0 0.0
    %4034 = vmatpush2.msra.mxu0 0.0
    %4035 = vmatprep.subr.mxu0 0.0
    %4036 = vmatpush2.msra.mxu0 0.0
    %4037 = vmatprep.subr.mxu0 0.0
    %4038 = vmatpush2.msra.mxu0 0.0
    %4039 = vmatprep.subr.mxu0 0.0
    %4040 = vmatpush2.msra.mxu0 0.0
    %4041 = vmatprep.mubr.f32.mxu0 0.0
    %4042 = vmatmul.mubr.f32.gmra.mxu0 %v3975
    %v4043 = vpop.f32.mrf.mxu0
    %v4044 = vadd.f32 0.0, %v4043
    %v4045 = vpop.f32.mrf.mxu0
    %4046 = vdwg.mxu0
    %v4048 = vrot.slane %v4044, 2
    %v4050 = vadd.f32 %v3208, %v4048
    %v4051 = vxor.u32 %v4050, 2147483648
    %v4052 = vmul.f32 %v4051, 1.442695
    %v4053 = vpow.pop %v4052
    %v4054 = vadd.f32 %v4053, 1.0
    %v4055 = vrcp.pop %v4054
    %v4056 = vmul.f32 1.0, %v4055
    %v4057 = vtanh.pop %v4050
    %v4059 = vrot.slane %v3960, 6
    %v4061 = vmul.f32 %v4056, %v4059
    %4063 = vrot.lane.b32.xlu0 %v4057, 64
    %v4064 = vpop.permute.xlu0 %4063
    %v4066 = vmul.f32 %v4056, %v4064
    %4068 = vrot.lane.b32.xlu0 %v4066, 32
    %v4069 = vpop.permute.xlu0 %4068
    %v4071 = vadd.f32 %v4061, %v4069
    %v4072 = vtanh.pop %v4071
    %4074 = vrot.lane.b32.xlu0 %v4072, 64
    %v4075 = vpop.permute.xlu0 %4074
    %v4077 = vmul.f32 %v4056, %v4075
    %4079 = vrot.lane.b32.xlu0 %v4077, 32
    %v4080 = vpop.permute.xlu0 %4079
    %4082 = vst.msk [vmem:[#allocation2 + $0x8] sm:$0xc0] %vm716, %v4080
    %v4083 = vld [vmem:[#allocation2] sm:$0xff]
    %v4084 = vld [vmem:[#allocation2 + $0x8] sm:$0xff]
    %v4085 = vld [vmem:[%s15] sm:$0xff]
    %v4086 = vld [vmem:[%s15 + $0x8] sm:$0xff]
    %v4087 = vld [vmem:[%s15 + $0x10] sm:$0xff]
    %v4088 = vld [vmem:[%s15 + $0x18] sm:$0xff]
    %v4089 = vld [vmem:[%s16] sm:$0x1]
    %v4091 = vlaneseq
    %v4092 = vshrl.u32 %v4091, 7
    %v4093 = vsub.s32 0, %v4092
    %v4094 = vrot.slane %v4089, %v4093
    %v4097 = vsel %vm264, %v4083, 0
    %v4100 = vsel %vm264, %v4084, 0
    %4102 = vmatprep.subr.mxu0 0.0
    %4103 = vmatpush1.msra.mxu0 0.0
    %4104 = vmatprep.subr.mxu0 0.0
    %4105 = vmatpush1.msra.mxu0 0.0
    %4106 = vmatprep.subr.mxu0 0.0
    %4107 = vmatpush1.msra.mxu0 0.0
    %4108 = vmatprep.subr.mxu0 0.0
    %4109 = vmatpush1.msra.mxu0 0.0
    %4110 = vmatprep.subr.mxu0 0.0
    %4111 = vmatpush1.msra.mxu0 0.0
    %4112 = vmatprep.subr.mxu0 0.0
    %4113 = vmatpush1.msra.mxu0 0.0
    %4114 = vmatprep.subr.mxu0 0.0
    %4115 = vmatpush1.msra.mxu0 0.0
    %4116 = vmatprep.subr.mxu0 0.0
    %4117 = vmatpush1.msra.mxu0 0.0
    %4118 = vmatprep.subr.mxu0 0.0
    %4119 = vmatpush1.msra.mxu0 0.0
    %4120 = vmatprep.subr.mxu0 0.0
    %4121 = vmatpush1.msra.mxu0 0.0
    %4122 = vmatprep.subr.mxu0 0.0
    %4123 = vmatpush1.msra.mxu0 0.0
    %4124 = vmatprep.subr.mxu0 0.0
    %4125 = vmatpush1.msra.mxu0 0.0
    %4126 = vmatprep.subr.mxu0 0.0
    %4127 = vmatpush1.msra.mxu0 %v4088
    %4128 = vmatprep.subr.mxu0 0.0
    %4129 = vmatpush1.msra.mxu0 %v4087
    %4130 = vmatprep.subr.mxu0 0.0
    %4131 = vmatpush1.msra.mxu0 %v4086
    %4132 = vmatprep.subr.mxu0 0.0
    %4133 = vmatpush1.msra.mxu0 %v4085
    %4134 = vmatprep.subr.mxu0 0.0
    %4135 = vmatpush2.msra.mxu0 0.0
    %4136 = vmatprep.subr.mxu0 0.0
    %4137 = vmatpush2.msra.mxu0 0.0
    %4138 = vmatprep.subr.mxu0 0.0
    %4139 = vmatpush2.msra.mxu0 0.0
    %4140 = vmatprep.subr.mxu0 0.0
    %4141 = vmatpush2.msra.mxu0 0.0
    %4142 = vmatprep.subr.mxu0 0.0
    %4143 = vmatpush2.msra.mxu0 0.0
    %4144 = vmatprep.subr.mxu0 0.0
    %4145 = vmatpush2.msra.mxu0 0.0
    %4146 = vmatprep.subr.mxu0 0.0
    %4147 = vmatpush2.msra.mxu0 0.0
    %4148 = vmatprep.subr.mxu0 0.0
    %4149 = vmatpush2.msra.mxu0 0.0
    %4150 = vmatprep.subr.mxu0 0.0
    %4151 = vmatpush2.msra.mxu0 0.0
    %4152 = vmatprep.subr.mxu0 0.0
    %4153 = vmatpush2.msra.mxu0 0.0
    %4154 = vmatprep.subr.mxu0 0.0
    %4155 = vmatpush2.msra.mxu0 0.0
    %4156 = vmatprep.subr.mxu0 0.0
    %4157 = vmatpush2.msra.mxu0 0.0
    %4158 = vmatprep.subr.mxu0 0.0
    %4159 = vmatpush2.msra.mxu0 0.0
    %4160 = vmatprep.subr.mxu0 0.0
    %4161 = vmatpush2.msra.mxu0 0.0
    %4162 = vmatprep.subr.mxu0 0.0
    %4163 = vmatpush2.msra.mxu0 0.0
    %4164 = vmatprep.subr.mxu0 0.0
    %4165 = vmatpush2.msra.mxu0 0.0
    %4166 = vmatprep.mubr.f32.mxu0 0.0
    %4167 = vmatmul.mubr.f32.gmra.mxu0 %v4097
    %v4168 = vpop.f32.mrf.mxu0
    %v4169 = vadd.f32 %v4094, %v4168
    %v4170 = vpop.f32.mrf.mxu0
    %4171 = vmatprep.mubr.f32.mxu0 0.0
    %4172 = vmatmul.mubr.f32.gmra.mxu0 %v4100
    %v4173 = vpop.f32.mrf.mxu0
    %v4174 = vadd.f32 %v4094, %v4173
    %v4175 = vpop.f32.mrf.mxu0
    %4176 = vdwg.mxu0
    %4177 = vst [vmem:[%s17] sm:$0xff] %v4169
    %4178 = vst [vmem:[%s17 + $0x8] sm:$0xff] %v4174
    // Predicated region
    $region106: #{gru_lstm_forward.1} parent=1 // pred_check
      _
    $region107: #{gru_lstm_forward.1} parent=1 // pred_check_branch
      %4180 = sbr.rel (0) target = $region109
    $region108: #{gru_lstm_forward.1} parent=1 // pred_region
      _
    $region109: #{gru_lstm_forward.1} parent=1 // pred_fallthru
      _
    // Predicated region
    $region110: #{gru_lstm_forward.1} parent=1 // pred_check
      _
    $region111: #{gru_lstm_forward.1} parent=1 // pred_check_branch
      %4182 = sbr.rel (0) target = $region113
    $region112: #{gru_lstm_forward.1} parent=1 // pred_region
      _
    $region113: #{gru_lstm_forward.1} parent=1 // pred_fallthru
      _
    %4183 = vsyncpa [#allocation4], 1
    %4184 = vsyncpa [#allocation6], 1
    %4185 = vsyncpa [#allocation9], 1
    %4186 = vsyncpa [#allocation12], 1
    %4187 = vsyncpa [#allocation15], 1

</llo_original>
